<compile_context>
chip_gen: v6e
topology: v6e:2x2x1
jax: 0.10.0
libtpu: 0.0.40
codegen_flags: <defaults>
</compile_context>

<pallas_src>
import numpy as np

import jax
import jax.numpy as jnp
from jax.experimental import pallas as pl
from jax.experimental.pallas import tpu as pltpu


FC_DIM = 32            # cfg.SEM.FC_DIM (synthetic small value)
NUM_CLASSES = 8        # cfg.MODEL.NUM_CLASSES
INPUT_SIZE = (16, 16)  # cfg.SEM.INPUT_SIZE (segSize)
CIN_PAD = 16           # RGB (3) padded to one bf16 sublane pack


# --------------------------------------------------------------------------
# Constant operators (numpy, built once at trace time -> XLA constants)
# --------------------------------------------------------------------------
def _bilinear_matrix_np(out_size, in_size):
    """Interp matrix matching F.interpolate(mode='bilinear', align_corners=False)."""
    scale = in_size / out_size
    s = (np.arange(out_size, dtype=np.float64) + 0.5) * scale - 0.5
    s = np.maximum(s, 0.0)
    i0 = np.clip(np.floor(s).astype(np.int64), 0, in_size - 1)
    i1 = np.clip(i0 + 1, 0, in_size - 1)
    w1 = s - i0
    w0 = 1.0 - w1
    A = np.zeros((out_size, in_size), np.float32)
    A[np.arange(out_size), i0] += w0
    A[np.arange(out_size), i1] += w1
    return A


def _build_constants_np(H, W, b_blk):
    Hs, Ws = H // 2, W // 2

    def tap_masks(h, w):
        # mask[t, p] = 1 iff tap t's source pixel for output p is inside the image
        m = np.zeros((9, h * w), np.float32)
        for di in range(3):
            for dj in range(3):
                t = di * 3 + dj
                for r in range(h):
                    for c in range(w):
                        if 0 <= r + di - 1 < h and 0 <= c + dj - 1 < w:
                            m[t, r * w + c] = 1.0
        return np.tile(m, (1, b_blk))       # same mask for every image in the block

    # stride-2 pixel subsample operator (picks (2r, 2c)), block-diag over the images
    sub = np.zeros((H * W, Hs * Ws), np.float32)
    for r in range(Hs):
        for c in range(Ws):
            sub[(2 * r) * W + 2 * c, r * Ws + c] = 1.0
    # bilinear upsample (Kronecker of the 1-D interp matrices), block-diag over images
    A_h = _bilinear_matrix_np(H, Hs)
    A_w = _bilinear_matrix_np(W, Ws)
    up = np.einsum("oi,pj->ijop", A_h, A_w).reshape(Hs * Ws, H * W)
    eye = np.eye(b_blk, dtype=np.float32)
    return {
        "mask_full": tap_masks(H, W),        # (9, b*H*W)
        "mask_half": tap_masks(Hs, Ws),      # (9, b*Hs*Ws)
        "sub_blk": np.kron(eye, sub),        # (b*H*W, b*Hs*Ws)
        "up_blk": np.kron(eye, up),          # (b*Hs*Ws, b*H*W)
    }


# --------------------------------------------------------------------------
# The fused Pallas kernel (one grid step = B_BLK images, everything VMEM-resident)
# --------------------------------------------------------------------------
def _make_kernel(b_blk, H, W):
    bf16, f32 = jnp.bfloat16, jnp.float32
    Hs, Ws = H // 2, W // 2
    deltas_full = [(di - 1) * W + (dj - 1) for di in range(3) for dj in range(3)]
    deltas_half = [(di - 1) * Ws + (dj - 1) for di in range(3) for dj in range(3)]

    def shift_lanes(x, delta):
        # y[:, p] = x[:, p + delta] with zero fill off the array ends.  Static lane
        # slices + concat lower to lane shifts (XLU/VPU), keeping the MXU free for the
        # folded weight matmul; the border masks kill intra-row wrap and any
        # cross-image leakage, so this is exact for the zero-padded 3x3 taps.
        if delta == 0:
            return x
        c, p = x.shape
        zeros = jnp.zeros((c, abs(delta)), x.dtype)
        if delta > 0:
            return jnp.concatenate([x[:, delta:], zeros], axis=-1)
        return jnp.concatenate([zeros, x[:, :p + delta]], axis=-1)

    def conv3x3(x_bf, w_ref, b_ref, mask_ref, deltas, stack_ref, sub_ref=None):
        # Shifted-tap stack in VMEM scratch: stack[t*Cin + ci, :] = shift_t(x)[ci, :]*mask_t.
        # Each tap's value dies at its store, so live ranges stay tiny (no fori needed).
        ci = x_bf.shape[0]
        for t, delta in enumerate(deltas):                     # 9 taps, VPU/XLU only
            m_t = mask_ref[pl.ds(t, 1), :].astype(bf16)        # (1, pixels)
            stack_ref[pl.ds(t * ci, ci), :] = shift_lanes(x_bf, delta) * m_t
        stk = stack_ref[pl.ds(0, 9 * ci), :]                   # (9*Cin, pixels) bf16
        if sub_ref is not None:                                # stride 2: 0/1 subsample
            stk = jnp.dot(stk, sub_ref[...], preferred_element_type=f32).astype(bf16)
        y = jnp.dot(w_ref[...], stk, preferred_element_type=f32) + b_ref[...]
        return jnp.maximum(y, 0.0)

    def kernel(x_ref, mfull_ref, mhalf_ref, sub_ref, up_ref,
               w1_ref, b1_ref, w2_ref, b2_ref, w3_ref, b3_ref, w4_ref, b4_ref,
               o_ref, stk_a_ref, stk_b_ref):
        x = x_ref[0]                                           # (Cin_pad, B*H*W) bf16
        # ---- encoder: conv3x3 s1 + relu, conv3x3 s2 + relu
        f1 = conv3x3(x, w1_ref, b1_ref, mfull_ref, deltas_full, stk_a_ref)
        f2 = conv3x3(f1.astype(bf16), w2_ref, b2_ref, mfull_ref, deltas_full,
                     stk_a_ref, sub_ref=sub_ref)
        # ---- decoder (C1-style, eval mode): conv3x3+relu, 1x1 conv, bilinear up, softmax
        f3 = conv3x3(f2.astype(bf16), w3_ref, b3_ref, mhalf_ref, deltas_half, stk_b_ref)
        logits = jnp.dot(w4_ref[...], f3, preferred_element_type=f32) + b4_ref[...]
        up = jnp.dot(logits, up_ref[...], preferred_element_type=f32)   # (C, B*H*W)
        # ---- softmax over the class (sublane) axis: XLU cross-sublane reductions
        m = jnp.max(up, axis=0, keepdims=True)
        e = jnp.exp(up - m)
        s = jnp.sum(e, axis=0, keepdims=True)
        # exact reciprocal so per-pixel class probabilities sum to 1 to f32 accuracy
        o_ref[0] = (e * pl.reciprocal(s, approx=False)).astype(o_ref.dtype)

    return kernel


# --------------------------------------------------------------------------
# Forward wrapper (layout plumbing only; single pallas_call)
# --------------------------------------------------------------------------
def _fold_conv3x3_weights(w, cin_pad=None):
    """HWIO (3,3,Cin,Cout) -> (Cout, 9*Cin_pad) bf16, columns tap-major to match the
    shifted-feature stack rows (t*Cin + ci)."""
    kh, kw, ci, co = w.shape
    if cin_pad is not None and cin_pad != ci:
        w = jnp.pad(w, ((0, 0), (0, 0), (0, cin_pad - ci), (0, 0)))
        ci = cin_pad
    w = jnp.transpose(w.reshape(kh * kw, ci, co), (2, 0, 1)).reshape(co, kh * kw * ci)
    return w.astype(jnp.bfloat16)


def generalized_semseg_forward(params, data_nchw):
    """data: (N, 3, H, W) f32 NCHW.  Returns softmax class probs (N, num_class, H, W)."""
    N, cin, H, W = data_nchw.shape
    P = H * W
    P2 = (H // 2) * (W // 2)
    num_class = params["dec_last"][0].shape[-1]
    enc2_cin = params["enc2"][0].shape[2]        # FC_DIM // 2
    dec_cin = params["dec_cbr"][0].shape[2]      # FC_DIM
    # Batch blocking: amortizes per-grid-step overhead and widens matmul N to B*256.
    # TODO(synk): for large N also keep the grid extent a multiple of the TC count (2 on v7x).
    b_blk = 2 if N % 2 == 0 else 1
    G = N // b_blk

    c = _build_constants_np(H, W, b_blk)
    mask_full = jnp.asarray(c["mask_full"], jnp.float32)
    mask_half = jnp.asarray(c["mask_half"], jnp.float32)
    sub_blk = jnp.asarray(c["sub_blk"], jnp.bfloat16)     # 0/1 matrix: exact in bf16
    up_blk = jnp.asarray(c["up_blk"], jnp.float32)        # keep interp weights in f32

    # input: NCHW -> (grid, Cin_pad, b_blk*H*W) bf16, images side by side along lanes
    x = data_nchw.reshape(N, cin, P).astype(jnp.bfloat16)
    if cin < CIN_PAD:
        x = jnp.pad(x, ((0, 0), (0, CIN_PAD - cin), (0, 0)))
    x = x.reshape(G, b_blk, CIN_PAD, P).transpose(0, 2, 1, 3).reshape(G, CIN_PAD, b_blk * P)

    w1 = _fold_conv3x3_weights(params["enc1"][0], CIN_PAD)
    b1 = params["enc1"][1].reshape(-1, 1).astype(jnp.float32)
    w2 = _fold_conv3x3_weights(params["enc2"][0])
    b2 = params["enc2"][1].reshape(-1, 1).astype(jnp.float32)
    w3 = _fold_conv3x3_weights(params["dec_cbr"][0])
    b3 = params["dec_cbr"][1].reshape(-1, 1).astype(jnp.float32)
    # final 1x1 conv + bilinear interp kept in f32 (tiny matmuls; preserves accuracy)
    w4 = jnp.transpose(params["dec_last"][0].reshape(-1, num_class), (1, 0)).astype(jnp.float32)
    b4 = params["dec_last"][1].reshape(-1, 1).astype(jnp.float32)

    kernel = _make_kernel(b_blk, H, W)

    def full(arr):
        # Whole-array block with a constant block index: fetched once, VMEM-resident.
        # (Still default double-buffered; ~0.7 MiB of constants, negligible here.)
        return pl.BlockSpec(tuple(arr.shape), lambda g, nd=arr.ndim: (0,) * nd)

    out = pl.pallas_call(
        kernel,
        out_shape=jax.ShapeDtypeStruct((G, num_class, b_blk * P), jnp.float32),
        grid=(G,),
        in_specs=[
            pl.BlockSpec((1, CIN_PAD, b_blk * P), lambda g: (g, 0, 0)),
            full(mask_full), full(mask_half), full(sub_blk), full(up_blk),
            full(w1), full(b1), full(w2), full(b2),
            full(w3), full(b3), full(w4), full(b4),
        ],
        out_specs=pl.BlockSpec((1, num_class, b_blk * P), lambda g: (g, 0, 0)),
        scratch_shapes=[
            pltpu.VMEM((9 * max(CIN_PAD, enc2_cin), b_blk * P), jnp.bfloat16),
            pltpu.VMEM((9 * dec_cin, b_blk * P2), jnp.bfloat16),
        ],
        compiler_params=pltpu.CompilerParams(
            dimension_semantics=("parallel",),
            vmem_limit_bytes=32 * 1024 * 1024,
        ),
    )(x, mask_full, mask_half, sub_blk, up_blk,
      w1, b1, w2, b2, w3, b3, w4, b4)

    # (grid, C, b_blk*P) -> (N, C, H, W)
    out = out.reshape(G, num_class, b_blk, H, W).transpose(0, 2, 1, 3, 4)
    return out.reshape(N, num_class, H, W)


# --------------------------------------------------------------------------
# Parameters and a pure-JAX reference (f32) for numerical validation
# --------------------------------------------------------------------------
def init_params(key):
    ks = jax.random.split(key, 8)

    def conv_init(kw_key, kb_key, kh, kw, cin, cout):
        std = 1.0 / np.sqrt(kh * kw * cin)
        w = jax.random.normal(kw_key, (kh, kw, cin, cout), jnp.float32) * std
        b = 0.05 * jax.random.normal(kb_key, (cout,), jnp.float32)
        return w, b

    return {
        "enc1": conv_init(ks[0], ks[1], 3, 3, 3, FC_DIM // 2),          # 3 -> 16, s1
        "enc2": conv_init(ks[2], ks[3], 3, 3, FC_DIM // 2, FC_DIM),     # 16 -> 32, s2
        "dec_cbr": conv_init(ks[4], ks[5], 3, 3, FC_DIM, FC_DIM // 4),  # 32 -> 8
        "dec_last": conv_init(ks[6], ks[7], 1, 1, FC_DIM // 4, NUM_CLASSES),
    }


def reference_forward(params, data_nchw):
    H, W = data_nchw.shape[2], data_nchw.shape[3]
    A_h = jnp.asarray(_bilinear_matrix_np(H, H // 2), jnp.float32)
    A_w = jnp.asarray(_bilinear_matrix_np(W, W // 2), jnp.float32)
    x = jnp.transpose(data_nchw, (0, 2, 3, 1)).astype(jnp.float32)   # NHWC

    def conv(x, wb, stride, pad, relu):
        w, b = wb
        y = jax.lax.conv_general_dilated(
            x, w, window_strides=(stride, stride),
            padding=((pad, pad), (pad, pad)),
            dimension_numbers=("NHWC", "HWIO", "NHWC"))
        y = y + b
        return jnp.maximum(y, 0.0) if relu else y

    x = conv(x, params["enc1"], 1, 1, True)
    x = conv(x, params["enc2"], 2, 1, True)
    x = conv(x, params["dec_cbr"], 1, 1, True)
    x = conv(x, params["dec_last"], 1, 0, False)
    x = jnp.einsum("oi,pj,nijc->nopc", A_h, A_w, x)    # bilinear upsample
    x = jax.nn.softmax(x, axis=-1)
    return jnp.transpose(x, (0, 3, 1, 2))              # NCHW


if __name__ == "__main__":
    key = jax.random.PRNGKey(0)
    pkey, dkey = jax.random.split(key)
    params = init_params(pkey)
    data = jax.random.normal(dkey, (4, 3, INPUT_SIZE[0], INPUT_SIZE[1]), jnp.float32)

    fwd = jax.jit(generalized_semseg_forward)
    pred = jax.block_until_ready(fwd(params, data))

    assert pred.shape == (4, NUM_CLASSES, INPUT_SIZE[0], INPUT_SIZE[1])

    ref = reference_forward(params, data)
    max_err = float(jnp.max(jnp.abs(pred - ref)))
    assert max_err < 3e-2, f"max abs err vs reference = {max_err}"

    class_sums = jnp.sum(pred, axis=1)          # softmax over classes sums to ~1
    assert bool(jnp.all(jnp.abs(class_sums - 1.0) < 1e-3))

    print("KERNEL_OK")
</pallas_src>

<mosaic_0001>
module attributes {stable_mosaic.version = 11 : i64} {
  func.func @kernel(%arg0: i32, %arg1: memref<1x16x512xbf16, #tpu.memory_space<vmem>>, %arg2: memref<9x512xf32, #tpu.memory_space<vmem>>, %arg3: memref<9x128xf32, #tpu.memory_space<vmem>>, %arg4: memref<512x128xbf16, #tpu.memory_space<vmem>>, %arg5: memref<128x512xf32, #tpu.memory_space<vmem>>, %arg6: memref<16x144xbf16, #tpu.memory_space<vmem>>, %arg7: memref<16x1xf32, #tpu.memory_space<vmem>>, %arg8: memref<32x144xbf16, #tpu.memory_space<vmem>>, %arg9: memref<32x1xf32, #tpu.memory_space<vmem>>, %arg10: memref<8x288xbf16, #tpu.memory_space<vmem>>, %arg11: memref<8x1xf32, #tpu.memory_space<vmem>>, %arg12: memref<8x8xf32, #tpu.memory_space<vmem>>, %arg13: memref<8x1xf32, #tpu.memory_space<vmem>>, %arg14: memref<1x8x512xf32, #tpu.memory_space<vmem>>, %arg15: memref<144x512xbf16, #tpu.memory_space<vmem>>, %arg16: memref<288x128xbf16, #tpu.memory_space<vmem>>) attributes {dimension_semantics = [#tpu.dimension_semantics<parallel>], iteration_bounds = array<i64: 2>, scalar_prefetch = 0 : i64, scratch_operands = 2 : i64, tpu.core_type = #tpu.core_type<tc>, window_params = [{transform_indices = @transform_0, window_bounds = array<i64: 1, 16, 512>}, {pipeline_mode = #tpu.pipeline_mode<synchronous>, transform_indices = @transform_1, window_bounds = array<i64: 9, 512>}, {pipeline_mode = #tpu.pipeline_mode<synchronous>, transform_indices = @transform_2, window_bounds = array<i64: 9, 128>}, {pipeline_mode = #tpu.pipeline_mode<synchronous>, transform_indices = @transform_3, window_bounds = array<i64: 512, 128>}, {pipeline_mode = #tpu.pipeline_mode<synchronous>, transform_indices = @transform_4, window_bounds = array<i64: 128, 512>}, {pipeline_mode = #tpu.pipeline_mode<synchronous>, transform_indices = @transform_5, window_bounds = array<i64: 16, 144>}, {pipeline_mode = #tpu.pipeline_mode<synchronous>, transform_indices = @transform_6, window_bounds = array<i64: 16, 1>}, {pipeline_mode = #tpu.pipeline_mode<synchronous>, transform_indices = @transform_7, window_bounds = array<i64: 32, 144>}, {pipeline_mode = #tpu.pipeline_mode<synchronous>, transform_indices = @transform_8, window_bounds = array<i64: 32, 1>}, {pipeline_mode = #tpu.pipeline_mode<synchronous>, transform_indices = @transform_9, window_bounds = array<i64: 8, 288>}, {pipeline_mode = #tpu.pipeline_mode<synchronous>, transform_indices = @transform_10, window_bounds = array<i64: 8, 1>}, {pipeline_mode = #tpu.pipeline_mode<synchronous>, transform_indices = @transform_11, window_bounds = array<i64: 8, 8>}, {pipeline_mode = #tpu.pipeline_mode<synchronous>, transform_indices = @transform_12, window_bounds = array<i64: 8, 1>}, {transform_indices = @transform_13, window_bounds = array<i64: 1, 8, 512>}]} {
    %c0 = arith.constant 0 : index
    %c0_0 = arith.constant 0 : index
    %c0_1 = arith.constant 0 : index
    %0 = vector.load %arg1[%c0, %c0_0, %c0_1] : memref<1x16x512xbf16, #tpu.memory_space<vmem>>, vector<1x16x512xbf16>
    %1 = vector.shape_cast %0 : vector<1x16x512xbf16> to vector<16x512xbf16>
    %c0_2 = arith.constant 0 : index
    %c0_3 = arith.constant 0 : index
    %2 = vector.load %arg2[%c0_2, %c0_3] : memref<9x512xf32, #tpu.memory_space<vmem>>, vector<1x512xf32>
    %3 = arith.truncf %2 : vector<1x512xf32> to vector<1x512xbf16>
    %cst = arith.constant 0.000000e+00 : bf16
    %4 = vector.broadcast %cst : bf16 to vector<16x17xbf16>
    %5 = vector.extract_strided_slice %1 {offsets = [0, 0], sizes = [16, 495], strides = [1, 1]} : vector<16x512xbf16> to vector<16x495xbf16>
    %6 = tpu.concatenate %4, %5 in 1 : vector<16x17xbf16>, vector<16x495xbf16> -> vector<16x512xbf16>
    %7 = vector.broadcast %3 : vector<1x512xbf16> to vector<16x512xbf16>
    %8 = arith.mulf %6, %7 : vector<16x512xbf16>
    %c0_4 = arith.constant 0 : index
    %c0_5 = arith.constant 0 : index
    %9 = vector.load %arg15[%c0_4, %c0_5] : memref<144x512xbf16, #tpu.memory_space<vmem>>, vector<16x512xbf16>
    tpu.vector_store %arg15[%c0_4, %c0_5], %8 {strides = array<i32>} : memref<144x512xbf16, #tpu.memory_space<vmem>>, vector<16x512xbf16>,
    %c1 = arith.constant 1 : index
    %c0_6 = arith.constant 0 : index
    %10 = vector.load %arg2[%c1, %c0_6] : memref<9x512xf32, #tpu.memory_space<vmem>>, vector<1x512xf32>
    %11 = arith.truncf %10 : vector<1x512xf32> to vector<1x512xbf16>
    %cst_7 = arith.constant 0.000000e+00 : bf16
    %12 = vector.broadcast %cst_7 : bf16 to vector<16x16xbf16>
    %13 = vector.extract_strided_slice %1 {offsets = [0, 0], sizes = [16, 496], strides = [1, 1]} : vector<16x512xbf16> to vector<16x496xbf16>
    %14 = tpu.concatenate %12, %13 in 1 : vector<16x16xbf16>, vector<16x496xbf16> -> vector<16x512xbf16>
    %15 = vector.broadcast %11 : vector<1x512xbf16> to vector<16x512xbf16>
    %16 = arith.mulf %14, %15 : vector<16x512xbf16>
    %c16 = arith.constant 16 : index
    %c0_8 = arith.constant 0 : index
    %17 = vector.load %arg15[%c16, %c0_8] : memref<144x512xbf16, #tpu.memory_space<vmem>>, vector<16x512xbf16>
    tpu.vector_store %arg15[%c16, %c0_8], %16 {strides = array<i32>} : memref<144x512xbf16, #tpu.memory_space<vmem>>, vector<16x512xbf16>,
    %c2 = arith.constant 2 : index
    %c0_9 = arith.constant 0 : index
    %18 = vector.load %arg2[%c2, %c0_9] : memref<9x512xf32, #tpu.memory_space<vmem>>, vector<1x512xf32>
    %19 = arith.truncf %18 : vector<1x512xf32> to vector<1x512xbf16>
    %cst_10 = arith.constant 0.000000e+00 : bf16
    %20 = vector.broadcast %cst_10 : bf16 to vector<16x15xbf16>
    %21 = vector.extract_strided_slice %1 {offsets = [0, 0], sizes = [16, 497], strides = [1, 1]} : vector<16x512xbf16> to vector<16x497xbf16>
    %22 = tpu.concatenate %20, %21 in 1 : vector<16x15xbf16>, vector<16x497xbf16> -> vector<16x512xbf16>
    %23 = vector.broadcast %19 : vector<1x512xbf16> to vector<16x512xbf16>
    %24 = arith.mulf %22, %23 : vector<16x512xbf16>
    %c32 = arith.constant 32 : index
    %c0_11 = arith.constant 0 : index
    %25 = vector.load %arg15[%c32, %c0_11] : memref<144x512xbf16, #tpu.memory_space<vmem>>, vector<16x512xbf16>
    tpu.vector_store %arg15[%c32, %c0_11], %24 {strides = array<i32>} : memref<144x512xbf16, #tpu.memory_space<vmem>>, vector<16x512xbf16>,
    %c3 = arith.constant 3 : index
    %c0_12 = arith.constant 0 : index
    %26 = vector.load %arg2[%c3, %c0_12] : memref<9x512xf32, #tpu.memory_space<vmem>>, vector<1x512xf32>
    %27 = arith.truncf %26 : vector<1x512xf32> to vector<1x512xbf16>
    %cst_13 = arith.constant 0.000000e+00 : bf16
    %28 = vector.broadcast %cst_13 : bf16 to vector<16x1xbf16>
    %29 = vector.extract_strided_slice %1 {offsets = [0, 0], sizes = [16, 511], strides = [1, 1]} : vector<16x512xbf16> to vector<16x511xbf16>
    %30 = tpu.concatenate %28, %29 in 1 : vector<16x1xbf16>, vector<16x511xbf16> -> vector<16x512xbf16>
    %31 = vector.broadcast %27 : vector<1x512xbf16> to vector<16x512xbf16>
    %32 = arith.mulf %30, %31 : vector<16x512xbf16>
    %c48 = arith.constant 48 : index
    %c0_14 = arith.constant 0 : index
    %33 = vector.load %arg15[%c48, %c0_14] : memref<144x512xbf16, #tpu.memory_space<vmem>>, vector<16x512xbf16>
    tpu.vector_store %arg15[%c48, %c0_14], %32 {strides = array<i32>} : memref<144x512xbf16, #tpu.memory_space<vmem>>, vector<16x512xbf16>,
    %c4 = arith.constant 4 : index
    %c0_15 = arith.constant 0 : index
    %34 = vector.load %arg2[%c4, %c0_15] : memref<9x512xf32, #tpu.memory_space<vmem>>, vector<1x512xf32>
    %35 = arith.truncf %34 : vector<1x512xf32> to vector<1x512xbf16>
    %36 = vector.broadcast %35 : vector<1x512xbf16> to vector<16x512xbf16>
    %37 = arith.mulf %1, %36 : vector<16x512xbf16>
    %c64 = arith.constant 64 : index
    %c0_16 = arith.constant 0 : index
    %38 = vector.load %arg15[%c64, %c0_16] : memref<144x512xbf16, #tpu.memory_space<vmem>>, vector<16x512xbf16>
    tpu.vector_store %arg15[%c64, %c0_16], %37 {strides = array<i32>} : memref<144x512xbf16, #tpu.memory_space<vmem>>, vector<16x512xbf16>,
    %c5 = arith.constant 5 : index
    %c0_17 = arith.constant 0 : index
    %39 = vector.load %arg2[%c5, %c0_17] : memref<9x512xf32, #tpu.memory_space<vmem>>, vector<1x512xf32>
    %40 = arith.truncf %39 : vector<1x512xf32> to vector<1x512xbf16>
    %cst_18 = arith.constant 0.000000e+00 : bf16
    %41 = vector.broadcast %cst_18 : bf16 to vector<16x1xbf16>
    %42 = vector.extract_strided_slice %1 {offsets = [0, 1], sizes = [16, 511], strides = [1, 1]} : vector<16x512xbf16> to vector<16x511xbf16>
    %43 = tpu.concatenate %42, %41 in 1 : vector<16x511xbf16>, vector<16x1xbf16> -> vector<16x512xbf16>
    %44 = vector.broadcast %40 : vector<1x512xbf16> to vector<16x512xbf16>
    %45 = arith.mulf %43, %44 : vector<16x512xbf16>
    %c80 = arith.constant 80 : index
    %c0_19 = arith.constant 0 : index
    %46 = vector.load %arg15[%c80, %c0_19] : memref<144x512xbf16, #tpu.memory_space<vmem>>, vector<16x512xbf16>
    tpu.vector_store %arg15[%c80, %c0_19], %45 {strides = array<i32>} : memref<144x512xbf16, #tpu.memory_space<vmem>>, vector<16x512xbf16>,
    %c6 = arith.constant 6 : index
    %c0_20 = arith.constant 0 : index
    %47 = vector.load %arg2[%c6, %c0_20] : memref<9x512xf32, #tpu.memory_space<vmem>>, vector<1x512xf32>
    %48 = arith.truncf %47 : vector<1x512xf32> to vector<1x512xbf16>
    %cst_21 = arith.constant 0.000000e+00 : bf16
    %49 = vector.broadcast %cst_21 : bf16 to vector<16x15xbf16>
    %50 = vector.extract_strided_slice %1 {offsets = [0, 15], sizes = [16, 497], strides = [1, 1]} : vector<16x512xbf16> to vector<16x497xbf16>
    %51 = tpu.concatenate %50, %49 in 1 : vector<16x497xbf16>, vector<16x15xbf16> -> vector<16x512xbf16>
    %52 = vector.broadcast %48 : vector<1x512xbf16> to vector<16x512xbf16>
    %53 = arith.mulf %51, %52 : vector<16x512xbf16>
    %c96 = arith.constant 96 : index
    %c0_22 = arith.constant 0 : index
    %54 = vector.load %arg15[%c96, %c0_22] : memref<144x512xbf16, #tpu.memory_space<vmem>>, vector<16x512xbf16>
    tpu.vector_store %arg15[%c96, %c0_22], %53 {strides = array<i32>} : memref<144x512xbf16, #tpu.memory_space<vmem>>, vector<16x512xbf16>,
    %c7 = arith.constant 7 : index
    %c0_23 = arith.constant 0 : index
    %55 = vector.load %arg2[%c7, %c0_23] : memref<9x512xf32, #tpu.memory_space<vmem>>, vector<1x512xf32>
    %56 = arith.truncf %55 : vector<1x512xf32> to vector<1x512xbf16>
    %cst_24 = arith.constant 0.000000e+00 : bf16
    %57 = vector.broadcast %cst_24 : bf16 to vector<16x16xbf16>
    %58 = vector.extract_strided_slice %1 {offsets = [0, 16], sizes = [16, 496], strides = [1, 1]} : vector<16x512xbf16> to vector<16x496xbf16>
    %59 = tpu.concatenate %58, %57 in 1 : vector<16x496xbf16>, vector<16x16xbf16> -> vector<16x512xbf16>
    %60 = vector.broadcast %56 : vector<1x512xbf16> to vector<16x512xbf16>
    %61 = arith.mulf %59, %60 : vector<16x512xbf16>
    %c112 = arith.constant 112 : index
    %c0_25 = arith.constant 0 : index
    %62 = vector.load %arg15[%c112, %c0_25] : memref<144x512xbf16, #tpu.memory_space<vmem>>, vector<16x512xbf16>
    tpu.vector_store %arg15[%c112, %c0_25], %61 {strides = array<i32>} : memref<144x512xbf16, #tpu.memory_space<vmem>>, vector<16x512xbf16>,
    %c8 = arith.constant 8 : index
    %c0_26 = arith.constant 0 : index
    %63 = vector.load %arg2[%c8, %c0_26] : memref<9x512xf32, #tpu.memory_space<vmem>>, vector<1x512xf32>
    %64 = arith.truncf %63 : vector<1x512xf32> to vector<1x512xbf16>
    %cst_27 = arith.constant 0.000000e+00 : bf16
    %65 = vector.broadcast %cst_27 : bf16 to vector<16x17xbf16>
    %66 = vector.extract_strided_slice %1 {offsets = [0, 17], sizes = [16, 495], strides = [1, 1]} : vector<16x512xbf16> to vector<16x495xbf16>
    %67 = tpu.concatenate %66, %65 in 1 : vector<16x495xbf16>, vector<16x17xbf16> -> vector<16x512xbf16>
    %68 = vector.broadcast %64 : vector<1x512xbf16> to vector<16x512xbf16>
    %69 = arith.mulf %67, %68 : vector<16x512xbf16>
    %c128 = arith.constant 128 : index
    %c0_28 = arith.constant 0 : index
    %70 = vector.load %arg15[%c128, %c0_28] : memref<144x512xbf16, #tpu.memory_space<vmem>>, vector<16x512xbf16>
    tpu.vector_store %arg15[%c128, %c0_28], %69 {strides = array<i32>} : memref<144x512xbf16, #tpu.memory_space<vmem>>, vector<16x512xbf16>,
    %c0_29 = arith.constant 0 : index
    %c0_30 = arith.constant 0 : index
    %71 = vector.load %arg15[%c0_29, %c0_30] : memref<144x512xbf16, #tpu.memory_space<vmem>>, vector<144x512xbf16>
    %c0_31 = arith.constant 0 : index
    %c0_32 = arith.constant 0 : index
    %72 = vector.load %arg6[%c0_31, %c0_32] : memref<16x144xbf16, #tpu.memory_space<vmem>>, vector<16x144xbf16>
    %cst_33 = arith.constant dense<0.000000e+00> : vector<16x512xf32>
    %73 = tpu.matmul %72, %71, %cst_33 {dimension_numbers = #tpu.dot_dimension_numbers<[1], [0], [0], [1], [0, 0, 1, 1], [], []>} : vector<16x144xbf16>, vector<144x512xbf16>, vector<16x512xf32> -> vector<16x512xf32>
    %c0_34 = arith.constant 0 : index
    %c0_35 = arith.constant 0 : index
    %74 = vector.load %arg7[%c0_34, %c0_35] : memref<16x1xf32, #tpu.memory_space<vmem>>, vector<16x1xf32>
    %75 = vector.broadcast %74 : vector<16x1xf32> to vector<16x512xf32>
    %76 = arith.addf %73, %75 : vector<16x512xf32>
    %cst_36 = arith.constant 0.000000e+00 : f32
    %77 = vector.broadcast %cst_36 : f32 to vector<16x512xf32>
    %78 = arith.maximumf %76, %77 : vector<16x512xf32>
    %79 = arith.truncf %78 : vector<16x512xf32> to vector<16x512xbf16>
    %c0_37 = arith.constant 0 : index
    %c0_38 = arith.constant 0 : index
    %80 = vector.load %arg2[%c0_37, %c0_38] : memref<9x512xf32, #tpu.memory_space<vmem>>, vector<1x512xf32>
    %81 = arith.truncf %80 : vector<1x512xf32> to vector<1x512xbf16>
    %cst_39 = arith.constant 0.000000e+00 : bf16
    %82 = vector.broadcast %cst_39 : bf16 to vector<16x17xbf16>
    %83 = vector.extract_strided_slice %79 {offsets = [0, 0], sizes = [16, 495], strides = [1, 1]} : vector<16x512xbf16> to vector<16x495xbf16>
    %84 = tpu.concatenate %82, %83 in 1 : vector<16x17xbf16>, vector<16x495xbf16> -> vector<16x512xbf16>
    %85 = vector.broadcast %81 : vector<1x512xbf16> to vector<16x512xbf16>
    %86 = arith.mulf %84, %85 : vector<16x512xbf16>
    %c0_40 = arith.constant 0 : index
    %c0_41 = arith.constant 0 : index
    %87 = vector.load %arg15[%c0_40, %c0_41] : memref<144x512xbf16, #tpu.memory_space<vmem>>, vector<16x512xbf16>
    tpu.vector_store %arg15[%c0_40, %c0_41], %86 {strides = array<i32>} : memref<144x512xbf16, #tpu.memory_space<vmem>>, vector<16x512xbf16>,
    %c1_42 = arith.constant 1 : index
    %c0_43 = arith.constant 0 : index
    %88 = vector.load %arg2[%c1_42, %c0_43] : memref<9x512xf32, #tpu.memory_space<vmem>>, vector<1x512xf32>
    %89 = arith.truncf %88 : vector<1x512xf32> to vector<1x512xbf16>
    %cst_44 = arith.constant 0.000000e+00 : bf16
    %90 = vector.broadcast %cst_44 : bf16 to vector<16x16xbf16>
    %91 = vector.extract_strided_slice %79 {offsets = [0, 0], sizes = [16, 496], strides = [1, 1]} : vector<16x512xbf16> to vector<16x496xbf16>
    %92 = tpu.concatenate %90, %91 in 1 : vector<16x16xbf16>, vector<16x496xbf16> -> vector<16x512xbf16>
    %93 = vector.broadcast %89 : vector<1x512xbf16> to vector<16x512xbf16>
    %94 = arith.mulf %92, %93 : vector<16x512xbf16>
    %c16_45 = arith.constant 16 : index
    %c0_46 = arith.constant 0 : index
    %95 = vector.load %arg15[%c16_45, %c0_46] : memref<144x512xbf16, #tpu.memory_space<vmem>>, vector<16x512xbf16>
    tpu.vector_store %arg15[%c16_45, %c0_46], %94 {strides = array<i32>} : memref<144x512xbf16, #tpu.memory_space<vmem>>, vector<16x512xbf16>,
    %c2_47 = arith.constant 2 : index
    %c0_48 = arith.constant 0 : index
    %96 = vector.load %arg2[%c2_47, %c0_48] : memref<9x512xf32, #tpu.memory_space<vmem>>, vector<1x512xf32>
    %97 = arith.truncf %96 : vector<1x512xf32> to vector<1x512xbf16>
    %cst_49 = arith.constant 0.000000e+00 : bf16
    %98 = vector.broadcast %cst_49 : bf16 to vector<16x15xbf16>
    %99 = vector.extract_strided_slice %79 {offsets = [0, 0], sizes = [16, 497], strides = [1, 1]} : vector<16x512xbf16> to vector<16x497xbf16>
    %100 = tpu.concatenate %98, %99 in 1 : vector<16x15xbf16>, vector<16x497xbf16> -> vector<16x512xbf16>
    %101 = vector.broadcast %97 : vector<1x512xbf16> to vector<16x512xbf16>
    %102 = arith.mulf %100, %101 : vector<16x512xbf16>
    %c32_50 = arith.constant 32 : index
    %c0_51 = arith.constant 0 : index
    %103 = vector.load %arg15[%c32_50, %c0_51] : memref<144x512xbf16, #tpu.memory_space<vmem>>, vector<16x512xbf16>
    tpu.vector_store %arg15[%c32_50, %c0_51], %102 {strides = array<i32>} : memref<144x512xbf16, #tpu.memory_space<vmem>>, vector<16x512xbf16>,
    %c3_52 = arith.constant 3 : index
    %c0_53 = arith.constant 0 : index
    %104 = vector.load %arg2[%c3_52, %c0_53] : memref<9x512xf32, #tpu.memory_space<vmem>>, vector<1x512xf32>
    %105 = arith.truncf %104 : vector<1x512xf32> to vector<1x512xbf16>
    %cst_54 = arith.constant 0.000000e+00 : bf16
    %106 = vector.broadcast %cst_54 : bf16 to vector<16x1xbf16>
    %107 = vector.extract_strided_slice %79 {offsets = [0, 0], sizes = [16, 511], strides = [1, 1]} : vector<16x512xbf16> to vector<16x511xbf16>
    %108 = tpu.concatenate %106, %107 in 1 : vector<16x1xbf16>, vector<16x511xbf16> -> vector<16x512xbf16>
    %109 = vector.broadcast %105 : vector<1x512xbf16> to vector<16x512xbf16>
    %110 = arith.mulf %108, %109 : vector<16x512xbf16>
    %c48_55 = arith.constant 48 : index
    %c0_56 = arith.constant 0 : index
    %111 = vector.load %arg15[%c48_55, %c0_56] : memref<144x512xbf16, #tpu.memory_space<vmem>>, vector<16x512xbf16>
    tpu.vector_store %arg15[%c48_55, %c0_56], %110 {strides = array<i32>} : memref<144x512xbf16, #tpu.memory_space<vmem>>, vector<16x512xbf16>,
    %c4_57 = arith.constant 4 : index
    %c0_58 = arith.constant 0 : index
    %112 = vector.load %arg2[%c4_57, %c0_58] : memref<9x512xf32, #tpu.memory_space<vmem>>, vector<1x512xf32>
    %113 = arith.truncf %112 : vector<1x512xf32> to vector<1x512xbf16>
    %114 = vector.broadcast %113 : vector<1x512xbf16> to vector<16x512xbf16>
    %115 = arith.mulf %79, %114 : vector<16x512xbf16>
    %c64_59 = arith.constant 64 : index
    %c0_60 = arith.constant 0 : index
    %116 = vector.load %arg15[%c64_59, %c0_60] : memref<144x512xbf16, #tpu.memory_space<vmem>>, vector<16x512xbf16>
    tpu.vector_store %arg15[%c64_59, %c0_60], %115 {strides = array<i32>} : memref<144x512xbf16, #tpu.memory_space<vmem>>, vector<16x512xbf16>,
    %c5_61 = arith.constant 5 : index
    %c0_62 = arith.constant 0 : index
    %117 = vector.load %arg2[%c5_61, %c0_62] : memref<9x512xf32, #tpu.memory_space<vmem>>, vector<1x512xf32>
    %118 = arith.truncf %117 : vector<1x512xf32> to vector<1x512xbf16>
    %cst_63 = arith.constant 0.000000e+00 : bf16
    %119 = vector.broadcast %cst_63 : bf16 to vector<16x1xbf16>
    %120 = vector.extract_strided_slice %79 {offsets = [0, 1], sizes = [16, 511], strides = [1, 1]} : vector<16x512xbf16> to vector<16x511xbf16>
    %121 = tpu.concatenate %120, %119 in 1 : vector<16x511xbf16>, vector<16x1xbf16> -> vector<16x512xbf16>
    %122 = vector.broadcast %118 : vector<1x512xbf16> to vector<16x512xbf16>
    %123 = arith.mulf %121, %122 : vector<16x512xbf16>
    %c80_64 = arith.constant 80 : index
    %c0_65 = arith.constant 0 : index
    %124 = vector.load %arg15[%c80_64, %c0_65] : memref<144x512xbf16, #tpu.memory_space<vmem>>, vector<16x512xbf16>
    tpu.vector_store %arg15[%c80_64, %c0_65], %123 {strides = array<i32>} : memref<144x512xbf16, #tpu.memory_space<vmem>>, vector<16x512xbf16>,
    %c6_66 = arith.constant 6 : index
    %c0_67 = arith.constant 0 : index
    %125 = vector.load %arg2[%c6_66, %c0_67] : memref<9x512xf32, #tpu.memory_space<vmem>>, vector<1x512xf32>
    %126 = arith.truncf %125 : vector<1x512xf32> to vector<1x512xbf16>
    %cst_68 = arith.constant 0.000000e+00 : bf16
    %127 = vector.broadcast %cst_68 : bf16 to vector<16x15xbf16>
    %128 = vector.extract_strided_slice %79 {offsets = [0, 15], sizes = [16, 497], strides = [1, 1]} : vector<16x512xbf16> to vector<16x497xbf16>
    %129 = tpu.concatenate %128, %127 in 1 : vector<16x497xbf16>, vector<16x15xbf16> -> vector<16x512xbf16>
    %130 = vector.broadcast %126 : vector<1x512xbf16> to vector<16x512xbf16>
    %131 = arith.mulf %129, %130 : vector<16x512xbf16>
    %c96_69 = arith.constant 96 : index
    %c0_70 = arith.constant 0 : index
    %132 = vector.load %arg15[%c96_69, %c0_70] : memref<144x512xbf16, #tpu.memory_space<vmem>>, vector<16x512xbf16>
    tpu.vector_store %arg15[%c96_69, %c0_70], %131 {strides = array<i32>} : memref<144x512xbf16, #tpu.memory_space<vmem>>, vector<16x512xbf16>,
    %c7_71 = arith.constant 7 : index
    %c0_72 = arith.constant 0 : index
    %133 = vector.load %arg2[%c7_71, %c0_72] : memref<9x512xf32, #tpu.memory_space<vmem>>, vector<1x512xf32>
    %134 = arith.truncf %133 : vector<1x512xf32> to vector<1x512xbf16>
    %cst_73 = arith.constant 0.000000e+00 : bf16
    %135 = vector.broadcast %cst_73 : bf16 to vector<16x16xbf16>
    %136 = vector.extract_strided_slice %79 {offsets = [0, 16], sizes = [16, 496], strides = [1, 1]} : vector<16x512xbf16> to vector<16x496xbf16>
    %137 = tpu.concatenate %136, %135 in 1 : vector<16x496xbf16>, vector<16x16xbf16> -> vector<16x512xbf16>
    %138 = vector.broadcast %134 : vector<1x512xbf16> to vector<16x512xbf16>
    %139 = arith.mulf %137, %138 : vector<16x512xbf16>
    %c112_74 = arith.constant 112 : index
    %c0_75 = arith.constant 0 : index
    %140 = vector.load %arg15[%c112_74, %c0_75] : memref<144x512xbf16, #tpu.memory_space<vmem>>, vector<16x512xbf16>
    tpu.vector_store %arg15[%c112_74, %c0_75], %139 {strides = array<i32>} : memref<144x512xbf16, #tpu.memory_space<vmem>>, vector<16x512xbf16>,
    %c8_76 = arith.constant 8 : index
    %c0_77 = arith.constant 0 : index
    %141 = vector.load %arg2[%c8_76, %c0_77] : memref<9x512xf32, #tpu.memory_space<vmem>>, vector<1x512xf32>
    %142 = arith.truncf %141 : vector<1x512xf32> to vector<1x512xbf16>
    %cst_78 = arith.constant 0.000000e+00 : bf16
    %143 = vector.broadcast %cst_78 : bf16 to vector<16x17xbf16>
    %144 = vector.extract_strided_slice %79 {offsets = [0, 17], sizes = [16, 495], strides = [1, 1]} : vector<16x512xbf16> to vector<16x495xbf16>
    %145 = tpu.concatenate %144, %143 in 1 : vector<16x495xbf16>, vector<16x17xbf16> -> vector<16x512xbf16>
    %146 = vector.broadcast %142 : vector<1x512xbf16> to vector<16x512xbf16>
    %147 = arith.mulf %145, %146 : vector<16x512xbf16>
    %c128_79 = arith.constant 128 : index
    %c0_80 = arith.constant 0 : index
    %148 = vector.load %arg15[%c128_79, %c0_80] : memref<144x512xbf16, #tpu.memory_space<vmem>>, vector<16x512xbf16>
    tpu.vector_store %arg15[%c128_79, %c0_80], %147 {strides = array<i32>} : memref<144x512xbf16, #tpu.memory_space<vmem>>, vector<16x512xbf16>,
    %c0_81 = arith.constant 0 : index
    %c0_82 = arith.constant 0 : index
    %149 = vector.load %arg15[%c0_81, %c0_82] : memref<144x512xbf16, #tpu.memory_space<vmem>>, vector<144x512xbf16>
    %c0_83 = arith.constant 0 : index
    %c0_84 = arith.constant 0 : index
    %150 = vector.load %arg4[%c0_83, %c0_84] : memref<512x128xbf16, #tpu.memory_space<vmem>>, vector<512x128xbf16>
    %cst_85 = arith.constant dense<0.000000e+00> : vector<144x128xf32>
    %151 = tpu.matmul %149, %150, %cst_85 {dimension_numbers = #tpu.dot_dimension_numbers<[1], [0], [0], [1], [0, 0, 1, 1], [], []>} : vector<144x512xbf16>, vector<512x128xbf16>, vector<144x128xf32> -> vector<144x128xf32>
    %152 = arith.truncf %151 : vector<144x128xf32> to vector<144x128xbf16>
    %c0_86 = arith.constant 0 : index
    %c0_87 = arith.constant 0 : index
    %153 = vector.load %arg8[%c0_86, %c0_87] : memref<32x144xbf16, #tpu.memory_space<vmem>>, vector<32x144xbf16>
    %cst_88 = arith.constant dense<0.000000e+00> : vector<32x128xf32>
    %154 = tpu.matmul %153, %152, %cst_88 {dimension_numbers = #tpu.dot_dimension_numbers<[1], [0], [0], [1], [0, 0, 1, 1], [], []>} : vector<32x144xbf16>, vector<144x128xbf16>, vector<32x128xf32> -> vector<32x128xf32>
    %c0_89 = arith.constant 0 : index
    %c0_90 = arith.constant 0 : index
    %155 = vector.load %arg9[%c0_89, %c0_90] : memref<32x1xf32, #tpu.memory_space<vmem>>, vector<32x1xf32>
    %156 = vector.broadcast %155 : vector<32x1xf32> to vector<32x128xf32>
    %157 = arith.addf %154, %156 : vector<32x128xf32>
    %cst_91 = arith.constant 0.000000e+00 : f32
    %158 = vector.broadcast %cst_91 : f32 to vector<32x128xf32>
    %159 = arith.maximumf %157, %158 : vector<32x128xf32>
    %160 = arith.truncf %159 : vector<32x128xf32> to vector<32x128xbf16>
    %c0_92 = arith.constant 0 : index
    %c0_93 = arith.constant 0 : index
    %161 = vector.load %arg3[%c0_92, %c0_93] : memref<9x128xf32, #tpu.memory_space<vmem>>, vector<1x128xf32>
    %162 = arith.truncf %161 : vector<1x128xf32> to vector<1x128xbf16>
    %cst_94 = arith.constant 0.000000e+00 : bf16
    %163 = vector.broadcast %cst_94 : bf16 to vector<32x9xbf16>
    %164 = vector.extract_strided_slice %160 {offsets = [0, 0], sizes = [32, 119], strides = [1, 1]} : vector<32x128xbf16> to vector<32x119xbf16>
    %165 = tpu.concatenate %163, %164 in 1 : vector<32x9xbf16>, vector<32x119xbf16> -> vector<32x128xbf16>
    %166 = vector.broadcast %162 : vector<1x128xbf16> to vector<32x128xbf16>
    %167 = arith.mulf %165, %166 : vector<32x128xbf16>
    %c0_95 = arith.constant 0 : index
    %c0_96 = arith.constant 0 : index
    %168 = vector.load %arg16[%c0_95, %c0_96] : memref<288x128xbf16, #tpu.memory_space<vmem>>, vector<32x128xbf16>
    tpu.vector_store %arg16[%c0_95, %c0_96], %167 {strides = array<i32>} : memref<288x128xbf16, #tpu.memory_space<vmem>>, vector<32x128xbf16>,
    %c1_97 = arith.constant 1 : index
    %c0_98 = arith.constant 0 : index
    %169 = vector.load %arg3[%c1_97, %c0_98] : memref<9x128xf32, #tpu.memory_space<vmem>>, vector<1x128xf32>
    %170 = arith.truncf %169 : vector<1x128xf32> to vector<1x128xbf16>
    %cst_99 = arith.constant 0.000000e+00 : bf16
    %171 = vector.broadcast %cst_99 : bf16 to vector<32x8xbf16>
    %172 = vector.extract_strided_slice %160 {offsets = [0, 0], sizes = [32, 120], strides = [1, 1]} : vector<32x128xbf16> to vector<32x120xbf16>
    %173 = tpu.concatenate %171, %172 in 1 : vector<32x8xbf16>, vector<32x120xbf16> -> vector<32x128xbf16>
    %174 = vector.broadcast %170 : vector<1x128xbf16> to vector<32x128xbf16>
    %175 = arith.mulf %173, %174 : vector<32x128xbf16>
    %c32_100 = arith.constant 32 : index
    %c0_101 = arith.constant 0 : index
    %176 = vector.load %arg16[%c32_100, %c0_101] : memref<288x128xbf16, #tpu.memory_space<vmem>>, vector<32x128xbf16>
    tpu.vector_store %arg16[%c32_100, %c0_101], %175 {strides = array<i32>} : memref<288x128xbf16, #tpu.memory_space<vmem>>, vector<32x128xbf16>,
    %c2_102 = arith.constant 2 : index
    %c0_103 = arith.constant 0 : index
    %177 = vector.load %arg3[%c2_102, %c0_103] : memref<9x128xf32, #tpu.memory_space<vmem>>, vector<1x128xf32>
    %178 = arith.truncf %177 : vector<1x128xf32> to vector<1x128xbf16>
    %cst_104 = arith.constant 0.000000e+00 : bf16
    %179 = vector.broadcast %cst_104 : bf16 to vector<32x7xbf16>
    %180 = vector.extract_strided_slice %160 {offsets = [0, 0], sizes = [32, 121], strides = [1, 1]} : vector<32x128xbf16> to vector<32x121xbf16>
    %181 = tpu.concatenate %179, %180 in 1 : vector<32x7xbf16>, vector<32x121xbf16> -> vector<32x128xbf16>
    %182 = vector.broadcast %178 : vector<1x128xbf16> to vector<32x128xbf16>
    %183 = arith.mulf %181, %182 : vector<32x128xbf16>
    %c64_105 = arith.constant 64 : index
    %c0_106 = arith.constant 0 : index
    %184 = vector.load %arg16[%c64_105, %c0_106] : memref<288x128xbf16, #tpu.memory_space<vmem>>, vector<32x128xbf16>
    tpu.vector_store %arg16[%c64_105, %c0_106], %183 {strides = array<i32>} : memref<288x128xbf16, #tpu.memory_space<vmem>>, vector<32x128xbf16>,
    %c3_107 = arith.constant 3 : index
    %c0_108 = arith.constant 0 : index
    %185 = vector.load %arg3[%c3_107, %c0_108] : memref<9x128xf32, #tpu.memory_space<vmem>>, vector<1x128xf32>
    %186 = arith.truncf %185 : vector<1x128xf32> to vector<1x128xbf16>
    %cst_109 = arith.constant 0.000000e+00 : bf16
    %187 = vector.broadcast %cst_109 : bf16 to vector<32x1xbf16>
    %188 = vector.extract_strided_slice %160 {offsets = [0, 0], sizes = [32, 127], strides = [1, 1]} : vector<32x128xbf16> to vector<32x127xbf16>
    %189 = tpu.concatenate %187, %188 in 1 : vector<32x1xbf16>, vector<32x127xbf16> -> vector<32x128xbf16>
    %190 = vector.broadcast %186 : vector<1x128xbf16> to vector<32x128xbf16>
    %191 = arith.mulf %189, %190 : vector<32x128xbf16>
    %c96_110 = arith.constant 96 : index
    %c0_111 = arith.constant 0 : index
    %192 = vector.load %arg16[%c96_110, %c0_111] : memref<288x128xbf16, #tpu.memory_space<vmem>>, vector<32x128xbf16>
    tpu.vector_store %arg16[%c96_110, %c0_111], %191 {strides = array<i32>} : memref<288x128xbf16, #tpu.memory_space<vmem>>, vector<32x128xbf16>,
    %c4_112 = arith.constant 4 : index
    %c0_113 = arith.constant 0 : index
    %193 = vector.load %arg3[%c4_112, %c0_113] : memref<9x128xf32, #tpu.memory_space<vmem>>, vector<1x128xf32>
    %194 = arith.truncf %193 : vector<1x128xf32> to vector<1x128xbf16>
    %195 = vector.broadcast %194 : vector<1x128xbf16> to vector<32x128xbf16>
    %196 = arith.mulf %160, %195 : vector<32x128xbf16>
    %c128_114 = arith.constant 128 : index
    %c0_115 = arith.constant 0 : index
    %197 = vector.load %arg16[%c128_114, %c0_115] : memref<288x128xbf16, #tpu.memory_space<vmem>>, vector<32x128xbf16>
    tpu.vector_store %arg16[%c128_114, %c0_115], %196 {strides = array<i32>} : memref<288x128xbf16, #tpu.memory_space<vmem>>, vector<32x128xbf16>,
    %c5_116 = arith.constant 5 : index
    %c0_117 = arith.constant 0 : index
    %198 = vector.load %arg3[%c5_116, %c0_117] : memref<9x128xf32, #tpu.memory_space<vmem>>, vector<1x128xf32>
    %199 = arith.truncf %198 : vector<1x128xf32> to vector<1x128xbf16>
    %cst_118 = arith.constant 0.000000e+00 : bf16
    %200 = vector.broadcast %cst_118 : bf16 to vector<32x1xbf16>
    %201 = vector.extract_strided_slice %160 {offsets = [0, 1], sizes = [32, 127], strides = [1, 1]} : vector<32x128xbf16> to vector<32x127xbf16>
    %202 = tpu.concatenate %201, %200 in 1 : vector<32x127xbf16>, vector<32x1xbf16> -> vector<32x128xbf16>
    %203 = vector.broadcast %199 : vector<1x128xbf16> to vector<32x128xbf16>
    %204 = arith.mulf %202, %203 : vector<32x128xbf16>
    %c160 = arith.constant 160 : index
    %c0_119 = arith.constant 0 : index
    %205 = vector.load %arg16[%c160, %c0_119] : memref<288x128xbf16, #tpu.memory_space<vmem>>, vector<32x128xbf16>
    tpu.vector_store %arg16[%c160, %c0_119], %204 {strides = array<i32>} : memref<288x128xbf16, #tpu.memory_space<vmem>>, vector<32x128xbf16>,
    %c6_120 = arith.constant 6 : index
    %c0_121 = arith.constant 0 : index
    %206 = vector.load %arg3[%c6_120, %c0_121] : memref<9x128xf32, #tpu.memory_space<vmem>>, vector<1x128xf32>
    %207 = arith.truncf %206 : vector<1x128xf32> to vector<1x128xbf16>
    %cst_122 = arith.constant 0.000000e+00 : bf16
    %208 = vector.broadcast %cst_122 : bf16 to vector<32x7xbf16>
    %209 = vector.extract_strided_slice %160 {offsets = [0, 7], sizes = [32, 121], strides = [1, 1]} : vector<32x128xbf16> to vector<32x121xbf16>
    %210 = tpu.concatenate %209, %208 in 1 : vector<32x121xbf16>, vector<32x7xbf16> -> vector<32x128xbf16>
    %211 = vector.broadcast %207 : vector<1x128xbf16> to vector<32x128xbf16>
    %212 = arith.mulf %210, %211 : vector<32x128xbf16>
    %c192 = arith.constant 192 : index
    %c0_123 = arith.constant 0 : index
    %213 = vector.load %arg16[%c192, %c0_123] : memref<288x128xbf16, #tpu.memory_space<vmem>>, vector<32x128xbf16>
    tpu.vector_store %arg16[%c192, %c0_123], %212 {strides = array<i32>} : memref<288x128xbf16, #tpu.memory_space<vmem>>, vector<32x128xbf16>,
    %c7_124 = arith.constant 7 : index
    %c0_125 = arith.constant 0 : index
    %214 = vector.load %arg3[%c7_124, %c0_125] : memref<9x128xf32, #tpu.memory_space<vmem>>, vector<1x128xf32>
    %215 = arith.truncf %214 : vector<1x128xf32> to vector<1x128xbf16>
    %cst_126 = arith.constant 0.000000e+00 : bf16
    %216 = vector.broadcast %cst_126 : bf16 to vector<32x8xbf16>
    %217 = vector.extract_strided_slice %160 {offsets = [0, 8], sizes = [32, 120], strides = [1, 1]} : vector<32x128xbf16> to vector<32x120xbf16>
    %218 = tpu.concatenate %217, %216 in 1 : vector<32x120xbf16>, vector<32x8xbf16> -> vector<32x128xbf16>
    %219 = vector.broadcast %215 : vector<1x128xbf16> to vector<32x128xbf16>
    %220 = arith.mulf %218, %219 : vector<32x128xbf16>
    %c224 = arith.constant 224 : index
    %c0_127 = arith.constant 0 : index
    %221 = vector.load %arg16[%c224, %c0_127] : memref<288x128xbf16, #tpu.memory_space<vmem>>, vector<32x128xbf16>
    tpu.vector_store %arg16[%c224, %c0_127], %220 {strides = array<i32>} : memref<288x128xbf16, #tpu.memory_space<vmem>>, vector<32x128xbf16>,
    %c8_128 = arith.constant 8 : index
    %c0_129 = arith.constant 0 : index
    %222 = vector.load %arg3[%c8_128, %c0_129] : memref<9x128xf32, #tpu.memory_space<vmem>>, vector<1x128xf32>
    %223 = arith.truncf %222 : vector<1x128xf32> to vector<1x128xbf16>
    %cst_130 = arith.constant 0.000000e+00 : bf16
    %224 = vector.broadcast %cst_130 : bf16 to vector<32x9xbf16>
    %225 = vector.extract_strided_slice %160 {offsets = [0, 9], sizes = [32, 119], strides = [1, 1]} : vector<32x128xbf16> to vector<32x119xbf16>
    %226 = tpu.concatenate %225, %224 in 1 : vector<32x119xbf16>, vector<32x9xbf16> -> vector<32x128xbf16>
    %227 = vector.broadcast %223 : vector<1x128xbf16> to vector<32x128xbf16>
    %228 = arith.mulf %226, %227 : vector<32x128xbf16>
    %c256 = arith.constant 256 : index
    %c0_131 = arith.constant 0 : index
    %229 = vector.load %arg16[%c256, %c0_131] : memref<288x128xbf16, #tpu.memory_space<vmem>>, vector<32x128xbf16>
    tpu.vector_store %arg16[%c256, %c0_131], %228 {strides = array<i32>} : memref<288x128xbf16, #tpu.memory_space<vmem>>, vector<32x128xbf16>,
    %c0_132 = arith.constant 0 : index
    %c0_133 = arith.constant 0 : index
    %230 = vector.load %arg16[%c0_132, %c0_133] : memref<288x128xbf16, #tpu.memory_space<vmem>>, vector<288x128xbf16>
    %c0_134 = arith.constant 0 : index
    %c0_135 = arith.constant 0 : index
    %231 = vector.load %arg10[%c0_134, %c0_135] : memref<8x288xbf16, #tpu.memory_space<vmem>>, vector<8x288xbf16>
    %cst_136 = arith.constant dense<0.000000e+00> : vector<8x128xf32>
    %232 = tpu.matmul %231, %230, %cst_136 {dimension_numbers = #tpu.dot_dimension_numbers<[1], [0], [0], [1], [0, 0, 1, 1], [], []>} : vector<8x288xbf16>, vector<288x128xbf16>, vector<8x128xf32> -> vector<8x128xf32>
    %c0_137 = arith.constant 0 : index
    %c0_138 = arith.constant 0 : index
    %233 = vector.load %arg11[%c0_137, %c0_138] : memref<8x1xf32, #tpu.memory_space<vmem>>, vector<8x1xf32>
    %234 = vector.broadcast %233 : vector<8x1xf32> to vector<8x128xf32>
    %235 = arith.addf %232, %234 : vector<8x128xf32>
    %cst_139 = arith.constant 0.000000e+00 : f32
    %236 = vector.broadcast %cst_139 : f32 to vector<8x128xf32>
    %237 = arith.maximumf %235, %236 : vector<8x128xf32>
    %c0_140 = arith.constant 0 : index
    %c0_141 = arith.constant 0 : index
    %238 = vector.load %arg12[%c0_140, %c0_141] : memref<8x8xf32, #tpu.memory_space<vmem>>, vector<8x8xf32>
    %cst_142 = arith.constant dense<0.000000e+00> : vector<8x128xf32>
    %239 = tpu.matmul %238, %237, %cst_142 {dimension_numbers = #tpu.dot_dimension_numbers<[1], [0], [0], [1], [0, 0, 1, 1], [], []>} : vector<8x8xf32>, vector<8x128xf32>, vector<8x128xf32> -> vector<8x128xf32>
    %c0_143 = arith.constant 0 : index
    %c0_144 = arith.constant 0 : index
    %240 = vector.load %arg13[%c0_143, %c0_144] : memref<8x1xf32, #tpu.memory_space<vmem>>, vector<8x1xf32>
    %241 = vector.broadcast %240 : vector<8x1xf32> to vector<8x128xf32>
    %242 = arith.addf %239, %241 : vector<8x128xf32>
    %c0_145 = arith.constant 0 : index
    %c0_146 = arith.constant 0 : index
    %243 = vector.load %arg5[%c0_145, %c0_146] : memref<128x512xf32, #tpu.memory_space<vmem>>, vector<128x512xf32>
    %cst_147 = arith.constant dense<0.000000e+00> : vector<8x512xf32>
    %244 = tpu.matmul %242, %243, %cst_147 {dimension_numbers = #tpu.dot_dimension_numbers<[1], [0], [0], [1], [0, 0, 1, 1], [], []>} : vector<8x128xf32>, vector<128x512xf32>, vector<8x512xf32> -> vector<8x512xf32>
    %cst_148 = arith.constant dense<0xFF800000> : vector<512xf32>
    %245 = vector.multi_reduction <maximumf>, %244, %cst_148 [0] : vector<8x512xf32> to vector<512xf32>
    %246 = vector.shape_cast %245 : vector<512xf32> to vector<1x512xf32>
    %247 = vector.broadcast %246 : vector<1x512xf32> to vector<8x512xf32>
    %248 = arith.subf %244, %247 : vector<8x512xf32>
    %249 = math.exp %248 : vector<8x512xf32>
    %cst_149 = arith.constant dense<0.000000e+00> : vector<512xf32>
    %250 = vector.multi_reduction <add>, %249, %cst_149 [0] : vector<8x512xf32> to vector<512xf32>
    %251 = vector.shape_cast %250 : vector<512xf32> to vector<1x512xf32>
    %252 = tpu.reciprocal %251 : vector<1x512xf32> -> vector<1x512xf32>
    %253 = vector.broadcast %252 : vector<1x512xf32> to vector<8x512xf32>
    %254 = arith.mulf %249, %253 : vector<8x512xf32>
    %c0_150 = arith.constant 0 : index
    %c0_151 = arith.constant 0 : index
    %c0_152 = arith.constant 0 : index
    %255 = vector.load %arg14[%c0_150, %c0_151, %c0_152] : memref<1x8x512xf32, #tpu.memory_space<vmem>>, vector<1x8x512xf32>
    %256 = vector.shape_cast %255 : vector<1x8x512xf32> to vector<8x512xf32>
    %257 = vector.shape_cast %254 : vector<8x512xf32> to vector<1x8x512xf32>
    tpu.vector_store %arg14[%c0_150, %c0_151, %c0_152], %257 {strides = array<i32>} : memref<1x8x512xf32, #tpu.memory_space<vmem>>, vector<1x8x512xf32>,
    return
  }
  func.func @transform_0(%arg0: i32) -> (i32, i32, i32) {
    %c0_i32 = arith.constant 0 : i32
    %c0_i32_0 = arith.constant 0 : i32
    %c0_i32_1 = arith.constant 0 : i32
    return %arg0, %c0_i32, %c0_i32_0 : i32, i32, i32
  }
  func.func @transform_1(%arg0: i32) -> (i32, i32) {
    %c0_i32 = arith.constant 0 : i32
    %c0_i32_0 = arith.constant 0 : i32
    %c0_i32_1 = arith.constant 0 : i32
    return %c0_i32, %c0_i32_0 : i32, i32
  }
  func.func @transform_2(%arg0: i32) -> (i32, i32) {
    %c0_i32 = arith.constant 0 : i32
    %c0_i32_0 = arith.constant 0 : i32
    %c0_i32_1 = arith.constant 0 : i32
    return %c0_i32, %c0_i32_0 : i32, i32
  }
  func.func @transform_3(%arg0: i32) -> (i32, i32) {
    %c0_i32 = arith.constant 0 : i32
    %c0_i32_0 = arith.constant 0 : i32
    %c0_i32_1 = arith.constant 0 : i32
    return %c0_i32, %c0_i32_0 : i32, i32
  }
  func.func @transform_4(%arg0: i32) -> (i32, i32) {
    %c0_i32 = arith.constant 0 : i32
    %c0_i32_0 = arith.constant 0 : i32
    %c0_i32_1 = arith.constant 0 : i32
    return %c0_i32, %c0_i32_0 : i32, i32
  }
  func.func @transform_5(%arg0: i32) -> (i32, i32) {
    %c0_i32 = arith.constant 0 : i32
    %c0_i32_0 = arith.constant 0 : i32
    %c0_i32_1 = arith.constant 0 : i32
    return %c0_i32, %c0_i32_0 : i32, i32
  }
  func.func @transform_6(%arg0: i32) -> (i32, i32) {
    %c0_i32 = arith.constant 0 : i32
    %c0_i32_0 = arith.constant 0 : i32
    %c0_i32_1 = arith.constant 0 : i32
    return %c0_i32, %c0_i32_0 : i32, i32
  }
  func.func @transform_7(%arg0: i32) -> (i32, i32) {
    %c0_i32 = arith.constant 0 : i32
    %c0_i32_0 = arith.constant 0 : i32
    %c0_i32_1 = arith.constant 0 : i32
    return %c0_i32, %c0_i32_0 : i32, i32
  }
  func.func @transform_8(%arg0: i32) -> (i32, i32) {
    %c0_i32 = arith.constant 0 : i32
    %c0_i32_0 = arith.constant 0 : i32
    %c0_i32_1 = arith.constant 0 : i32
    return %c0_i32, %c0_i32_0 : i32, i32
  }
  func.func @transform_9(%arg0: i32) -> (i32, i32) {
    %c0_i32 = arith.constant 0 : i32
    %c0_i32_0 = arith.constant 0 : i32
    %c0_i32_1 = arith.constant 0 : i32
    return %c0_i32, %c0_i32_0 : i32, i32
  }
  func.func @transform_10(%arg0: i32) -> (i32, i32) {
    %c0_i32 = arith.constant 0 : i32
    %c0_i32_0 = arith.constant 0 : i32
    %c0_i32_1 = arith.constant 0 : i32
    return %c0_i32, %c0_i32_0 : i32, i32
  }
  func.func @transform_11(%arg0: i32) -> (i32, i32) {
    %c0_i32 = arith.constant 0 : i32
    %c0_i32_0 = arith.constant 0 : i32
    %c0_i32_1 = arith.constant 0 : i32
    return %c0_i32, %c0_i32_0 : i32, i32
  }
  func.func @transform_12(%arg0: i32) -> (i32, i32) {
    %c0_i32 = arith.constant 0 : i32
    %c0_i32_0 = arith.constant 0 : i32
    %c0_i32_1 = arith.constant 0 : i32
    return %c0_i32, %c0_i32_0 : i32, i32
  }
  func.func @transform_13(%arg0: i32) -> (i32, i32, i32) {
    %c0_i32 = arith.constant 0 : i32
    %c0_i32_0 = arith.constant 0 : i32
    %c0_i32_1 = arith.constant 0 : i32
    return %arg0, %c0_i32, %c0_i32_0 : i32, i32, i32
  }
}

</mosaic_0001>

<llo_original>
// kernel: generalized_semseg_forward.1
$region0: #{generalized_semseg_forward.1}
  #allocation0 [shape = 'u32[]', space=smem, size = 0x4, offset = 0x4, fixed_abs, tag = 'smem constant byte address 0x4 - core index']
  #allocation1 [shape = 'u32[144,128]{1,0:T(1,128)}', space=vmem, size = 0x12000, scoped, tag = 'internal scratch']
  #allocation2 [shape = 'bf16[144,512]{1,0:T(8,128)(2,1)}', space=vmem, size = 0x24000, scoped, tag = 'scratch operand']
  #allocation3 [shape = 'bf16[288,128]{1,0:T(8,128)(2,1)}', space=vmem, size = 0x12000, scoped, tag = 'scratch operand']
  %s0 = inlined_call_operand.vmem [shape: bf16[2,16,512], index: 0, kind: input, shape index: {}]
  %s1 = inlined_call_operand.vmem [shape: f32[9,512], index: 1, kind: input, shape index: {}]
  %s2 = inlined_call_operand.vmem [shape: f32[9,128], index: 2, kind: input, shape index: {}]
  %s3 = inlined_call_operand.vmem [shape: bf16[512,128], index: 3, kind: input, shape index: {}]
  %s4 = inlined_call_operand.vmem [shape: f32[128,512], index: 4, kind: input, shape index: {}]
  %s5 = inlined_call_operand.vmem [shape: bf16[16,144], index: 5, kind: input, shape index: {}]
  %s6 = inlined_call_operand.vmem [shape: f32[16,1], index: 6, kind: input, shape index: {}]
  %s7 = inlined_call_operand.vmem [shape: bf16[32,144], index: 7, kind: input, shape index: {}]
  %s8 = inlined_call_operand.vmem [shape: f32[32,1], index: 8, kind: input, shape index: {}]
  %s9 = inlined_call_operand.vmem [shape: bf16[8,288], index: 9, kind: input, shape index: {}]
  %s10 = inlined_call_operand.vmem [shape: f32[8,1], index: 10, kind: input, shape index: {}]
  %s11 = inlined_call_operand.vmem [shape: f32[8,8], index: 11, kind: input, shape index: {}]
  %s12 = inlined_call_operand.vmem [shape: f32[8,1], index: 12, kind: input, shape index: {}]
  %s13 = inlined_call_operand.vmem [shape: f32[2,8,512], index: 13, kind: output, shape index: {}]
  %s14 = sld [smem:[#allocation0]]
  $region85: #{generalized_semseg_forward.1} parent=0
    _
  %s16 = ssub.s32 1, %s14
  %s17 = scalar_select 0, %s16, %s14
  loop: start=0, step=1, limit=4
  $region2: #{generalized_semseg_forward.1} parent=0 // loop_pre_header
    _
  $region3: #{generalized_semseg_forward.1} parent=0 // loop_header
    %s19 = sphi 0, %s23
    %p20 = scmp.ge.s32.totalorder %s19, 4
    %s29 = sphi 0, %s31
    %s32 = sphi 0, %s29
    %s33 = sphi 0, %s32
    %s49 = sphi 0, %s33
    %s53 = sphi 0, %s53
    %s55 = sphi 0, %s53
    %s56 = sphi 0, %s55
    %s70 = sphi 0, %s56
    %s74 = sphi 0, %s74
    %s76 = sphi 0, %s74
    %s77 = sphi 0, %s76
    %s91 = sphi 0, %s77
    %s95 = sphi 0, %s95
    %s97 = sphi 0, %s95
    %s98 = sphi 0, %s97
    %s112 = sphi 0, %s98
    %s116 = sphi 0, %s116
    %s118 = sphi 0, %s116
    %s119 = sphi 0, %s118
    %s133 = sphi 0, %s119
    %s137 = sphi 0, %s137
    %s139 = sphi 0, %s137
    %s140 = sphi 0, %s139
    %s154 = sphi 0, %s140
    %s158 = sphi 0, %s158
    %s160 = sphi 0, %s158
    %s161 = sphi 0, %s160
    %s175 = sphi 0, %s161
    %s179 = sphi 0, %s179
    %s181 = sphi 0, %s179
    %s182 = sphi 0, %s181
    %s196 = sphi 0, %s182
    %s200 = sphi 0, %s200
    %s202 = sphi 0, %s200
    %s203 = sphi 0, %s202
    %s217 = sphi 0, %s203
    %s221 = sphi 0, %s221
    %s223 = sphi 0, %s221
    %s224 = sphi 0, %s223
    %s238 = sphi 0, %s224
    %s242 = sphi 0, %s242
    %s244 = sphi 0, %s242
    %s245 = sphi 0, %s244
    %s259 = sphi 0, %s245
    %s263 = sphi 0, %s263
    %s265 = sphi 0, %s263
    %s266 = sphi 0, %s265
    %s280 = sphi 0, %s266
    %s284 = sphi 0, %s284
    %s286 = sphi 0, %s284
    %s287 = sphi 0, %s286
    %s301 = sphi 0, %s287
    %s307 = sphi 0, %s309
    %s310 = sphi 0, %s307
    %s311 = sphi 0, %s310
    %s327 = sphi 0, %s311
  $region4: #{generalized_semseg_forward.1} parent=0 // loop_header_branch
    %22 = sbr.rel (%p20) target = $region8
  $region5: #{generalized_semseg_forward.1} parent=0 // loop_body
    %s24 = ssub.s32 %s19, 1
    %s25 = ssub.s32 %s19, 2
    %s26 = sadd.s32 %s19, 1
    %s27 = ssub.s32 %s19, %s26
    %p28 = scmp.eq.s32.totalorder %s27, 0
    %s30 = sadd.s32 %s29, 1
    %s31 = scalar_select %p28, %s29, %s30
    %p34 = pneg %p28
    %p35 = scmp.eq.s32.totalorder %s19, 1
    %p36 = por %p34, %p35
    %p37 = scmp.ne.s32.totalorder %s29, %s32
    %p38 = scmp.eq.s32.totalorder %s19, 0
    %p39 = por %p37, %p38
    %p40 = scmp.ne.s32.totalorder %s29, %s32
    %p41 = scmp.eq.s32.totalorder %s24, 1
    %p42 = por %p40, %p41
    %p43 = scmp.ne.s32.totalorder %s32, %s33
    %p44 = scmp.eq.s32.totalorder %s24, 0
    %p45 = por %p43, %p44
    %p46 = scmp.ne.s32.totalorder %s32, %s33
    %p47 = scmp.eq.s32.totalorder %s25, 1
    %p48 = por %p46, %p47
    %p50 = scmp.ne.s32.totalorder %s33, %s49
    %p51 = scmp.eq.s32.totalorder %s25, 0
    %p52 = por %p50, %p51
    %s54 = sadd.s32 %s53, 1
    %p57 = scmp.eq.s32.totalorder %s19, 1
    %p58 = scmp.ne.s32.totalorder %s53, %s55
    %p59 = scmp.eq.s32.totalorder %s19, 0
    %p60 = por %p58, %p59
    %p61 = scmp.ne.s32.totalorder %s53, %s55
    %p62 = scmp.eq.s32.totalorder %s24, 1
    %p63 = por %p61, %p62
    %p64 = scmp.ne.s32.totalorder %s55, %s56
    %p65 = scmp.eq.s32.totalorder %s24, 0
    %p66 = por %p64, %p65
    %p67 = scmp.ne.s32.totalorder %s55, %s56
    %p68 = scmp.eq.s32.totalorder %s25, 1
    %p69 = por %p67, %p68
    %p71 = scmp.ne.s32.totalorder %s56, %s70
    %p72 = scmp.eq.s32.totalorder %s25, 0
    %p73 = por %p71, %p72
    %s75 = sadd.s32 %s74, 1
    %p78 = scmp.eq.s32.totalorder %s19, 1
    %p79 = scmp.ne.s32.totalorder %s74, %s76
    %p80 = scmp.eq.s32.totalorder %s19, 0
    %p81 = por %p79, %p80
    %p82 = scmp.ne.s32.totalorder %s74, %s76
    %p83 = scmp.eq.s32.totalorder %s24, 1
    %p84 = por %p82, %p83
    %p85 = scmp.ne.s32.totalorder %s76, %s77
    %p86 = scmp.eq.s32.totalorder %s24, 0
    %p87 = por %p85, %p86
    %p88 = scmp.ne.s32.totalorder %s76, %s77
    %p89 = scmp.eq.s32.totalorder %s25, 1
    %p90 = por %p88, %p89
    %p92 = scmp.ne.s32.totalorder %s77, %s91
    %p93 = scmp.eq.s32.totalorder %s25, 0
    %p94 = por %p92, %p93
    %s96 = sadd.s32 %s95, 1
    %p99 = scmp.eq.s32.totalorder %s19, 1
    %p100 = scmp.ne.s32.totalorder %s95, %s97
    %p101 = scmp.eq.s32.totalorder %s19, 0
    %p102 = por %p100, %p101
    %p103 = scmp.ne.s32.totalorder %s95, %s97
    %p104 = scmp.eq.s32.totalorder %s24, 1
    %p105 = por %p103, %p104
    %p106 = scmp.ne.s32.totalorder %s97, %s98
    %p107 = scmp.eq.s32.totalorder %s24, 0
    %p108 = por %p106, %p107
    %p109 = scmp.ne.s32.totalorder %s97, %s98
    %p110 = scmp.eq.s32.totalorder %s25, 1
    %p111 = por %p109, %p110
    %p113 = scmp.ne.s32.totalorder %s98, %s112
    %p114 = scmp.eq.s32.totalorder %s25, 0
    %p115 = por %p113, %p114
    %s117 = sadd.s32 %s116, 1
    %p120 = scmp.eq.s32.totalorder %s19, 1
    %p121 = scmp.ne.s32.totalorder %s116, %s118
    %p122 = scmp.eq.s32.totalorder %s19, 0
    %p123 = por %p121, %p122
    %p124 = scmp.ne.s32.totalorder %s116, %s118
    %p125 = scmp.eq.s32.totalorder %s24, 1
    %p126 = por %p124, %p125
    %p127 = scmp.ne.s32.totalorder %s118, %s119
    %p128 = scmp.eq.s32.totalorder %s24, 0
    %p129 = por %p127, %p128
    %p130 = scmp.ne.s32.totalorder %s118, %s119
    %p131 = scmp.eq.s32.totalorder %s25, 1
    %p132 = por %p130, %p131
    %p134 = scmp.ne.s32.totalorder %s119, %s133
    %p135 = scmp.eq.s32.totalorder %s25, 0
    %p136 = por %p134, %p135
    %s138 = sadd.s32 %s137, 1
    %p141 = scmp.eq.s32.totalorder %s19, 1
    %p142 = scmp.ne.s32.totalorder %s137, %s139
    %p143 = scmp.eq.s32.totalorder %s19, 0
    %p144 = por %p142, %p143
    %p145 = scmp.ne.s32.totalorder %s137, %s139
    %p146 = scmp.eq.s32.totalorder %s24, 1
    %p147 = por %p145, %p146
    %p148 = scmp.ne.s32.totalorder %s139, %s140
    %p149 = scmp.eq.s32.totalorder %s24, 0
    %p150 = por %p148, %p149
    %p151 = scmp.ne.s32.totalorder %s139, %s140
    %p152 = scmp.eq.s32.totalorder %s25, 1
    %p153 = por %p151, %p152
    %p155 = scmp.ne.s32.totalorder %s140, %s154
    %p156 = scmp.eq.s32.totalorder %s25, 0
    %p157 = por %p155, %p156
    %s159 = sadd.s32 %s158, 1
    %p162 = scmp.eq.s32.totalorder %s19, 1
    %p163 = scmp.ne.s32.totalorder %s158, %s160
    %p164 = scmp.eq.s32.totalorder %s19, 0
    %p165 = por %p163, %p164
    %p166 = scmp.ne.s32.totalorder %s158, %s160
    %p167 = scmp.eq.s32.totalorder %s24, 1
    %p168 = por %p166, %p167
    %p169 = scmp.ne.s32.totalorder %s160, %s161
    %p170 = scmp.eq.s32.totalorder %s24, 0
    %p171 = por %p169, %p170
    %p172 = scmp.ne.s32.totalorder %s160, %s161
    %p173 = scmp.eq.s32.totalorder %s25, 1
    %p174 = por %p172, %p173
    %p176 = scmp.ne.s32.totalorder %s161, %s175
    %p177 = scmp.eq.s32.totalorder %s25, 0
    %p178 = por %p176, %p177
    %s180 = sadd.s32 %s179, 1
    %p183 = scmp.eq.s32.totalorder %s19, 1
    %p184 = scmp.ne.s32.totalorder %s179, %s181
    %p185 = scmp.eq.s32.totalorder %s19, 0
    %p186 = por %p184, %p185
    %p187 = scmp.ne.s32.totalorder %s179, %s181
    %p188 = scmp.eq.s32.totalorder %s24, 1
    %p189 = por %p187, %p188
    %p190 = scmp.ne.s32.totalorder %s181, %s182
    %p191 = scmp.eq.s32.totalorder %s24, 0
    %p192 = por %p190, %p191
    %p193 = scmp.ne.s32.totalorder %s181, %s182
    %p194 = scmp.eq.s32.totalorder %s25, 1
    %p195 = por %p193, %p194
    %p197 = scmp.ne.s32.totalorder %s182, %s196
    %p198 = scmp.eq.s32.totalorder %s25, 0
    %p199 = por %p197, %p198
    %s201 = sadd.s32 %s200, 1
    %p204 = scmp.eq.s32.totalorder %s19, 1
    %p205 = scmp.ne.s32.totalorder %s200, %s202
    %p206 = scmp.eq.s32.totalorder %s19, 0
    %p207 = por %p205, %p206
    %p208 = scmp.ne.s32.totalorder %s200, %s202
    %p209 = scmp.eq.s32.totalorder %s24, 1
    %p210 = por %p208, %p209
    %p211 = scmp.ne.s32.totalorder %s202, %s203
    %p212 = scmp.eq.s32.totalorder %s24, 0
    %p213 = por %p211, %p212
    %p214 = scmp.ne.s32.totalorder %s202, %s203
    %p215 = scmp.eq.s32.totalorder %s25, 1
    %p216 = por %p214, %p215
    %p218 = scmp.ne.s32.totalorder %s203, %s217
    %p219 = scmp.eq.s32.totalorder %s25, 0
    %p220 = por %p218, %p219
    %s222 = sadd.s32 %s221, 1
    %p225 = scmp.eq.s32.totalorder %s19, 1
    %p226 = scmp.ne.s32.totalorder %s221, %s223
    %p227 = scmp.eq.s32.totalorder %s19, 0
    %p228 = por %p226, %p227
    %p229 = scmp.ne.s32.totalorder %s221, %s223
    %p230 = scmp.eq.s32.totalorder %s24, 1
    %p231 = por %p229, %p230
    %p232 = scmp.ne.s32.totalorder %s223, %s224
    %p233 = scmp.eq.s32.totalorder %s24, 0
    %p234 = por %p232, %p233
    %p235 = scmp.ne.s32.totalorder %s223, %s224
    %p236 = scmp.eq.s32.totalorder %s25, 1
    %p237 = por %p235, %p236
    %p239 = scmp.ne.s32.totalorder %s224, %s238
    %p240 = scmp.eq.s32.totalorder %s25, 0
    %p241 = por %p239, %p240
    %s243 = sadd.s32 %s242, 1
    %p246 = scmp.eq.s32.totalorder %s19, 1
    %p247 = scmp.ne.s32.totalorder %s242, %s244
    %p248 = scmp.eq.s32.totalorder %s19, 0
    %p249 = por %p247, %p248
    %p250 = scmp.ne.s32.totalorder %s242, %s244
    %p251 = scmp.eq.s32.totalorder %s24, 1
    %p252 = por %p250, %p251
    %p253 = scmp.ne.s32.totalorder %s244, %s245
    %p254 = scmp.eq.s32.totalorder %s24, 0
    %p255 = por %p253, %p254
    %p256 = scmp.ne.s32.totalorder %s244, %s245
    %p257 = scmp.eq.s32.totalorder %s25, 1
    %p258 = por %p256, %p257
    %p260 = scmp.ne.s32.totalorder %s245, %s259
    %p261 = scmp.eq.s32.totalorder %s25, 0
    %p262 = por %p260, %p261
    %s264 = sadd.s32 %s263, 1
    %p267 = scmp.eq.s32.totalorder %s19, 1
    %p268 = scmp.ne.s32.totalorder %s263, %s265
    %p269 = scmp.eq.s32.totalorder %s19, 0
    %p270 = por %p268, %p269
    %p271 = scmp.ne.s32.totalorder %s263, %s265
    %p272 = scmp.eq.s32.totalorder %s24, 1
    %p273 = por %p271, %p272
    %p274 = scmp.ne.s32.totalorder %s265, %s266
    %p275 = scmp.eq.s32.totalorder %s24, 0
    %p276 = por %p274, %p275
    %p277 = scmp.ne.s32.totalorder %s265, %s266
    %p278 = scmp.eq.s32.totalorder %s25, 1
    %p279 = por %p277, %p278
    %p281 = scmp.ne.s32.totalorder %s266, %s280
    %p282 = scmp.eq.s32.totalorder %s25, 0
    %p283 = por %p281, %p282
    %s285 = sadd.s32 %s284, 1
    %p288 = scmp.eq.s32.totalorder %s19, 1
    %p289 = scmp.ne.s32.totalorder %s284, %s286
    %p290 = scmp.eq.s32.totalorder %s19, 0
    %p291 = por %p289, %p290
    %p292 = scmp.ne.s32.totalorder %s284, %s286
    %p293 = scmp.eq.s32.totalorder %s24, 1
    %p294 = por %p292, %p293
    %p295 = scmp.ne.s32.totalorder %s286, %s287
    %p296 = scmp.eq.s32.totalorder %s24, 0
    %p297 = por %p295, %p296
    %p298 = scmp.ne.s32.totalorder %s286, %s287
    %p299 = scmp.eq.s32.totalorder %s25, 1
    %p300 = por %p298, %p299
    %p302 = scmp.ne.s32.totalorder %s287, %s301
    %p303 = scmp.eq.s32.totalorder %s25, 0
    %p304 = por %p302, %p303
    %s305 = ssub.s32 %s19, %s26
    %p306 = scmp.eq.s32.totalorder %s305, 0
    %s308 = sadd.s32 %s307, 1
    %s309 = scalar_select %p306, %s307, %s308
    %p312 = pneg %p306
    %p313 = scmp.eq.s32.totalorder %s19, 1
    %p314 = por %p312, %p313
    %p315 = scmp.ne.s32.totalorder %s307, %s310
    %p316 = scmp.eq.s32.totalorder %s19, 0
    %p317 = por %p315, %p316
    %p318 = scmp.ne.s32.totalorder %s307, %s310
    %p319 = scmp.eq.s32.totalorder %s24, 1
    %p320 = por %p318, %p319
    %p321 = scmp.ne.s32.totalorder %s310, %s311
    %p322 = scmp.eq.s32.totalorder %s24, 0
    %p323 = por %p321, %p322
    %p324 = scmp.ne.s32.totalorder %s310, %s311
    %p325 = scmp.eq.s32.totalorder %s25, 1
    %p326 = por %p324, %p325
    %p328 = scmp.ne.s32.totalorder %s311, %s327
    %p329 = scmp.eq.s32.totalorder %s25, 0
    %p330 = por %p328, %p329
    %p331 = scmp.le.s32.totalorder 1, %s19
    %p332 = scmp.lt.s32.totalorder %s19, 3
    %p333 = pnand %p331, %p332
    %p334 = pneg %p333
    // Predicated region
    $region9: #{generalized_semseg_forward.1} parent=5 // pred_check
      _
    $region10: #{generalized_semseg_forward.1} parent=5 // pred_check_branch
      %336 = sbr.rel (%p333) target = $region12
    $region11: #{generalized_semseg_forward.1} parent=5 // pred_region
      %s337 = ssub.s32 %s19, 1
      // Predicated region
      $region13: #{generalized_semseg_forward.1} parent=11 // pred_check
        %p338 = pneg %p66
      $region14: #{generalized_semseg_forward.1} parent=11 // pred_check_branch
        %340 = sbr.rel (%p338) target = $region16
      $region15: #{generalized_semseg_forward.1} parent=11 // pred_region
        _
      $region16: #{generalized_semseg_forward.1} parent=11 // pred_fallthru
        _
      // Predicated region
      $region17: #{generalized_semseg_forward.1} parent=11 // pred_check
        %p341 = pneg %p87
      $region18: #{generalized_semseg_forward.1} parent=11 // pred_check_branch
        %343 = sbr.rel (%p341) target = $region20
      $region19: #{generalized_semseg_forward.1} parent=11 // pred_region
        _
      $region20: #{generalized_semseg_forward.1} parent=11 // pred_fallthru
        _
      // Predicated region
      $region21: #{generalized_semseg_forward.1} parent=11 // pred_check
        %p344 = pneg %p108
      $region22: #{generalized_semseg_forward.1} parent=11 // pred_check_branch
        %346 = sbr.rel (%p344) target = $region24
      $region23: #{generalized_semseg_forward.1} parent=11 // pred_region
        _
      $region24: #{generalized_semseg_forward.1} parent=11 // pred_fallthru
        _
      // Predicated region
      $region25: #{generalized_semseg_forward.1} parent=11 // pred_check
        %p347 = pneg %p129
      $region26: #{generalized_semseg_forward.1} parent=11 // pred_check_branch
        %349 = sbr.rel (%p347) target = $region28
      $region27: #{generalized_semseg_forward.1} parent=11 // pred_region
        _
      $region28: #{generalized_semseg_forward.1} parent=11 // pred_fallthru
        _
      // Predicated region
      $region29: #{generalized_semseg_forward.1} parent=11 // pred_check
        %p350 = pneg %p150
      $region30: #{generalized_semseg_forward.1} parent=11 // pred_check_branch
        %352 = sbr.rel (%p350) target = $region32
      $region31: #{generalized_semseg_forward.1} parent=11 // pred_region
        _
      $region32: #{generalized_semseg_forward.1} parent=11 // pred_fallthru
        _
      // Predicated region
      $region33: #{generalized_semseg_forward.1} parent=11 // pred_check
        %p353 = pneg %p171
      $region34: #{generalized_semseg_forward.1} parent=11 // pred_check_branch
        %355 = sbr.rel (%p353) target = $region36
      $region35: #{generalized_semseg_forward.1} parent=11 // pred_region
        _
      $region36: #{generalized_semseg_forward.1} parent=11 // pred_fallthru
        _
      // Predicated region
      $region37: #{generalized_semseg_forward.1} parent=11 // pred_check
        %p356 = pneg %p192
      $region38: #{generalized_semseg_forward.1} parent=11 // pred_check_branch
        %358 = sbr.rel (%p356) target = $region40
      $region39: #{generalized_semseg_forward.1} parent=11 // pred_region
        _
      $region40: #{generalized_semseg_forward.1} parent=11 // pred_fallthru
        _
      // Predicated region
      $region41: #{generalized_semseg_forward.1} parent=11 // pred_check
        %p359 = pneg %p213
      $region42: #{generalized_semseg_forward.1} parent=11 // pred_check_branch
        %361 = sbr.rel (%p359) target = $region44
      $region43: #{generalized_semseg_forward.1} parent=11 // pred_region
        _
      $region44: #{generalized_semseg_forward.1} parent=11 // pred_fallthru
        _
      // Predicated region
      $region45: #{generalized_semseg_forward.1} parent=11 // pred_check
        %p362 = pneg %p234
      $region46: #{generalized_semseg_forward.1} parent=11 // pred_check_branch
        %364 = sbr.rel (%p362) target = $region48
      $region47: #{generalized_semseg_forward.1} parent=11 // pred_region
        _
      $region48: #{generalized_semseg_forward.1} parent=11 // pred_fallthru
        _
      // Predicated region
      $region49: #{generalized_semseg_forward.1} parent=11 // pred_check
        %p365 = pneg %p255
      $region50: #{generalized_semseg_forward.1} parent=11 // pred_check_branch
        %367 = sbr.rel (%p365) target = $region52
      $region51: #{generalized_semseg_forward.1} parent=11 // pred_region
        _
      $region52: #{generalized_semseg_forward.1} parent=11 // pred_fallthru
        _
      // Predicated region
      $region53: #{generalized_semseg_forward.1} parent=11 // pred_check
        %p368 = pneg %p276
      $region54: #{generalized_semseg_forward.1} parent=11 // pred_check_branch
        %370 = sbr.rel (%p368) target = $region56
      $region55: #{generalized_semseg_forward.1} parent=11 // pred_region
        _
      $region56: #{generalized_semseg_forward.1} parent=11 // pred_fallthru
        _
      // Predicated region
      $region57: #{generalized_semseg_forward.1} parent=11 // pred_check
        %p371 = pneg %p297
      $region58: #{generalized_semseg_forward.1} parent=11 // pred_check_branch
        %373 = sbr.rel (%p371) target = $region60
      $region59: #{generalized_semseg_forward.1} parent=11 // pred_region
        _
      $region60: #{generalized_semseg_forward.1} parent=11 // pred_fallthru
        _
    $region12: #{generalized_semseg_forward.1} parent=5 // pred_fallthru
      _
    %p374 = scmp.lt.s32.totalorder %s19, 2
    // Predicated region
    $region61: #{generalized_semseg_forward.1} parent=5 // pred_check
      %p375 = pneg %p374
    $region62: #{generalized_semseg_forward.1} parent=5 // pred_check_branch
      %377 = sbr.rel (%p375) target = $region64
    $region63: #{generalized_semseg_forward.1} parent=5 // pred_region
      // Predicated region
      $region65: #{generalized_semseg_forward.1} parent=63 // pred_check
        %p378 = pneg %p39
      $region66: #{generalized_semseg_forward.1} parent=63 // pred_check_branch
        %380 = sbr.rel (%p378) target = $region68
      $region67: #{generalized_semseg_forward.1} parent=63 // pred_region
        %p381 = scmp.lt.s32.totalorder %s19, 1
        %s382 = scalar_select %p381, %s19, 1
        %s383 = smul.addr %s382, 8
        %s384 = smul.addr %s383, 4
        %s385 = scalar_lea.vmem %s0, %s384
      $region68: #{generalized_semseg_forward.1} parent=63 // pred_fallthru
        _
    $region64: #{generalized_semseg_forward.1} parent=5 // pred_fallthru
      _
    %p386 = scmp.le.s32.totalorder 1, %s19
    %p387 = scmp.lt.s32.totalorder %s19, 3
    %p388 = pnand %p386, %p387
    %p389 = pneg %p388
    // Predicated region
    $region69: #{generalized_semseg_forward.1} parent=5 // pred_check
      _
    $region70: #{generalized_semseg_forward.1} parent=5 // pred_check_branch
      %391 = sbr.rel (%p388) target = $region72
    $region71: #{generalized_semseg_forward.1} parent=5 // pred_region
      %s392 = ssub.s32 %s19, 1
      %p393 = scmp.lt.s32.totalorder %s24, 1
      %s394 = scalar_select %p393, %s24, 1
      %s395 = smul.addr %s394, 8
      %s396 = smul.addr %s395, 4
      %s397 = scalar_lea.vmem %s0, %s396
      %p398 = pneg %p45
      %p399 = pneg %p42
      %p400 = pneg %p66
      %p401 = pneg %p63
      %p402 = pneg %p87
      %p403 = pneg %p84
      %p404 = pneg %p108
      %p405 = pneg %p105
      %p406 = pneg %p129
      %p407 = pneg %p126
      %p408 = pneg %p150
      %p409 = pneg %p147
      %p410 = pneg %p171
      %p411 = pneg %p168
      %p412 = pneg %p192
      %p413 = pneg %p189
      %p414 = pneg %p213
      %p415 = pneg %p210
      %p416 = pneg %p234
      %p417 = pneg %p231
      %p418 = pneg %p255
      %p419 = pneg %p252
      %p420 = pneg %p276
      %p421 = pneg %p273
      %p422 = pneg %p297
      %p423 = pneg %p294
      %p424 = pneg %p323
      %p425 = pneg %p320
      %p426 = scmp.lt.s32.totalorder %s24, 1
      %s427 = scalar_select %p426, %s24, 1
      %s428 = smul.addr %s427, 4
      %s429 = smul.addr %s428, 8
      %s430 = scalar_lea.vmem %s13, %s429
      %p431 = scmp.lt.s32.totalorder %s24, 1
      %s432 = scalar_select %p431, %s24, 1
      %s433 = smul.addr %s432, 8
      %s434 = smul.addr %s433, 4
      %s435 = scalar_lea.vmem %s0, %s434
      %p436 = scmp.lt.s32.totalorder %s24, 1
      %s437 = scalar_select %p436, %s24, 1
      %s438 = smul.addr %s437, 4
      %s439 = smul.addr %s438, 8
      %s440 = scalar_lea.vmem %s13, %s439
      %v442 = vld [vmem:[%s435] sm:$0xff]
      %v443 = vld [vmem:[%s435 + $0x8] sm:$0xff]
      %v444 = vld [vmem:[%s435 + $0x10] sm:$0xff]
      %v445 = vld [vmem:[%s435 + $0x18] sm:$0xff]
      %v446 = vld [vmem:[%s1] ss:$8 sm:$0xf]
      %v448 = vlaneseq
      %v449 = vshrl.u32 %v448, 7
      %v450 = vsub.s32 0, %v449
      %v451 = vrot.slane %v446, %v450
      %v452 = vlaneseq
      %v453 = vshrl.u32 %v452, 7
      %v454 = vsub.s32 1, %v453
      %v455 = vrot.slane %v446, %v454
      %v456 = vlaneseq
      %v457 = vshrl.u32 %v456, 7
      %v458 = vsub.s32 2, %v457
      %v459 = vrot.slane %v446, %v458
      %v460 = vlaneseq
      %v461 = vshrl.u32 %v460, 7
      %v462 = vsub.s32 3, %v461
      %v463 = vrot.slane %v446, %v462
      %v468 = vpack.c.bf16 %v451, %v451
      %v469 = vpack.c.bf16 %v455, %v455
      %v470 = vpack.c.bf16 %v459, %v459
      %v471 = vpack.c.bf16 %v463, %v463
      %v476 = vunpack.c.l.b16 %v442
      %v477 = vunpack.c.h.b16 %v442
      %v478 = vunpack.c.l.b16 %v443
      %v479 = vunpack.c.h.b16 %v443
      %v480 = vunpack.c.l.b16 %v444
      %v481 = vunpack.c.h.b16 %v444
      %v482 = vunpack.c.l.b16 %v445
      %v483 = vunpack.c.h.b16 %v445
      %v484 = vpack.c.b16 %v480, %v476
      %v485 = vpack.c.b16 %v481, %v477
      %v486 = vpack.c.b16 %v482, %v478
      %v487 = vpack.c.b16 %v483, %v479
      %488 = vrot.lane.b32.xlu0 %v484, 17
      %v489 = vpop.permute.xlu0 %488
      %490 = vrot.lane.b32.xlu0 %v485, 17
      %v491 = vpop.permute.xlu0 %490
      %492 = vrot.lane.b32.xlu0 %v486, 17
      %v493 = vpop.permute.xlu0 %492
      %494 = vrot.lane.b32.xlu0 %v487, 17
      %v495 = vpop.permute.xlu0 %494
      %vm496 = vcmask 138240
      %v497 = vsel %vm496, %v489, %v491
      %v498 = vsel %vm496, %v491, %v493
      %v499 = vsel %vm496, %v493, %v495
      %vm503 = vcmask 138240
      %v506 = vsel %vm503, 0, %v489
      %v509 = vpack.i.b16 %v468, %v468
      %v511 = vlaneseq
      %v512 = vshrl.u32 %v511, 7
      %v513 = vsub.s32 0, %v512
      %v514 = vrot.slane %v509, %v513
      %v516 = vpack.i.b16 %v469, %v469
      %v518 = vlaneseq
      %v519 = vshrl.u32 %v518, 7
      %v520 = vsub.s32 0, %v519
      %v521 = vrot.slane %v516, %v520
      %v523 = vpack.i.b16 %v470, %v470
      %v525 = vlaneseq
      %v526 = vshrl.u32 %v525, 7
      %v527 = vsub.s32 0, %v526
      %v528 = vrot.slane %v523, %v527
      %v530 = vpack.i.b16 %v471, %v471
      %v532 = vlaneseq
      %v533 = vshrl.u32 %v532, 7
      %v534 = vsub.s32 0, %v533
      %v535 = vrot.slane %v530, %v534
      %v536 = vmul.bf16 %v506, %v514
      %v537 = vmul.bf16 %v497, %v521
      %v538 = vmul.bf16 %v498, %v528
      %v539 = vmul.bf16 %v499, %v535
      %v544 = vunpack.c.l.b16 %v536
      %v545 = vunpack.c.l.b16 %v537
      %v546 = vunpack.c.l.b16 %v538
      %v547 = vunpack.c.l.b16 %v539
      %v548 = vunpack.c.h.b16 %v536
      %v549 = vunpack.c.h.b16 %v537
      %v550 = vunpack.c.h.b16 %v538
      %v551 = vunpack.c.h.b16 %v539
      %v552 = vpack.c.b16 %v545, %v544
      %v553 = vpack.c.b16 %v547, %v546
      %v554 = vpack.c.b16 %v549, %v548
      %v555 = vpack.c.b16 %v551, %v550
      %560 = vst [vmem:[#allocation2] sm:$0xff] %v552
      %561 = vst [vmem:[#allocation2 + $0x8] sm:$0xff] %v553
      %562 = vst [vmem:[#allocation2 + $0x10] sm:$0xff] %v554
      %563 = vst [vmem:[#allocation2 + $0x18] sm:$0xff] %v555
      %s564 = scalar_lea.vmem %s1, 1
      %v565 = vld [vmem:[%s564] ss:$8 sm:$0xf]
      %v567 = vlaneseq
      %v568 = vshrl.u32 %v567, 7
      %v569 = vsub.s32 0, %v568
      %v570 = vrot.slane %v565, %v569
      %v571 = vlaneseq
      %v572 = vshrl.u32 %v571, 7
      %v573 = vsub.s32 1, %v572
      %v574 = vrot.slane %v565, %v573
      %v575 = vlaneseq
      %v576 = vshrl.u32 %v575, 7
      %v577 = vsub.s32 2, %v576
      %v578 = vrot.slane %v565, %v577
      %v579 = vlaneseq
      %v580 = vshrl.u32 %v579, 7
      %v581 = vsub.s32 3, %v580
      %v582 = vrot.slane %v565, %v581
      %v587 = vpack.c.bf16 %v570, %v570
      %v588 = vpack.c.bf16 %v574, %v574
      %v589 = vpack.c.bf16 %v578, %v578
      %v590 = vpack.c.bf16 %v582, %v582
      %591 = vrot.lane.b32.xlu0 %v484, 16
      %v592 = vpop.permute.xlu0 %591
      %593 = vrot.lane.b32.xlu0 %v485, 16
      %v594 = vpop.permute.xlu0 %593
      %595 = vrot.lane.b32.xlu0 %v486, 16
      %v596 = vpop.permute.xlu0 %595
      %597 = vrot.lane.b32.xlu0 %v487, 16
      %v598 = vpop.permute.xlu0 %597
      %vm599 = vcmask 130048
      %v600 = vsel %vm599, %v592, %v594
      %v601 = vsel %vm599, %v594, %v596
      %v602 = vsel %vm599, %v596, %v598
      %vm606 = vcmask 130048
      %v608 = vsel %vm606, 0, %v592
      %v611 = vpack.i.b16 %v587, %v587
      %v613 = vlaneseq
      %v614 = vshrl.u32 %v613, 7
      %v615 = vsub.s32 0, %v614
      %v616 = vrot.slane %v611, %v615
      %v618 = vpack.i.b16 %v588, %v588
      %v620 = vlaneseq
      %v621 = vshrl.u32 %v620, 7
      %v622 = vsub.s32 0, %v621
      %v623 = vrot.slane %v618, %v622
      %v625 = vpack.i.b16 %v589, %v589
      %v627 = vlaneseq
      %v628 = vshrl.u32 %v627, 7
      %v629 = vsub.s32 0, %v628
      %v630 = vrot.slane %v625, %v629
      %v632 = vpack.i.b16 %v590, %v590
      %v634 = vlaneseq
      %v635 = vshrl.u32 %v634, 7
      %v636 = vsub.s32 0, %v635
      %v637 = vrot.slane %v632, %v636
      %v638 = vmul.bf16 %v608, %v616
      %v639 = vmul.bf16 %v600, %v623
      %v640 = vmul.bf16 %v601, %v630
      %v641 = vmul.bf16 %v602, %v637
      %v646 = vunpack.c.l.b16 %v638
      %v647 = vunpack.c.l.b16 %v639
      %v648 = vunpack.c.l.b16 %v640
      %v649 = vunpack.c.l.b16 %v641
      %v650 = vunpack.c.h.b16 %v638
      %v651 = vunpack.c.h.b16 %v639
      %v652 = vunpack.c.h.b16 %v640
      %v653 = vunpack.c.h.b16 %v641
      %v654 = vpack.c.b16 %v647, %v646
      %v655 = vpack.c.b16 %v649, %v648
      %v656 = vpack.c.b16 %v651, %v650
      %v657 = vpack.c.b16 %v653, %v652
      %662 = vst [vmem:[#allocation2 + $0x20] sm:$0xff] %v654
      %663 = vst [vmem:[#allocation2 + $0x28] sm:$0xff] %v655
      %664 = vst [vmem:[#allocation2 + $0x30] sm:$0xff] %v656
      %665 = vst [vmem:[#allocation2 + $0x38] sm:$0xff] %v657
      %s666 = scalar_lea.vmem %s1, 2
      %v667 = vld [vmem:[%s666] ss:$8 sm:$0xf]
      %v669 = vlaneseq
      %v670 = vshrl.u32 %v669, 7
      %v671 = vsub.s32 0, %v670
      %v672 = vrot.slane %v667, %v671
      %v673 = vlaneseq
      %v674 = vshrl.u32 %v673, 7
      %v675 = vsub.s32 1, %v674
      %v676 = vrot.slane %v667, %v675
      %v677 = vlaneseq
      %v678 = vshrl.u32 %v677, 7
      %v679 = vsub.s32 2, %v678
      %v680 = vrot.slane %v667, %v679
      %v681 = vlaneseq
      %v682 = vshrl.u32 %v681, 7
      %v683 = vsub.s32 3, %v682
      %v684 = vrot.slane %v667, %v683
      %v689 = vpack.c.bf16 %v672, %v672
      %v690 = vpack.c.bf16 %v676, %v676
      %v691 = vpack.c.bf16 %v680, %v680
      %v692 = vpack.c.bf16 %v684, %v684
      %693 = vrot.lane.b32.xlu0 %v484, 15
      %v694 = vpop.permute.xlu0 %693
      %695 = vrot.lane.b32.xlu0 %v485, 15
      %v696 = vpop.permute.xlu0 %695
      %697 = vrot.lane.b32.xlu0 %v486, 15
      %v698 = vpop.permute.xlu0 %697
      %699 = vrot.lane.b32.xlu0 %v487, 15
      %v700 = vpop.permute.xlu0 %699
      %vm701 = vcmask 121856
      %v702 = vsel %vm701, %v694, %v696
      %v703 = vsel %vm701, %v696, %v698
      %v704 = vsel %vm701, %v698, %v700
      %vm708 = vcmask 121856
      %v710 = vsel %vm708, 0, %v694
      %v713 = vpack.i.b16 %v689, %v689
      %v715 = vlaneseq
      %v716 = vshrl.u32 %v715, 7
      %v717 = vsub.s32 0, %v716
      %v718 = vrot.slane %v713, %v717
      %v720 = vpack.i.b16 %v690, %v690
      %v722 = vlaneseq
      %v723 = vshrl.u32 %v722, 7
      %v724 = vsub.s32 0, %v723
      %v725 = vrot.slane %v720, %v724
      %v727 = vpack.i.b16 %v691, %v691
      %v729 = vlaneseq
      %v730 = vshrl.u32 %v729, 7
      %v731 = vsub.s32 0, %v730
      %v732 = vrot.slane %v727, %v731
      %v734 = vpack.i.b16 %v692, %v692
      %v736 = vlaneseq
      %v737 = vshrl.u32 %v736, 7
      %v738 = vsub.s32 0, %v737
      %v739 = vrot.slane %v734, %v738
      %v740 = vmul.bf16 %v710, %v718
      %v741 = vmul.bf16 %v702, %v725
      %v742 = vmul.bf16 %v703, %v732
      %v743 = vmul.bf16 %v704, %v739
      %v748 = vunpack.c.l.b16 %v740
      %v749 = vunpack.c.l.b16 %v741
      %v750 = vunpack.c.l.b16 %v742
      %v751 = vunpack.c.l.b16 %v743
      %v752 = vunpack.c.h.b16 %v740
      %v753 = vunpack.c.h.b16 %v741
      %v754 = vunpack.c.h.b16 %v742
      %v755 = vunpack.c.h.b16 %v743
      %v756 = vpack.c.b16 %v749, %v748
      %v757 = vpack.c.b16 %v751, %v750
      %v758 = vpack.c.b16 %v753, %v752
      %v759 = vpack.c.b16 %v755, %v754
      %764 = vst [vmem:[#allocation2 + $0x40] sm:$0xff] %v756
      %765 = vst [vmem:[#allocation2 + $0x48] sm:$0xff] %v757
      %766 = vst [vmem:[#allocation2 + $0x50] sm:$0xff] %v758
      %767 = vst [vmem:[#allocation2 + $0x58] sm:$0xff] %v759
      %s768 = scalar_lea.vmem %s1, 3
      %v769 = vld [vmem:[%s768] ss:$8 sm:$0xf]
      %v771 = vlaneseq
      %v772 = vshrl.u32 %v771, 7
      %v773 = vsub.s32 0, %v772
      %v774 = vrot.slane %v769, %v773
      %v775 = vlaneseq
      %v776 = vshrl.u32 %v775, 7
      %v777 = vsub.s32 1, %v776
      %v778 = vrot.slane %v769, %v777
      %v779 = vlaneseq
      %v780 = vshrl.u32 %v779, 7
      %v781 = vsub.s32 2, %v780
      %v782 = vrot.slane %v769, %v781
      %v783 = vlaneseq
      %v784 = vshrl.u32 %v783, 7
      %v785 = vsub.s32 3, %v784
      %v786 = vrot.slane %v769, %v785
      %v791 = vpack.c.bf16 %v774, %v774
      %v792 = vpack.c.bf16 %v778, %v778
      %v793 = vpack.c.bf16 %v782, %v782
      %v794 = vpack.c.bf16 %v786, %v786
      %795 = vrot.lane.b32.xlu0 %v484, 1
      %v796 = vpop.permute.xlu0 %795
      %797 = vrot.lane.b32.xlu0 %v485, 1
      %v798 = vpop.permute.xlu0 %797
      %799 = vrot.lane.b32.xlu0 %v486, 1
      %v800 = vpop.permute.xlu0 %799
      %801 = vrot.lane.b32.xlu0 %v487, 1
      %v802 = vpop.permute.xlu0 %801
      %vm803 = vcmask 7168
      %v804 = vsel %vm803, %v796, %v798
      %v805 = vsel %vm803, %v798, %v800
      %v806 = vsel %vm803, %v800, %v802
      %vm810 = vcmask 7168
      %v812 = vsel %vm810, 0, %v796
      %v815 = vpack.i.b16 %v791, %v791
      %v817 = vlaneseq
      %v818 = vshrl.u32 %v817, 7
      %v819 = vsub.s32 0, %v818
      %v820 = vrot.slane %v815, %v819
      %v822 = vpack.i.b16 %v792, %v792
      %v824 = vlaneseq
      %v825 = vshrl.u32 %v824, 7
      %v826 = vsub.s32 0, %v825
      %v827 = vrot.slane %v822, %v826
      %v829 = vpack.i.b16 %v793, %v793
      %v831 = vlaneseq
      %v832 = vshrl.u32 %v831, 7
      %v833 = vsub.s32 0, %v832
      %v834 = vrot.slane %v829, %v833
      %v836 = vpack.i.b16 %v794, %v794
      %v838 = vlaneseq
      %v839 = vshrl.u32 %v838, 7
      %v840 = vsub.s32 0, %v839
      %v841 = vrot.slane %v836, %v840
      %v842 = vmul.bf16 %v812, %v820
      %v843 = vmul.bf16 %v804, %v827
      %v844 = vmul.bf16 %v805, %v834
      %v845 = vmul.bf16 %v806, %v841
      %v850 = vunpack.c.l.b16 %v842
      %v851 = vunpack.c.l.b16 %v843
      %v852 = vunpack.c.l.b16 %v844
      %v853 = vunpack.c.l.b16 %v845
      %v854 = vunpack.c.h.b16 %v842
      %v855 = vunpack.c.h.b16 %v843
      %v856 = vunpack.c.h.b16 %v844
      %v857 = vunpack.c.h.b16 %v845
      %v858 = vpack.c.b16 %v851, %v850
      %v859 = vpack.c.b16 %v853, %v852
      %v860 = vpack.c.b16 %v855, %v854
      %v861 = vpack.c.b16 %v857, %v856
      %866 = vst [vmem:[#allocation2 + $0x60] sm:$0xff] %v858
      %867 = vst [vmem:[#allocation2 + $0x68] sm:$0xff] %v859
      %868 = vst [vmem:[#allocation2 + $0x70] sm:$0xff] %v860
      %869 = vst [vmem:[#allocation2 + $0x78] sm:$0xff] %v861
      %s870 = scalar_lea.vmem %s1, 4
      %v871 = vld [vmem:[%s870] ss:$8 sm:$0xf]
      %v873 = vlaneseq
      %v874 = vshrl.u32 %v873, 7
      %v875 = vsub.s32 0, %v874
      %v876 = vrot.slane %v871, %v875
      %v877 = vlaneseq
      %v878 = vshrl.u32 %v877, 7
      %v879 = vsub.s32 1, %v878
      %v880 = vrot.slane %v871, %v879
      %v881 = vlaneseq
      %v882 = vshrl.u32 %v881, 7
      %v883 = vsub.s32 2, %v882
      %v884 = vrot.slane %v871, %v883
      %v885 = vlaneseq
      %v886 = vshrl.u32 %v885, 7
      %v887 = vsub.s32 3, %v886
      %v888 = vrot.slane %v871, %v887
      %v893 = vpack.c.bf16 %v876, %v876
      %v894 = vpack.c.bf16 %v880, %v880
      %v895 = vpack.c.bf16 %v884, %v884
      %v896 = vpack.c.bf16 %v888, %v888
      %v898 = vpack.i.b16 %v893, %v893
      %v900 = vlaneseq
      %v901 = vshrl.u32 %v900, 7
      %v902 = vsub.s32 0, %v901
      %v903 = vrot.slane %v898, %v902
      %v905 = vpack.i.b16 %v894, %v894
      %v907 = vlaneseq
      %v908 = vshrl.u32 %v907, 7
      %v909 = vsub.s32 0, %v908
      %v910 = vrot.slane %v905, %v909
      %v912 = vpack.i.b16 %v895, %v895
      %v914 = vlaneseq
      %v915 = vshrl.u32 %v914, 7
      %v916 = vsub.s32 0, %v915
      %v917 = vrot.slane %v912, %v916
      %v919 = vpack.i.b16 %v896, %v896
      %v921 = vlaneseq
      %v922 = vshrl.u32 %v921, 7
      %v923 = vsub.s32 0, %v922
      %v924 = vrot.slane %v919, %v923
      %v929 = vunpack.c.l.b16 %v903
      %v930 = vunpack.c.l.b16 %v910
      %v931 = vunpack.c.l.b16 %v917
      %v932 = vunpack.c.l.b16 %v924
      %v933 = vpack.c.b16 %v930, %v929
      %v934 = vpack.c.b16 %v932, %v931
      %v937 = vmul.bf16 %v442, %v933
      %v938 = vmul.bf16 %v443, %v934
      %v939 = vmul.bf16 %v444, %v933
      %v940 = vmul.bf16 %v445, %v934
      %941 = vst [vmem:[#allocation2 + $0x80] sm:$0xff] %v937
      %942 = vst [vmem:[#allocation2 + $0x88] sm:$0xff] %v938
      %943 = vst [vmem:[#allocation2 + $0x90] sm:$0xff] %v939
      %944 = vst [vmem:[#allocation2 + $0x98] sm:$0xff] %v940
      %s945 = scalar_lea.vmem %s1, 5
      %v946 = vld [vmem:[%s945] ss:$8 sm:$0xf]
      %v948 = vlaneseq
      %v949 = vshrl.u32 %v948, 7
      %v950 = vsub.s32 0, %v949
      %v951 = vrot.slane %v946, %v950
      %v952 = vlaneseq
      %v953 = vshrl.u32 %v952, 7
      %v954 = vsub.s32 1, %v953
      %v955 = vrot.slane %v946, %v954
      %v956 = vlaneseq
      %v957 = vshrl.u32 %v956, 7
      %v958 = vsub.s32 2, %v957
      %v959 = vrot.slane %v946, %v958
      %v960 = vlaneseq
      %v961 = vshrl.u32 %v960, 7
      %v962 = vsub.s32 3, %v961
      %v963 = vrot.slane %v946, %v962
      %v968 = vpack.c.bf16 %v951, %v951
      %v969 = vpack.c.bf16 %v955, %v955
      %v970 = vpack.c.bf16 %v959, %v959
      %v971 = vpack.c.bf16 %v963, %v963
      %972 = vrot.lane.b32.xlu0 %v484, 127
      %v973 = vpop.permute.xlu0 %972
      %974 = vrot.lane.b32.xlu0 %v485, 127
      %v975 = vpop.permute.xlu0 %974
      %976 = vrot.lane.b32.xlu0 %v486, 127
      %v977 = vpop.permute.xlu0 %976
      %978 = vrot.lane.b32.xlu0 %v487, 127
      %v979 = vpop.permute.xlu0 %978
      %vm980 = vcmask 1039360
      %v981 = vsel %vm980, %v973, %v975
      %v982 = vsel %vm980, %v975, %v977
      %v983 = vsel %vm980, %v977, %v979
      %vm987 = vcmask 1039360
      %v989 = vsel %vm987, %v979, 0
      %v992 = vpack.i.b16 %v968, %v968
      %v994 = vlaneseq
      %v995 = vshrl.u32 %v994, 7
      %v996 = vsub.s32 0, %v995
      %v997 = vrot.slane %v992, %v996
      %v999 = vpack.i.b16 %v969, %v969
      %v1001 = vlaneseq
      %v1002 = vshrl.u32 %v1001, 7
      %v1003 = vsub.s32 0, %v1002
      %v1004 = vrot.slane %v999, %v1003
      %v1006 = vpack.i.b16 %v970, %v970
      %v1008 = vlaneseq
      %v1009 = vshrl.u32 %v1008, 7
      %v1010 = vsub.s32 0, %v1009
      %v1011 = vrot.slane %v1006, %v1010
      %v1013 = vpack.i.b16 %v971, %v971
      %v1015 = vlaneseq
      %v1016 = vshrl.u32 %v1015, 7
      %v1017 = vsub.s32 0, %v1016
      %v1018 = vrot.slane %v1013, %v1017
      %v1019 = vmul.bf16 %v981, %v997
      %v1020 = vmul.bf16 %v982, %v1004
      %v1021 = vmul.bf16 %v983, %v1011
      %v1022 = vmul.bf16 %v989, %v1018
      %v1027 = vunpack.c.l.b16 %v1019
      %v1028 = vunpack.c.l.b16 %v1020
      %v1029 = vunpack.c.l.b16 %v1021
      %v1030 = vunpack.c.l.b16 %v1022
      %v1031 = vunpack.c.h.b16 %v1019
      %v1032 = vunpack.c.h.b16 %v1020
      %v1033 = vunpack.c.h.b16 %v1021
      %v1034 = vunpack.c.h.b16 %v1022
      %v1035 = vpack.c.b16 %v1028, %v1027
      %v1036 = vpack.c.b16 %v1030, %v1029
      %v1037 = vpack.c.b16 %v1032, %v1031
      %v1038 = vpack.c.b16 %v1034, %v1033
      %1043 = vst [vmem:[#allocation2 + $0xa0] sm:$0xff] %v1035
      %1044 = vst [vmem:[#allocation2 + $0xa8] sm:$0xff] %v1036
      %1045 = vst [vmem:[#allocation2 + $0xb0] sm:$0xff] %v1037
      %1046 = vst [vmem:[#allocation2 + $0xb8] sm:$0xff] %v1038
      %s1047 = scalar_lea.vmem %s1, 6
      %v1048 = vld [vmem:[%s1047] ss:$8 sm:$0xf]
      %v1050 = vlaneseq
      %v1051 = vshrl.u32 %v1050, 7
      %v1052 = vsub.s32 0, %v1051
      %v1053 = vrot.slane %v1048, %v1052
      %v1054 = vlaneseq
      %v1055 = vshrl.u32 %v1054, 7
      %v1056 = vsub.s32 1, %v1055
      %v1057 = vrot.slane %v1048, %v1056
      %v1058 = vlaneseq
      %v1059 = vshrl.u32 %v1058, 7
      %v1060 = vsub.s32 2, %v1059
      %v1061 = vrot.slane %v1048, %v1060
      %v1062 = vlaneseq
      %v1063 = vshrl.u32 %v1062, 7
      %v1064 = vsub.s32 3, %v1063
      %v1065 = vrot.slane %v1048, %v1064
      %v1070 = vpack.c.bf16 %v1053, %v1053
      %v1071 = vpack.c.bf16 %v1057, %v1057
      %v1072 = vpack.c.bf16 %v1061, %v1061
      %v1073 = vpack.c.bf16 %v1065, %v1065
      %1074 = vrot.lane.b32.xlu0 %v484, 113
      %v1075 = vpop.permute.xlu0 %1074
      %1076 = vrot.lane.b32.xlu0 %v485, 113
      %v1077 = vpop.permute.xlu0 %1076
      %1078 = vrot.lane.b32.xlu0 %v486, 113
      %v1079 = vpop.permute.xlu0 %1078
      %1080 = vrot.lane.b32.xlu0 %v487, 113
      %v1081 = vpop.permute.xlu0 %1080
      %vm1082 = vcmask 924672
      %v1083 = vsel %vm1082, %v1075, %v1077
      %v1084 = vsel %vm1082, %v1077, %v1079
      %v1085 = vsel %vm1082, %v1079, %v1081
      %vm1089 = vcmask 924672
      %v1091 = vsel %vm1089, %v1081, 0
      %v1094 = vpack.i.b16 %v1070, %v1070
      %v1096 = vlaneseq
      %v1097 = vshrl.u32 %v1096, 7
      %v1098 = vsub.s32 0, %v1097
      %v1099 = vrot.slane %v1094, %v1098
      %v1101 = vpack.i.b16 %v1071, %v1071
      %v1103 = vlaneseq
      %v1104 = vshrl.u32 %v1103, 7
      %v1105 = vsub.s32 0, %v1104
      %v1106 = vrot.slane %v1101, %v1105
      %v1108 = vpack.i.b16 %v1072, %v1072
      %v1110 = vlaneseq
      %v1111 = vshrl.u32 %v1110, 7
      %v1112 = vsub.s32 0, %v1111
      %v1113 = vrot.slane %v1108, %v1112
      %v1115 = vpack.i.b16 %v1073, %v1073
      %v1117 = vlaneseq
      %v1118 = vshrl.u32 %v1117, 7
      %v1119 = vsub.s32 0, %v1118
      %v1120 = vrot.slane %v1115, %v1119
      %v1121 = vmul.bf16 %v1083, %v1099
      %v1122 = vmul.bf16 %v1084, %v1106
      %v1123 = vmul.bf16 %v1085, %v1113
      %v1124 = vmul.bf16 %v1091, %v1120
      %v1129 = vunpack.c.l.b16 %v1121
      %v1130 = vunpack.c.l.b16 %v1122
      %v1131 = vunpack.c.l.b16 %v1123
      %v1132 = vunpack.c.l.b16 %v1124
      %v1133 = vunpack.c.h.b16 %v1121
      %v1134 = vunpack.c.h.b16 %v1122
      %v1135 = vunpack.c.h.b16 %v1123
      %v1136 = vunpack.c.h.b16 %v1124
      %v1137 = vpack.c.b16 %v1130, %v1129
      %v1138 = vpack.c.b16 %v1132, %v1131
      %v1139 = vpack.c.b16 %v1134, %v1133
      %v1140 = vpack.c.b16 %v1136, %v1135
      %1145 = vst [vmem:[#allocation2 + $0xc0] sm:$0xff] %v1137
      %1146 = vst [vmem:[#allocation2 + $0xc8] sm:$0xff] %v1138
      %1147 = vst [vmem:[#allocation2 + $0xd0] sm:$0xff] %v1139
      %1148 = vst [vmem:[#allocation2 + $0xd8] sm:$0xff] %v1140
      %s1149 = scalar_lea.vmem %s1, 7
      %v1150 = vld [vmem:[%s1149] ss:$8 sm:$0xf]
      %v1152 = vlaneseq
      %v1153 = vshrl.u32 %v1152, 7
      %v1154 = vsub.s32 0, %v1153
      %v1155 = vrot.slane %v1150, %v1154
      %v1156 = vlaneseq
      %v1157 = vshrl.u32 %v1156, 7
      %v1158 = vsub.s32 1, %v1157
      %v1159 = vrot.slane %v1150, %v1158
      %v1160 = vlaneseq
      %v1161 = vshrl.u32 %v1160, 7
      %v1162 = vsub.s32 2, %v1161
      %v1163 = vrot.slane %v1150, %v1162
      %v1164 = vlaneseq
      %v1165 = vshrl.u32 %v1164, 7
      %v1166 = vsub.s32 3, %v1165
      %v1167 = vrot.slane %v1150, %v1166
      %v1172 = vpack.c.bf16 %v1155, %v1155
      %v1173 = vpack.c.bf16 %v1159, %v1159
      %v1174 = vpack.c.bf16 %v1163, %v1163
      %v1175 = vpack.c.bf16 %v1167, %v1167
      %1176 = vrot.lane.b32.xlu0 %v484, 112
      %v1177 = vpop.permute.xlu0 %1176
      %1178 = vrot.lane.b32.xlu0 %v485, 112
      %v1179 = vpop.permute.xlu0 %1178
      %1180 = vrot.lane.b32.xlu0 %v486, 112
      %v1181 = vpop.permute.xlu0 %1180
      %1182 = vrot.lane.b32.xlu0 %v487, 112
      %v1183 = vpop.permute.xlu0 %1182
      %vm1184 = vcmask 916480
      %v1185 = vsel %vm1184, %v1177, %v1179
      %v1186 = vsel %vm1184, %v1179, %v1181
      %v1187 = vsel %vm1184, %v1181, %v1183
      %vm1191 = vcmask 916480
      %v1193 = vsel %vm1191, %v1183, 0
      %v1196 = vpack.i.b16 %v1172, %v1172
      %v1198 = vlaneseq
      %v1199 = vshrl.u32 %v1198, 7
      %v1200 = vsub.s32 0, %v1199
      %v1201 = vrot.slane %v1196, %v1200
      %v1203 = vpack.i.b16 %v1173, %v1173
      %v1205 = vlaneseq
      %v1206 = vshrl.u32 %v1205, 7
      %v1207 = vsub.s32 0, %v1206
      %v1208 = vrot.slane %v1203, %v1207
      %v1210 = vpack.i.b16 %v1174, %v1174
      %v1212 = vlaneseq
      %v1213 = vshrl.u32 %v1212, 7
      %v1214 = vsub.s32 0, %v1213
      %v1215 = vrot.slane %v1210, %v1214
      %v1217 = vpack.i.b16 %v1175, %v1175
      %v1219 = vlaneseq
      %v1220 = vshrl.u32 %v1219, 7
      %v1221 = vsub.s32 0, %v1220
      %v1222 = vrot.slane %v1217, %v1221
      %v1223 = vmul.bf16 %v1185, %v1201
      %v1224 = vmul.bf16 %v1186, %v1208
      %v1225 = vmul.bf16 %v1187, %v1215
      %v1226 = vmul.bf16 %v1193, %v1222
      %v1231 = vunpack.c.l.b16 %v1223
      %v1232 = vunpack.c.l.b16 %v1224
      %v1233 = vunpack.c.l.b16 %v1225
      %v1234 = vunpack.c.l.b16 %v1226
      %v1235 = vunpack.c.h.b16 %v1223
      %v1236 = vunpack.c.h.b16 %v1224
      %v1237 = vunpack.c.h.b16 %v1225
      %v1238 = vunpack.c.h.b16 %v1226
      %v1239 = vpack.c.b16 %v1232, %v1231
      %v1240 = vpack.c.b16 %v1234, %v1233
      %v1241 = vpack.c.b16 %v1236, %v1235
      %v1242 = vpack.c.b16 %v1238, %v1237
      %1247 = vst [vmem:[#allocation2 + $0xe0] sm:$0xff] %v1239
      %1248 = vst [vmem:[#allocation2 + $0xe8] sm:$0xff] %v1240
      %1249 = vst [vmem:[#allocation2 + $0xf0] sm:$0xff] %v1241
      %1250 = vst [vmem:[#allocation2 + $0xf8] sm:$0xff] %v1242
      %s1251 = scalar_lea.vmem %s1, 32
      %v1252 = vld [vmem:[%s1251] ss:$8 sm:$0xf]
      %v1254 = vlaneseq
      %v1255 = vshrl.u32 %v1254, 7
      %v1256 = vsub.s32 0, %v1255
      %v1257 = vrot.slane %v1252, %v1256
      %v1258 = vlaneseq
      %v1259 = vshrl.u32 %v1258, 7
      %v1260 = vsub.s32 1, %v1259
      %v1261 = vrot.slane %v1252, %v1260
      %v1262 = vlaneseq
      %v1263 = vshrl.u32 %v1262, 7
      %v1264 = vsub.s32 2, %v1263
      %v1265 = vrot.slane %v1252, %v1264
      %v1266 = vlaneseq
      %v1267 = vshrl.u32 %v1266, 7
      %v1268 = vsub.s32 3, %v1267
      %v1269 = vrot.slane %v1252, %v1268
      %v1274 = vpack.c.bf16 %v1257, %v1257
      %v1275 = vpack.c.bf16 %v1261, %v1261
      %v1276 = vpack.c.bf16 %v1265, %v1265
      %v1277 = vpack.c.bf16 %v1269, %v1269
      %1278 = vrot.lane.b32.xlu0 %v484, 111
      %v1279 = vpop.permute.xlu0 %1278
      %1280 = vrot.lane.b32.xlu0 %v485, 111
      %v1281 = vpop.permute.xlu0 %1280
      %1282 = vrot.lane.b32.xlu0 %v486, 111
      %v1283 = vpop.permute.xlu0 %1282
      %1284 = vrot.lane.b32.xlu0 %v487, 111
      %v1285 = vpop.permute.xlu0 %1284
      %vm1286 = vcmask 908288
      %v1287 = vsel %vm1286, %v1279, %v1281
      %v1288 = vsel %vm1286, %v1281, %v1283
      %v1289 = vsel %vm1286, %v1283, %v1285
      %vm1293 = vcmask 908288
      %v1295 = vsel %vm1293, %v1285, 0
      %v1298 = vpack.i.b16 %v1274, %v1274
      %v1300 = vlaneseq
      %v1301 = vshrl.u32 %v1300, 7
      %v1302 = vsub.s32 0, %v1301
      %v1303 = vrot.slane %v1298, %v1302
      %v1305 = vpack.i.b16 %v1275, %v1275
      %v1307 = vlaneseq
      %v1308 = vshrl.u32 %v1307, 7
      %v1309 = vsub.s32 0, %v1308
      %v1310 = vrot.slane %v1305, %v1309
      %v1312 = vpack.i.b16 %v1276, %v1276
      %v1314 = vlaneseq
      %v1315 = vshrl.u32 %v1314, 7
      %v1316 = vsub.s32 0, %v1315
      %v1317 = vrot.slane %v1312, %v1316
      %v1319 = vpack.i.b16 %v1277, %v1277
      %v1321 = vlaneseq
      %v1322 = vshrl.u32 %v1321, 7
      %v1323 = vsub.s32 0, %v1322
      %v1324 = vrot.slane %v1319, %v1323
      %v1325 = vmul.bf16 %v1287, %v1303
      %v1326 = vmul.bf16 %v1288, %v1310
      %v1327 = vmul.bf16 %v1289, %v1317
      %v1328 = vmul.bf16 %v1295, %v1324
      %v1333 = vunpack.c.l.b16 %v1325
      %v1334 = vunpack.c.l.b16 %v1326
      %v1335 = vunpack.c.l.b16 %v1327
      %v1336 = vunpack.c.l.b16 %v1328
      %v1337 = vunpack.c.h.b16 %v1325
      %v1338 = vunpack.c.h.b16 %v1326
      %v1339 = vunpack.c.h.b16 %v1327
      %v1340 = vunpack.c.h.b16 %v1328
      %v1341 = vpack.c.b16 %v1334, %v1333
      %v1342 = vpack.c.b16 %v1336, %v1335
      %v1343 = vpack.c.b16 %v1338, %v1337
      %v1344 = vpack.c.b16 %v1340, %v1339
      %1349 = vst [vmem:[#allocation2 + $0x100] sm:$0xff] %v1341
      %1350 = vst [vmem:[#allocation2 + $0x108] sm:$0xff] %v1342
      %1351 = vst [vmem:[#allocation2 + $0x110] sm:$0xff] %v1343
      %1352 = vst [vmem:[#allocation2 + $0x118] sm:$0xff] %v1344
      %v1353 = vld [vmem:[#allocation2] sm:$0xff]
      %v1354 = vld [vmem:[#allocation2 + $0x8] sm:$0xff]
      %v1355 = vld [vmem:[#allocation2 + $0x10] sm:$0xff]
      %v1356 = vld [vmem:[#allocation2 + $0x18] sm:$0xff]
      %v1357 = vld [vmem:[#allocation2 + $0x20] sm:$0xff]
      %v1358 = vld [vmem:[#allocation2 + $0x28] sm:$0xff]
      %v1359 = vld [vmem:[#allocation2 + $0x30] sm:$0xff]
      %v1360 = vld [vmem:[#allocation2 + $0x38] sm:$0xff]
      %v1361 = vld [vmem:[#allocation2 + $0x40] sm:$0xff]
      %v1362 = vld [vmem:[#allocation2 + $0x48] sm:$0xff]
      %v1363 = vld [vmem:[#allocation2 + $0x50] sm:$0xff]
      %v1364 = vld [vmem:[#allocation2 + $0x58] sm:$0xff]
      %v1365 = vld [vmem:[#allocation2 + $0x60] sm:$0xff]
      %v1366 = vld [vmem:[#allocation2 + $0x68] sm:$0xff]
      %v1367 = vld [vmem:[#allocation2 + $0x70] sm:$0xff]
      %v1368 = vld [vmem:[#allocation2 + $0x78] sm:$0xff]
      %v1369 = vld [vmem:[#allocation2 + $0x80] sm:$0xff]
      %v1370 = vld [vmem:[#allocation2 + $0x88] sm:$0xff]
      %v1371 = vld [vmem:[#allocation2 + $0x90] sm:$0xff]
      %v1372 = vld [vmem:[#allocation2 + $0x98] sm:$0xff]
      %v1373 = vld [vmem:[#allocation2 + $0xa0] sm:$0xff]
      %v1374 = vld [vmem:[#allocation2 + $0xa8] sm:$0xff]
      %v1375 = vld [vmem:[#allocation2 + $0xb0] sm:$0xff]
      %v1376 = vld [vmem:[#allocation2 + $0xb8] sm:$0xff]
      %v1377 = vld [vmem:[#allocation2 + $0xc0] sm:$0xff]
      %v1378 = vld [vmem:[#allocation2 + $0xc8] sm:$0xff]
      %v1379 = vld [vmem:[#allocation2 + $0xd0] sm:$0xff]
      %v1380 = vld [vmem:[#allocation2 + $0xd8] sm:$0xff]
      %v1381 = vld [vmem:[#allocation2 + $0xe0] sm:$0xff]
      %v1382 = vld [vmem:[#allocation2 + $0xe8] sm:$0xff]
      %v1383 = vld [vmem:[#allocation2 + $0xf0] sm:$0xff]
      %v1384 = vld [vmem:[#allocation2 + $0xf8] sm:$0xff]
      %v1385 = vld [vmem:[#allocation2 + $0x100] sm:$0xff]
      %v1386 = vld [vmem:[#allocation2 + $0x108] sm:$0xff]
      %v1387 = vld [vmem:[#allocation2 + $0x110] sm:$0xff]
      %v1388 = vld [vmem:[#allocation2 + $0x118] sm:$0xff]
      %v1389 = vld [vmem:[%s5] sm:$0xff]
      %v1390 = vld [vmem:[%s5 + $0x8] sm:$0xff]
      %v1391 = vld [vmem:[%s6] sm:$0xff]
      %v1392 = vld [vmem:[%s6 + $0x8] sm:$0xff]
      %1394 = vset.pattern.permute.xlu0 0
      %1395 = vperm.xlu0 %1394, %v1391
      %v1396 = vpop.permute.xlu0 %1395
      %1399 = vset.pattern.permute.xlu0 0
      %1400 = vperm.xlu0 %1399, %v1392
      %v1401 = vpop.permute.xlu0 %1400
      %v1405 = vunpack.c.l.b16 %v1389
      %v1406 = vunpack.c.h.b16 %v1389
      %v1407 = vunpack.c.l.b16 %v1390
      %v1408 = vunpack.c.h.b16 %v1390
      %v1409 = vpack.c.b16 %v1407, %v1405
      %v1410 = vpack.c.b16 %v1408, %v1406
      %v1448 = vunpack.c.l.b16 %v1353
      %v1449 = vunpack.c.h.b16 %v1353
      %v1450 = vunpack.c.l.b16 %v1354
      %v1451 = vunpack.c.h.b16 %v1354
      %v1452 = vunpack.c.l.b16 %v1355
      %v1453 = vunpack.c.h.b16 %v1355
      %v1454 = vunpack.c.l.b16 %v1356
      %v1455 = vunpack.c.h.b16 %v1356
      %v1456 = vunpack.c.l.b16 %v1357
      %v1457 = vunpack.c.h.b16 %v1357
      %v1458 = vunpack.c.l.b16 %v1358
      %v1459 = vunpack.c.h.b16 %v1358
      %v1460 = vunpack.c.l.b16 %v1359
      %v1461 = vunpack.c.h.b16 %v1359
      %v1462 = vunpack.c.l.b16 %v1360
      %v1463 = vunpack.c.h.b16 %v1360
      %v1464 = vunpack.c.l.b16 %v1361
      %v1465 = vunpack.c.h.b16 %v1361
      %v1466 = vunpack.c.l.b16 %v1362
      %v1467 = vunpack.c.h.b16 %v1362
      %v1468 = vunpack.c.l.b16 %v1363
      %v1469 = vunpack.c.h.b16 %v1363
      %v1470 = vunpack.c.l.b16 %v1364
      %v1471 = vunpack.c.h.b16 %v1364
      %v1472 = vunpack.c.l.b16 %v1365
      %v1473 = vunpack.c.h.b16 %v1365
      %v1474 = vunpack.c.l.b16 %v1366
      %v1475 = vunpack.c.h.b16 %v1366
      %v1476 = vunpack.c.l.b16 %v1367
      %v1477 = vunpack.c.h.b16 %v1367
      %v1478 = vunpack.c.l.b16 %v1368
      %v1479 = vunpack.c.h.b16 %v1368
      %v1480 = vunpack.c.l.b16 %v1369
      %v1481 = vunpack.c.h.b16 %v1369
      %v1482 = vunpack.c.l.b16 %v1370
      %v1483 = vunpack.c.h.b16 %v1370
      %v1484 = vunpack.c.l.b16 %v1371
      %v1485 = vunpack.c.h.b16 %v1371
      %v1486 = vunpack.c.l.b16 %v1372
      %v1487 = vunpack.c.h.b16 %v1372
      %v1488 = vunpack.c.l.b16 %v1373
      %v1489 = vunpack.c.h.b16 %v1373
      %v1490 = vunpack.c.l.b16 %v1374
      %v1491 = vunpack.c.h.b16 %v1374
      %v1492 = vunpack.c.l.b16 %v1375
      %v1493 = vunpack.c.h.b16 %v1375
      %v1494 = vunpack.c.l.b16 %v1376
      %v1495 = vunpack.c.h.b16 %v1376
      %v1496 = vunpack.c.l.b16 %v1377
      %v1497 = vunpack.c.h.b16 %v1377
      %v1498 = vunpack.c.l.b16 %v1378
      %v1499 = vunpack.c.h.b16 %v1378
      %v1500 = vunpack.c.l.b16 %v1379
      %v1501 = vunpack.c.h.b16 %v1379
      %v1502 = vunpack.c.l.b16 %v1380
      %v1503 = vunpack.c.h.b16 %v1380
      %v1504 = vunpack.c.l.b16 %v1381
      %v1505 = vunpack.c.h.b16 %v1381
      %v1506 = vunpack.c.l.b16 %v1382
      %v1507 = vunpack.c.h.b16 %v1382
      %v1508 = vunpack.c.l.b16 %v1383
      %v1509 = vunpack.c.h.b16 %v1383
      %v1510 = vunpack.c.l.b16 %v1384
      %v1511 = vunpack.c.h.b16 %v1384
      %v1512 = vunpack.c.l.b16 %v1385
      %v1513 = vunpack.c.h.b16 %v1385
      %v1514 = vunpack.c.l.b16 %v1386
      %v1515 = vunpack.c.h.b16 %v1386
      %v1516 = vunpack.c.l.b16 %v1387
      %v1517 = vunpack.c.h.b16 %v1387
      %v1518 = vunpack.c.l.b16 %v1388
      %v1519 = vunpack.c.h.b16 %v1388
      %v1520 = vpack.c.b16 %v1452, %v1448
      %v1521 = vpack.c.b16 %v1453, %v1449
      %v1522 = vpack.c.b16 %v1454, %v1450
      %v1523 = vpack.c.b16 %v1455, %v1451
      %v1524 = vpack.c.b16 %v1460, %v1456
      %v1525 = vpack.c.b16 %v1461, %v1457
      %v1526 = vpack.c.b16 %v1462, %v1458
      %v1527 = vpack.c.b16 %v1463, %v1459
      %v1528 = vpack.c.b16 %v1468, %v1464
      %v1529 = vpack.c.b16 %v1469, %v1465
      %v1530 = vpack.c.b16 %v1470, %v1466
      %v1531 = vpack.c.b16 %v1471, %v1467
      %v1532 = vpack.c.b16 %v1476, %v1472
      %v1533 = vpack.c.b16 %v1477, %v1473
      %v1534 = vpack.c.b16 %v1478, %v1474
      %v1535 = vpack.c.b16 %v1479, %v1475
      %v1536 = vpack.c.b16 %v1484, %v1480
      %v1537 = vpack.c.b16 %v1485, %v1481
      %v1538 = vpack.c.b16 %v1486, %v1482
      %v1539 = vpack.c.b16 %v1487, %v1483
      %v1540 = vpack.c.b16 %v1492, %v1488
      %v1541 = vpack.c.b16 %v1493, %v1489
      %v1542 = vpack.c.b16 %v1494, %v1490
      %v1543 = vpack.c.b16 %v1495, %v1491
      %v1544 = vpack.c.b16 %v1500, %v1496
      %v1545 = vpack.c.b16 %v1501, %v1497
      %v1546 = vpack.c.b16 %v1502, %v1498
      %v1547 = vpack.c.b16 %v1503, %v1499
      %v1548 = vpack.c.b16 %v1508, %v1504
      %v1549 = vpack.c.b16 %v1509, %v1505
      %v1550 = vpack.c.b16 %v1510, %v1506
      %v1551 = vpack.c.b16 %v1511, %v1507
      %v1552 = vpack.c.b16 %v1516, %v1512
      %v1553 = vpack.c.b16 %v1517, %v1513
      %v1554 = vpack.c.b16 %v1518, %v1514
      %v1555 = vpack.c.b16 %v1519, %v1515
      %v1593 = vsel %vm606, %v1410, 0
      %1595 = vmatprep.subr.bf16.mxu0 %v1549
      %1596 = vmatpush1.bf16.msra.mxu0 %v1548
      %1597 = vmatprep.subr.bf16.mxu0 %v1545
      %1598 = vmatpush1.bf16.msra.mxu0 %v1544
      %1599 = vmatprep.subr.bf16.mxu0 %v1541
      %1600 = vmatpush1.bf16.msra.mxu0 %v1540
      %1601 = vmatprep.subr.bf16.mxu0 %v1537
      %1602 = vmatpush1.bf16.msra.mxu0 %v1536
      %1603 = vmatprep.subr.bf16.mxu0 %v1533
      %1604 = vmatpush1.bf16.msra.mxu0 %v1532
      %1605 = vmatprep.subr.bf16.mxu0 %v1529
      %1606 = vmatpush1.bf16.msra.mxu0 %v1528
      %1607 = vmatprep.subr.bf16.mxu0 %v1525
      %1608 = vmatpush1.bf16.msra.mxu0 %v1524
      %1609 = vmatprep.subr.bf16.mxu0 %v1521
      %1610 = vmatpush1.bf16.msra.mxu0 %v1520
      %1611 = vmatprep.subr.bf16.mxu0 0
      %1612 = vmatpush2.bf16.msra.mxu0 0
      %1613 = vmatprep.subr.bf16.mxu0 0
      %1614 = vmatpush2.bf16.msra.mxu0 0
      %1615 = vmatprep.subr.bf16.mxu0 0
      %1616 = vmatpush2.bf16.msra.mxu0 0
      %1617 = vmatprep.subr.bf16.mxu0 0
      %1618 = vmatpush2.bf16.msra.mxu0 0
      %1619 = vmatprep.subr.bf16.mxu0 0
      %1620 = vmatpush2.bf16.msra.mxu0 0
      %1621 = vmatprep.subr.bf16.mxu0 0
      %1622 = vmatpush2.bf16.msra.mxu0 0
      %1623 = vmatprep.subr.bf16.mxu0 0
      %1624 = vmatpush2.bf16.msra.mxu0 0
      %1625 = vmatprep.subr.bf16.mxu0 %v1553
      %1626 = vmatpush2.bf16.msra.mxu0 %v1552
      %1627 = vmatprep.mubr.bf16.mxu0 %v1593
      %1628 = vmatmul.mubr.bf16.gmra.mxu0 %v1409
      %v1629 = vpop.f32.mrf.mxu0
      %v1630 = vadd.f32 %v1396, %v1629
      %v1631 = vpop.f32.mrf.mxu0
      %v1632 = vadd.f32 %v1396, %v1631
      %v1633 = vpop.f32.mrf.mxu0
      %v1634 = vadd.f32 %v1401, %v1633
      %v1635 = vpop.f32.mrf.mxu0
      %v1636 = vadd.f32 %v1401, %v1635
      %1637 = vdwg.mxu0
      %1638 = vmatprep.subr.bf16.mxu0 %v1551
      %1639 = vmatpush1.bf16.msra.mxu0 %v1550
      %1640 = vmatprep.subr.bf16.mxu0 %v1547
      %1641 = vmatpush1.bf16.msra.mxu0 %v1546
      %1642 = vmatprep.subr.bf16.mxu0 %v1543
      %1643 = vmatpush1.bf16.msra.mxu0 %v1542
      %1644 = vmatprep.subr.bf16.mxu0 %v1539
      %1645 = vmatpush1.bf16.msra.mxu0 %v1538
      %1646 = vmatprep.subr.bf16.mxu0 %v1535
      %1647 = vmatpush1.bf16.msra.mxu0 %v1534
      %1648 = vmatprep.subr.bf16.mxu0 %v1531
      %1649 = vmatpush1.bf16.msra.mxu0 %v1530
      %1650 = vmatprep.subr.bf16.mxu0 %v1527
      %1651 = vmatpush1.bf16.msra.mxu0 %v1526
      %1652 = vmatprep.subr.bf16.mxu0 %v1523
      %1653 = vmatpush1.bf16.msra.mxu0 %v1522
      %1654 = vmatprep.subr.bf16.mxu0 0
      %1655 = vmatpush2.bf16.msra.mxu0 0
      %1656 = vmatprep.subr.bf16.mxu0 0
      %1657 = vmatpush2.bf16.msra.mxu0 0
      %1658 = vmatprep.subr.bf16.mxu0 0
      %1659 = vmatpush2.bf16.msra.mxu0 0
      %1660 = vmatprep.subr.bf16.mxu0 0
      %1661 = vmatpush2.bf16.msra.mxu0 0
      %1662 = vmatprep.subr.bf16.mxu0 0
      %1663 = vmatpush2.bf16.msra.mxu0 0
      %1664 = vmatprep.subr.bf16.mxu0 0
      %1665 = vmatpush2.bf16.msra.mxu0 0
      %1666 = vmatprep.subr.bf16.mxu0 0
      %1667 = vmatpush2.bf16.msra.mxu0 0
      %1668 = vmatprep.subr.bf16.mxu0 %v1555
      %1669 = vmatpush2.bf16.msra.mxu0 %v1554
      %1670 = vmatprep.mubr.bf16.mxu0 %v1593
      %1671 = vmatmul.mubr.bf16.gmra.mxu0 %v1409
      %v1672 = vpop.f32.mrf.mxu0
      %v1673 = vadd.f32 %v1396, %v1672
      %v1674 = vpop.f32.mrf.mxu0
      %v1675 = vadd.f32 %v1396, %v1674
      %v1676 = vpop.f32.mrf.mxu0
      %v1677 = vadd.f32 %v1401, %v1676
      %v1678 = vpop.f32.mrf.mxu0
      %v1679 = vadd.f32 %v1401, %v1678
      %1680 = vdwg.mxu0
      %v1681 = vmax.f32 %v1630, 0.0
      %v1682 = vmax.f32 %v1632, 0.0
      %v1683 = vmax.f32 %v1673, 0.0
      %v1684 = vmax.f32 %v1675, 0.0
      %v1685 = vmax.f32 %v1634, 0.0
      %v1686 = vmax.f32 %v1636, 0.0
      %v1687 = vmax.f32 %v1677, 0.0
      %v1688 = vmax.f32 %v1679, 0.0
      %v1689 = vpack.c.bf16 %v1685, %v1681
      %v1690 = vpack.c.bf16 %v1686, %v1682
      %v1691 = vpack.c.bf16 %v1687, %v1683
      %v1692 = vpack.c.bf16 %v1688, %v1684
      %v1693 = vld [vmem:[%s1] ss:$8 sm:$0xf]
      %v1695 = vlaneseq
      %v1696 = vshrl.u32 %v1695, 7
      %v1697 = vsub.s32 0, %v1696
      %v1698 = vrot.slane %v1693, %v1697
      %v1699 = vlaneseq
      %v1700 = vshrl.u32 %v1699, 7
      %v1701 = vsub.s32 1, %v1700
      %v1702 = vrot.slane %v1693, %v1701
      %v1703 = vlaneseq
      %v1704 = vshrl.u32 %v1703, 7
      %v1705 = vsub.s32 2, %v1704
      %v1706 = vrot.slane %v1693, %v1705
      %v1707 = vlaneseq
      %v1708 = vshrl.u32 %v1707, 7
      %v1709 = vsub.s32 3, %v1708
      %v1710 = vrot.slane %v1693, %v1709
      %v1715 = vpack.c.bf16 %v1698, %v1698
      %v1716 = vpack.c.bf16 %v1702, %v1702
      %v1717 = vpack.c.bf16 %v1706, %v1706
      %v1718 = vpack.c.bf16 %v1710, %v1710
      %1723 = vrot.lane.b32.xlu0 %v1689, 17
      %v1724 = vpop.permute.xlu0 %1723
      %1725 = vrot.lane.b32.xlu0 %v1690, 17
      %v1726 = vpop.permute.xlu0 %1725
      %1727 = vrot.lane.b32.xlu0 %v1691, 17
      %v1728 = vpop.permute.xlu0 %1727
      %1729 = vrot.lane.b32.xlu0 %v1692, 17
      %v1730 = vpop.permute.xlu0 %1729
      %v1731 = vsel %vm496, %v1724, %v1726
      %v1732 = vsel %vm496, %v1726, %v1728
      %v1733 = vsel %vm496, %v1728, %v1730
      %v1738 = vsel %vm503, 0, %v1724
      %v1741 = vpack.i.b16 %v1715, %v1715
      %v1743 = vlaneseq
      %v1744 = vshrl.u32 %v1743, 7
      %v1745 = vsub.s32 0, %v1744
      %v1746 = vrot.slane %v1741, %v1745
      %v1748 = vpack.i.b16 %v1716, %v1716
      %v1750 = vlaneseq
      %v1751 = vshrl.u32 %v1750, 7
      %v1752 = vsub.s32 0, %v1751
      %v1753 = vrot.slane %v1748, %v1752
      %v1755 = vpack.i.b16 %v1717, %v1717
      %v1757 = vlaneseq
      %v1758 = vshrl.u32 %v1757, 7
      %v1759 = vsub.s32 0, %v1758
      %v1760 = vrot.slane %v1755, %v1759
      %v1762 = vpack.i.b16 %v1718, %v1718
      %v1764 = vlaneseq
      %v1765 = vshrl.u32 %v1764, 7
      %v1766 = vsub.s32 0, %v1765
      %v1767 = vrot.slane %v1762, %v1766
      %v1768 = vmul.bf16 %v1738, %v1746
      %v1769 = vmul.bf16 %v1731, %v1753
      %v1770 = vmul.bf16 %v1732, %v1760
      %v1771 = vmul.bf16 %v1733, %v1767
      %v1776 = vunpack.c.l.b16 %v1768
      %v1777 = vunpack.c.l.b16 %v1769
      %v1778 = vunpack.c.l.b16 %v1770
      %v1779 = vunpack.c.l.b16 %v1771
      %v1780 = vunpack.c.h.b16 %v1768
      %v1781 = vunpack.c.h.b16 %v1769
      %v1782 = vunpack.c.h.b16 %v1770
      %v1783 = vunpack.c.h.b16 %v1771
      %v1784 = vpack.c.b16 %v1777, %v1776
      %v1785 = vpack.c.b16 %v1779, %v1778
      %v1786 = vpack.c.b16 %v1781, %v1780
      %v1787 = vpack.c.b16 %v1783, %v1782
      %1792 = vst [vmem:[#allocation2] sm:$0xff] %v1784
      %1793 = vst [vmem:[#allocation2 + $0x8] sm:$0xff] %v1785
      %1794 = vst [vmem:[#allocation2 + $0x10] sm:$0xff] %v1786
      %1795 = vst [vmem:[#allocation2 + $0x18] sm:$0xff] %v1787
      %v1796 = vld [vmem:[%s564] ss:$8 sm:$0xf]
      %v1798 = vlaneseq
      %v1799 = vshrl.u32 %v1798, 7
      %v1800 = vsub.s32 0, %v1799
      %v1801 = vrot.slane %v1796, %v1800
      %v1802 = vlaneseq
      %v1803 = vshrl.u32 %v1802, 7
      %v1804 = vsub.s32 1, %v1803
      %v1805 = vrot.slane %v1796, %v1804
      %v1806 = vlaneseq
      %v1807 = vshrl.u32 %v1806, 7
      %v1808 = vsub.s32 2, %v1807
      %v1809 = vrot.slane %v1796, %v1808
      %v1810 = vlaneseq
      %v1811 = vshrl.u32 %v1810, 7
      %v1812 = vsub.s32 3, %v1811
      %v1813 = vrot.slane %v1796, %v1812
      %v1818 = vpack.c.bf16 %v1801, %v1801
      %v1819 = vpack.c.bf16 %v1805, %v1805
      %v1820 = vpack.c.bf16 %v1809, %v1809
      %v1821 = vpack.c.bf16 %v1813, %v1813
      %1822 = vrot.lane.b32.xlu0 %v1689, 16
      %v1823 = vpop.permute.xlu0 %1822
      %1824 = vrot.lane.b32.xlu0 %v1690, 16
      %v1825 = vpop.permute.xlu0 %1824
      %1826 = vrot.lane.b32.xlu0 %v1691, 16
      %v1827 = vpop.permute.xlu0 %1826
      %1828 = vrot.lane.b32.xlu0 %v1692, 16
      %v1829 = vpop.permute.xlu0 %1828
      %v1830 = vsel %vm599, %v1823, %v1825
      %v1831 = vsel %vm599, %v1825, %v1827
      %v1832 = vsel %vm599, %v1827, %v1829
      %v1837 = vsel %vm606, 0, %v1823
      %v1840 = vpack.i.b16 %v1818, %v1818
      %v1842 = vlaneseq
      %v1843 = vshrl.u32 %v1842, 7
      %v1844 = vsub.s32 0, %v1843
      %v1845 = vrot.slane %v1840, %v1844
      %v1847 = vpack.i.b16 %v1819, %v1819
      %v1849 = vlaneseq
      %v1850 = vshrl.u32 %v1849, 7
      %v1851 = vsub.s32 0, %v1850
      %v1852 = vrot.slane %v1847, %v1851
      %v1854 = vpack.i.b16 %v1820, %v1820
      %v1856 = vlaneseq
      %v1857 = vshrl.u32 %v1856, 7
      %v1858 = vsub.s32 0, %v1857
      %v1859 = vrot.slane %v1854, %v1858
      %v1861 = vpack.i.b16 %v1821, %v1821
      %v1863 = vlaneseq
      %v1864 = vshrl.u32 %v1863, 7
      %v1865 = vsub.s32 0, %v1864
      %v1866 = vrot.slane %v1861, %v1865
      %v1867 = vmul.bf16 %v1837, %v1845
      %v1868 = vmul.bf16 %v1830, %v1852
      %v1869 = vmul.bf16 %v1831, %v1859
      %v1870 = vmul.bf16 %v1832, %v1866
      %v1875 = vunpack.c.l.b16 %v1867
      %v1876 = vunpack.c.l.b16 %v1868
      %v1877 = vunpack.c.l.b16 %v1869
      %v1878 = vunpack.c.l.b16 %v1870
      %v1879 = vunpack.c.h.b16 %v1867
      %v1880 = vunpack.c.h.b16 %v1868
      %v1881 = vunpack.c.h.b16 %v1869
      %v1882 = vunpack.c.h.b16 %v1870
      %v1883 = vpack.c.b16 %v1876, %v1875
      %v1884 = vpack.c.b16 %v1878, %v1877
      %v1885 = vpack.c.b16 %v1880, %v1879
      %v1886 = vpack.c.b16 %v1882, %v1881
      %1891 = vst [vmem:[#allocation2 + $0x20] sm:$0xff] %v1883
      %1892 = vst [vmem:[#allocation2 + $0x28] sm:$0xff] %v1884
      %1893 = vst [vmem:[#allocation2 + $0x30] sm:$0xff] %v1885
      %1894 = vst [vmem:[#allocation2 + $0x38] sm:$0xff] %v1886
      %v1895 = vld [vmem:[%s666] ss:$8 sm:$0xf]
      %v1897 = vlaneseq
      %v1898 = vshrl.u32 %v1897, 7
      %v1899 = vsub.s32 0, %v1898
      %v1900 = vrot.slane %v1895, %v1899
      %v1901 = vlaneseq
      %v1902 = vshrl.u32 %v1901, 7
      %v1903 = vsub.s32 1, %v1902
      %v1904 = vrot.slane %v1895, %v1903
      %v1905 = vlaneseq
      %v1906 = vshrl.u32 %v1905, 7
      %v1907 = vsub.s32 2, %v1906
      %v1908 = vrot.slane %v1895, %v1907
      %v1909 = vlaneseq
      %v1910 = vshrl.u32 %v1909, 7
      %v1911 = vsub.s32 3, %v1910
      %v1912 = vrot.slane %v1895, %v1911
      %v1917 = vpack.c.bf16 %v1900, %v1900
      %v1918 = vpack.c.bf16 %v1904, %v1904
      %v1919 = vpack.c.bf16 %v1908, %v1908
      %v1920 = vpack.c.bf16 %v1912, %v1912
      %1921 = vrot.lane.b32.xlu0 %v1689, 15
      %v1922 = vpop.permute.xlu0 %1921
      %1923 = vrot.lane.b32.xlu0 %v1690, 15
      %v1924 = vpop.permute.xlu0 %1923
      %1925 = vrot.lane.b32.xlu0 %v1691, 15
      %v1926 = vpop.permute.xlu0 %1925
      %1927 = vrot.lane.b32.xlu0 %v1692, 15
      %v1928 = vpop.permute.xlu0 %1927
      %v1929 = vsel %vm701, %v1922, %v1924
      %v1930 = vsel %vm701, %v1924, %v1926
      %v1931 = vsel %vm701, %v1926, %v1928
      %v1936 = vsel %vm708, 0, %v1922
      %v1939 = vpack.i.b16 %v1917, %v1917
      %v1941 = vlaneseq
      %v1942 = vshrl.u32 %v1941, 7
      %v1943 = vsub.s32 0, %v1942
      %v1944 = vrot.slane %v1939, %v1943
      %v1946 = vpack.i.b16 %v1918, %v1918
      %v1948 = vlaneseq
      %v1949 = vshrl.u32 %v1948, 7
      %v1950 = vsub.s32 0, %v1949
      %v1951 = vrot.slane %v1946, %v1950
      %v1953 = vpack.i.b16 %v1919, %v1919
      %v1955 = vlaneseq
      %v1956 = vshrl.u32 %v1955, 7
      %v1957 = vsub.s32 0, %v1956
      %v1958 = vrot.slane %v1953, %v1957
      %v1960 = vpack.i.b16 %v1920, %v1920
      %v1962 = vlaneseq
      %v1963 = vshrl.u32 %v1962, 7
      %v1964 = vsub.s32 0, %v1963
      %v1965 = vrot.slane %v1960, %v1964
      %v1966 = vmul.bf16 %v1936, %v1944
      %v1967 = vmul.bf16 %v1929, %v1951
      %v1968 = vmul.bf16 %v1930, %v1958
      %v1969 = vmul.bf16 %v1931, %v1965
      %v1974 = vunpack.c.l.b16 %v1966
      %v1975 = vunpack.c.l.b16 %v1967
      %v1976 = vunpack.c.l.b16 %v1968
      %v1977 = vunpack.c.l.b16 %v1969
      %v1978 = vunpack.c.h.b16 %v1966
      %v1979 = vunpack.c.h.b16 %v1967
      %v1980 = vunpack.c.h.b16 %v1968
      %v1981 = vunpack.c.h.b16 %v1969
      %v1982 = vpack.c.b16 %v1975, %v1974
      %v1983 = vpack.c.b16 %v1977, %v1976
      %v1984 = vpack.c.b16 %v1979, %v1978
      %v1985 = vpack.c.b16 %v1981, %v1980
      %1990 = vst [vmem:[#allocation2 + $0x40] sm:$0xff] %v1982
      %1991 = vst [vmem:[#allocation2 + $0x48] sm:$0xff] %v1983
      %1992 = vst [vmem:[#allocation2 + $0x50] sm:$0xff] %v1984
      %1993 = vst [vmem:[#allocation2 + $0x58] sm:$0xff] %v1985
      %v1994 = vld [vmem:[%s768] ss:$8 sm:$0xf]
      %v1996 = vlaneseq
      %v1997 = vshrl.u32 %v1996, 7
      %v1998 = vsub.s32 0, %v1997
      %v1999 = vrot.slane %v1994, %v1998
      %v2000 = vlaneseq
      %v2001 = vshrl.u32 %v2000, 7
      %v2002 = vsub.s32 1, %v2001
      %v2003 = vrot.slane %v1994, %v2002
      %v2004 = vlaneseq
      %v2005 = vshrl.u32 %v2004, 7
      %v2006 = vsub.s32 2, %v2005
      %v2007 = vrot.slane %v1994, %v2006
      %v2008 = vlaneseq
      %v2009 = vshrl.u32 %v2008, 7
      %v2010 = vsub.s32 3, %v2009
      %v2011 = vrot.slane %v1994, %v2010
      %v2016 = vpack.c.bf16 %v1999, %v1999
      %v2017 = vpack.c.bf16 %v2003, %v2003
      %v2018 = vpack.c.bf16 %v2007, %v2007
      %v2019 = vpack.c.bf16 %v2011, %v2011
      %2020 = vrot.lane.b32.xlu0 %v1689, 1
      %v2021 = vpop.permute.xlu0 %2020
      %2022 = vrot.lane.b32.xlu0 %v1690, 1
      %v2023 = vpop.permute.xlu0 %2022
      %2024 = vrot.lane.b32.xlu0 %v1691, 1
      %v2025 = vpop.permute.xlu0 %2024
      %2026 = vrot.lane.b32.xlu0 %v1692, 1
      %v2027 = vpop.permute.xlu0 %2026
      %v2028 = vsel %vm803, %v2021, %v2023
      %v2029 = vsel %vm803, %v2023, %v2025
      %v2030 = vsel %vm803, %v2025, %v2027
      %v2035 = vsel %vm810, 0, %v2021
      %v2038 = vpack.i.b16 %v2016, %v2016
      %v2040 = vlaneseq
      %v2041 = vshrl.u32 %v2040, 7
      %v2042 = vsub.s32 0, %v2041
      %v2043 = vrot.slane %v2038, %v2042
      %v2045 = vpack.i.b16 %v2017, %v2017
      %v2047 = vlaneseq
      %v2048 = vshrl.u32 %v2047, 7
      %v2049 = vsub.s32 0, %v2048
      %v2050 = vrot.slane %v2045, %v2049
      %v2052 = vpack.i.b16 %v2018, %v2018
      %v2054 = vlaneseq
      %v2055 = vshrl.u32 %v2054, 7
      %v2056 = vsub.s32 0, %v2055
      %v2057 = vrot.slane %v2052, %v2056
      %v2059 = vpack.i.b16 %v2019, %v2019
      %v2061 = vlaneseq
      %v2062 = vshrl.u32 %v2061, 7
      %v2063 = vsub.s32 0, %v2062
      %v2064 = vrot.slane %v2059, %v2063
      %v2065 = vmul.bf16 %v2035, %v2043
      %v2066 = vmul.bf16 %v2028, %v2050
      %v2067 = vmul.bf16 %v2029, %v2057
      %v2068 = vmul.bf16 %v2030, %v2064
      %v2073 = vunpack.c.l.b16 %v2065
      %v2074 = vunpack.c.l.b16 %v2066
      %v2075 = vunpack.c.l.b16 %v2067
      %v2076 = vunpack.c.l.b16 %v2068
      %v2077 = vunpack.c.h.b16 %v2065
      %v2078 = vunpack.c.h.b16 %v2066
      %v2079 = vunpack.c.h.b16 %v2067
      %v2080 = vunpack.c.h.b16 %v2068
      %v2081 = vpack.c.b16 %v2074, %v2073
      %v2082 = vpack.c.b16 %v2076, %v2075
      %v2083 = vpack.c.b16 %v2078, %v2077
      %v2084 = vpack.c.b16 %v2080, %v2079
      %2089 = vst [vmem:[#allocation2 + $0x60] sm:$0xff] %v2081
      %2090 = vst [vmem:[#allocation2 + $0x68] sm:$0xff] %v2082
      %2091 = vst [vmem:[#allocation2 + $0x70] sm:$0xff] %v2083
      %2092 = vst [vmem:[#allocation2 + $0x78] sm:$0xff] %v2084
      %v2093 = vld [vmem:[%s870] ss:$8 sm:$0xf]
      %v2095 = vlaneseq
      %v2096 = vshrl.u32 %v2095, 7
      %v2097 = vsub.s32 0, %v2096
      %v2098 = vrot.slane %v2093, %v2097
      %v2099 = vlaneseq
      %v2100 = vshrl.u32 %v2099, 7
      %v2101 = vsub.s32 1, %v2100
      %v2102 = vrot.slane %v2093, %v2101
      %v2103 = vlaneseq
      %v2104 = vshrl.u32 %v2103, 7
      %v2105 = vsub.s32 2, %v2104
      %v2106 = vrot.slane %v2093, %v2105
      %v2107 = vlaneseq
      %v2108 = vshrl.u32 %v2107, 7
      %v2109 = vsub.s32 3, %v2108
      %v2110 = vrot.slane %v2093, %v2109
      %v2115 = vpack.c.bf16 %v2098, %v2098
      %v2116 = vpack.c.bf16 %v2102, %v2102
      %v2117 = vpack.c.bf16 %v2106, %v2106
      %v2118 = vpack.c.bf16 %v2110, %v2110
      %v2120 = vpack.i.b16 %v2115, %v2115
      %v2122 = vlaneseq
      %v2123 = vshrl.u32 %v2122, 7
      %v2124 = vsub.s32 0, %v2123
      %v2125 = vrot.slane %v2120, %v2124
      %v2127 = vpack.i.b16 %v2116, %v2116
      %v2129 = vlaneseq
      %v2130 = vshrl.u32 %v2129, 7
      %v2131 = vsub.s32 0, %v2130
      %v2132 = vrot.slane %v2127, %v2131
      %v2134 = vpack.i.b16 %v2117, %v2117
      %v2136 = vlaneseq
      %v2137 = vshrl.u32 %v2136, 7
      %v2138 = vsub.s32 0, %v2137
      %v2139 = vrot.slane %v2134, %v2138
      %v2141 = vpack.i.b16 %v2118, %v2118
      %v2143 = vlaneseq
      %v2144 = vshrl.u32 %v2143, 7
      %v2145 = vsub.s32 0, %v2144
      %v2146 = vrot.slane %v2141, %v2145
      %v2147 = vmul.bf16 %v1689, %v2125
      %v2148 = vmul.bf16 %v1690, %v2132
      %v2149 = vmul.bf16 %v1691, %v2139
      %v2150 = vmul.bf16 %v1692, %v2146
      %v2155 = vunpack.c.l.b16 %v2147
      %v2156 = vunpack.c.l.b16 %v2148
      %v2157 = vunpack.c.l.b16 %v2149
      %v2158 = vunpack.c.l.b16 %v2150
      %v2159 = vunpack.c.h.b16 %v2147
      %v2160 = vunpack.c.h.b16 %v2148
      %v2161 = vunpack.c.h.b16 %v2149
      %v2162 = vunpack.c.h.b16 %v2150
      %v2163 = vpack.c.b16 %v2156, %v2155
      %v2164 = vpack.c.b16 %v2158, %v2157
      %v2165 = vpack.c.b16 %v2160, %v2159
      %v2166 = vpack.c.b16 %v2162, %v2161
      %2171 = vst [vmem:[#allocation2 + $0x80] sm:$0xff] %v2163
      %2172 = vst [vmem:[#allocation2 + $0x88] sm:$0xff] %v2164
      %2173 = vst [vmem:[#allocation2 + $0x90] sm:$0xff] %v2165
      %2174 = vst [vmem:[#allocation2 + $0x98] sm:$0xff] %v2166
      %v2175 = vld [vmem:[%s945] ss:$8 sm:$0xf]
      %v2177 = vlaneseq
      %v2178 = vshrl.u32 %v2177, 7
      %v2179 = vsub.s32 0, %v2178
      %v2180 = vrot.slane %v2175, %v2179
      %v2181 = vlaneseq
      %v2182 = vshrl.u32 %v2181, 7
      %v2183 = vsub.s32 1, %v2182
      %v2184 = vrot.slane %v2175, %v2183
      %v2185 = vlaneseq
      %v2186 = vshrl.u32 %v2185, 7
      %v2187 = vsub.s32 2, %v2186
      %v2188 = vrot.slane %v2175, %v2187
      %v2189 = vlaneseq
      %v2190 = vshrl.u32 %v2189, 7
      %v2191 = vsub.s32 3, %v2190
      %v2192 = vrot.slane %v2175, %v2191
      %v2197 = vpack.c.bf16 %v2180, %v2180
      %v2198 = vpack.c.bf16 %v2184, %v2184
      %v2199 = vpack.c.bf16 %v2188, %v2188
      %v2200 = vpack.c.bf16 %v2192, %v2192
      %2201 = vrot.lane.b32.xlu0 %v1689, 127
      %v2202 = vpop.permute.xlu0 %2201
      %2203 = vrot.lane.b32.xlu0 %v1690, 127
      %v2204 = vpop.permute.xlu0 %2203
      %2205 = vrot.lane.b32.xlu0 %v1691, 127
      %v2206 = vpop.permute.xlu0 %2205
      %2207 = vrot.lane.b32.xlu0 %v1692, 127
      %v2208 = vpop.permute.xlu0 %2207
      %v2209 = vsel %vm980, %v2202, %v2204
      %v2210 = vsel %vm980, %v2204, %v2206
      %v2211 = vsel %vm980, %v2206, %v2208
      %v2216 = vsel %vm987, %v2208, 0
      %v2219 = vpack.i.b16 %v2197, %v2197
      %v2221 = vlaneseq
      %v2222 = vshrl.u32 %v2221, 7
      %v2223 = vsub.s32 0, %v2222
      %v2224 = vrot.slane %v2219, %v2223
      %v2226 = vpack.i.b16 %v2198, %v2198
      %v2228 = vlaneseq
      %v2229 = vshrl.u32 %v2228, 7
      %v2230 = vsub.s32 0, %v2229
      %v2231 = vrot.slane %v2226, %v2230
      %v2233 = vpack.i.b16 %v2199, %v2199
      %v2235 = vlaneseq
      %v2236 = vshrl.u32 %v2235, 7
      %v2237 = vsub.s32 0, %v2236
      %v2238 = vrot.slane %v2233, %v2237
      %v2240 = vpack.i.b16 %v2200, %v2200
      %v2242 = vlaneseq
      %v2243 = vshrl.u32 %v2242, 7
      %v2244 = vsub.s32 0, %v2243
      %v2245 = vrot.slane %v2240, %v2244
      %v2246 = vmul.bf16 %v2209, %v2224
      %v2247 = vmul.bf16 %v2210, %v2231
      %v2248 = vmul.bf16 %v2211, %v2238
      %v2249 = vmul.bf16 %v2216, %v2245
      %v2254 = vunpack.c.l.b16 %v2246
      %v2255 = vunpack.c.l.b16 %v2247
      %v2256 = vunpack.c.l.b16 %v2248
      %v2257 = vunpack.c.l.b16 %v2249
      %v2258 = vunpack.c.h.b16 %v2246
      %v2259 = vunpack.c.h.b16 %v2247
      %v2260 = vunpack.c.h.b16 %v2248
      %v2261 = vunpack.c.h.b16 %v2249
      %v2262 = vpack.c.b16 %v2255, %v2254
      %v2263 = vpack.c.b16 %v2257, %v2256
      %v2264 = vpack.c.b16 %v2259, %v2258
      %v2265 = vpack.c.b16 %v2261, %v2260
      %2270 = vst [vmem:[#allocation2 + $0xa0] sm:$0xff] %v2262
      %2271 = vst [vmem:[#allocation2 + $0xa8] sm:$0xff] %v2263
      %2272 = vst [vmem:[#allocation2 + $0xb0] sm:$0xff] %v2264
      %2273 = vst [vmem:[#allocation2 + $0xb8] sm:$0xff] %v2265
      %v2274 = vld [vmem:[%s1047] ss:$8 sm:$0xf]
      %v2276 = vlaneseq
      %v2277 = vshrl.u32 %v2276, 7
      %v2278 = vsub.s32 0, %v2277
      %v2279 = vrot.slane %v2274, %v2278
      %v2280 = vlaneseq
      %v2281 = vshrl.u32 %v2280, 7
      %v2282 = vsub.s32 1, %v2281
      %v2283 = vrot.slane %v2274, %v2282
      %v2284 = vlaneseq
      %v2285 = vshrl.u32 %v2284, 7
      %v2286 = vsub.s32 2, %v2285
      %v2287 = vrot.slane %v2274, %v2286
      %v2288 = vlaneseq
      %v2289 = vshrl.u32 %v2288, 7
      %v2290 = vsub.s32 3, %v2289
      %v2291 = vrot.slane %v2274, %v2290
      %v2296 = vpack.c.bf16 %v2279, %v2279
      %v2297 = vpack.c.bf16 %v2283, %v2283
      %v2298 = vpack.c.bf16 %v2287, %v2287
      %v2299 = vpack.c.bf16 %v2291, %v2291
      %2300 = vrot.lane.b32.xlu0 %v1689, 113
      %v2301 = vpop.permute.xlu0 %2300
      %2302 = vrot.lane.b32.xlu0 %v1690, 113
      %v2303 = vpop.permute.xlu0 %2302
      %2304 = vrot.lane.b32.xlu0 %v1691, 113
      %v2305 = vpop.permute.xlu0 %2304
      %2306 = vrot.lane.b32.xlu0 %v1692, 113
      %v2307 = vpop.permute.xlu0 %2306
      %v2308 = vsel %vm1082, %v2301, %v2303
      %v2309 = vsel %vm1082, %v2303, %v2305
      %v2310 = vsel %vm1082, %v2305, %v2307
      %v2315 = vsel %vm1089, %v2307, 0
      %v2318 = vpack.i.b16 %v2296, %v2296
      %v2320 = vlaneseq
      %v2321 = vshrl.u32 %v2320, 7
      %v2322 = vsub.s32 0, %v2321
      %v2323 = vrot.slane %v2318, %v2322
      %v2325 = vpack.i.b16 %v2297, %v2297
      %v2327 = vlaneseq
      %v2328 = vshrl.u32 %v2327, 7
      %v2329 = vsub.s32 0, %v2328
      %v2330 = vrot.slane %v2325, %v2329
      %v2332 = vpack.i.b16 %v2298, %v2298
      %v2334 = vlaneseq
      %v2335 = vshrl.u32 %v2334, 7
      %v2336 = vsub.s32 0, %v2335
      %v2337 = vrot.slane %v2332, %v2336
      %v2339 = vpack.i.b16 %v2299, %v2299
      %v2341 = vlaneseq
      %v2342 = vshrl.u32 %v2341, 7
      %v2343 = vsub.s32 0, %v2342
      %v2344 = vrot.slane %v2339, %v2343
      %v2345 = vmul.bf16 %v2308, %v2323
      %v2346 = vmul.bf16 %v2309, %v2330
      %v2347 = vmul.bf16 %v2310, %v2337
      %v2348 = vmul.bf16 %v2315, %v2344
      %v2353 = vunpack.c.l.b16 %v2345
      %v2354 = vunpack.c.l.b16 %v2346
      %v2355 = vunpack.c.l.b16 %v2347
      %v2356 = vunpack.c.l.b16 %v2348
      %v2357 = vunpack.c.h.b16 %v2345
      %v2358 = vunpack.c.h.b16 %v2346
      %v2359 = vunpack.c.h.b16 %v2347
      %v2360 = vunpack.c.h.b16 %v2348
      %v2361 = vpack.c.b16 %v2354, %v2353
      %v2362 = vpack.c.b16 %v2356, %v2355
      %v2363 = vpack.c.b16 %v2358, %v2357
      %v2364 = vpack.c.b16 %v2360, %v2359
      %2369 = vst [vmem:[#allocation2 + $0xc0] sm:$0xff] %v2361
      %2370 = vst [vmem:[#allocation2 + $0xc8] sm:$0xff] %v2362
      %2371 = vst [vmem:[#allocation2 + $0xd0] sm:$0xff] %v2363
      %2372 = vst [vmem:[#allocation2 + $0xd8] sm:$0xff] %v2364
      %v2373 = vld [vmem:[%s1149] ss:$8 sm:$0xf]
      %v2375 = vlaneseq
      %v2376 = vshrl.u32 %v2375, 7
      %v2377 = vsub.s32 0, %v2376
      %v2378 = vrot.slane %v2373, %v2377
      %v2379 = vlaneseq
      %v2380 = vshrl.u32 %v2379, 7
      %v2381 = vsub.s32 1, %v2380
      %v2382 = vrot.slane %v2373, %v2381
      %v2383 = vlaneseq
      %v2384 = vshrl.u32 %v2383, 7
      %v2385 = vsub.s32 2, %v2384
      %v2386 = vrot.slane %v2373, %v2385
      %v2387 = vlaneseq
      %v2388 = vshrl.u32 %v2387, 7
      %v2389 = vsub.s32 3, %v2388
      %v2390 = vrot.slane %v2373, %v2389
      %v2395 = vpack.c.bf16 %v2378, %v2378
      %v2396 = vpack.c.bf16 %v2382, %v2382
      %v2397 = vpack.c.bf16 %v2386, %v2386
      %v2398 = vpack.c.bf16 %v2390, %v2390
      %2399 = vrot.lane.b32.xlu0 %v1689, 112
      %v2400 = vpop.permute.xlu0 %2399
      %2401 = vrot.lane.b32.xlu0 %v1690, 112
      %v2402 = vpop.permute.xlu0 %2401
      %2403 = vrot.lane.b32.xlu0 %v1691, 112
      %v2404 = vpop.permute.xlu0 %2403
      %2405 = vrot.lane.b32.xlu0 %v1692, 112
      %v2406 = vpop.permute.xlu0 %2405
      %v2407 = vsel %vm1184, %v2400, %v2402
      %v2408 = vsel %vm1184, %v2402, %v2404
      %v2409 = vsel %vm1184, %v2404, %v2406
      %v2414 = vsel %vm1191, %v2406, 0
      %v2417 = vpack.i.b16 %v2395, %v2395
      %v2419 = vlaneseq
      %v2420 = vshrl.u32 %v2419, 7
      %v2421 = vsub.s32 0, %v2420
      %v2422 = vrot.slane %v2417, %v2421
      %v2424 = vpack.i.b16 %v2396, %v2396
      %v2426 = vlaneseq
      %v2427 = vshrl.u32 %v2426, 7
      %v2428 = vsub.s32 0, %v2427
      %v2429 = vrot.slane %v2424, %v2428
      %v2431 = vpack.i.b16 %v2397, %v2397
      %v2433 = vlaneseq
      %v2434 = vshrl.u32 %v2433, 7
      %v2435 = vsub.s32 0, %v2434
      %v2436 = vrot.slane %v2431, %v2435
      %v2438 = vpack.i.b16 %v2398, %v2398
      %v2440 = vlaneseq
      %v2441 = vshrl.u32 %v2440, 7
      %v2442 = vsub.s32 0, %v2441
      %v2443 = vrot.slane %v2438, %v2442
      %v2444 = vmul.bf16 %v2407, %v2422
      %v2445 = vmul.bf16 %v2408, %v2429
      %v2446 = vmul.bf16 %v2409, %v2436
      %v2447 = vmul.bf16 %v2414, %v2443
      %v2452 = vunpack.c.l.b16 %v2444
      %v2453 = vunpack.c.l.b16 %v2445
      %v2454 = vunpack.c.l.b16 %v2446
      %v2455 = vunpack.c.l.b16 %v2447
      %v2456 = vunpack.c.h.b16 %v2444
      %v2457 = vunpack.c.h.b16 %v2445
      %v2458 = vunpack.c.h.b16 %v2446
      %v2459 = vunpack.c.h.b16 %v2447
      %v2460 = vpack.c.b16 %v2453, %v2452
      %v2461 = vpack.c.b16 %v2455, %v2454
      %v2462 = vpack.c.b16 %v2457, %v2456
      %v2463 = vpack.c.b16 %v2459, %v2458
      %2468 = vst [vmem:[#allocation2 + $0xe0] sm:$0xff] %v2460
      %2469 = vst [vmem:[#allocation2 + $0xe8] sm:$0xff] %v2461
      %2470 = vst [vmem:[#allocation2 + $0xf0] sm:$0xff] %v2462
      %2471 = vst [vmem:[#allocation2 + $0xf8] sm:$0xff] %v2463
      %v2472 = vld [vmem:[%s1251] ss:$8 sm:$0xf]
      %v2474 = vlaneseq
      %v2475 = vshrl.u32 %v2474, 7
      %v2476 = vsub.s32 0, %v2475
      %v2477 = vrot.slane %v2472, %v2476
      %v2478 = vlaneseq
      %v2479 = vshrl.u32 %v2478, 7
      %v2480 = vsub.s32 1, %v2479
      %v2481 = vrot.slane %v2472, %v2480
      %v2482 = vlaneseq
      %v2483 = vshrl.u32 %v2482, 7
      %v2484 = vsub.s32 2, %v2483
      %v2485 = vrot.slane %v2472, %v2484
      %v2486 = vlaneseq
      %v2487 = vshrl.u32 %v2486, 7
      %v2488 = vsub.s32 3, %v2487
      %v2489 = vrot.slane %v2472, %v2488
      %v2494 = vpack.c.bf16 %v2477, %v2477
      %v2495 = vpack.c.bf16 %v2481, %v2481
      %v2496 = vpack.c.bf16 %v2485, %v2485
      %v2497 = vpack.c.bf16 %v2489, %v2489
      %2498 = vrot.lane.b32.xlu0 %v1689, 111
      %v2499 = vpop.permute.xlu0 %2498
      %2500 = vrot.lane.b32.xlu0 %v1690, 111
      %v2501 = vpop.permute.xlu0 %2500
      %2502 = vrot.lane.b32.xlu0 %v1691, 111
      %v2503 = vpop.permute.xlu0 %2502
      %2504 = vrot.lane.b32.xlu0 %v1692, 111
      %v2505 = vpop.permute.xlu0 %2504
      %v2506 = vsel %vm1286, %v2499, %v2501
      %v2507 = vsel %vm1286, %v2501, %v2503
      %v2508 = vsel %vm1286, %v2503, %v2505
      %v2513 = vsel %vm1293, %v2505, 0
      %v2516 = vpack.i.b16 %v2494, %v2494
      %v2518 = vlaneseq
      %v2519 = vshrl.u32 %v2518, 7
      %v2520 = vsub.s32 0, %v2519
      %v2521 = vrot.slane %v2516, %v2520
      %v2523 = vpack.i.b16 %v2495, %v2495
      %v2525 = vlaneseq
      %v2526 = vshrl.u32 %v2525, 7
      %v2527 = vsub.s32 0, %v2526
      %v2528 = vrot.slane %v2523, %v2527
      %v2530 = vpack.i.b16 %v2496, %v2496
      %v2532 = vlaneseq
      %v2533 = vshrl.u32 %v2532, 7
      %v2534 = vsub.s32 0, %v2533
      %v2535 = vrot.slane %v2530, %v2534
      %v2537 = vpack.i.b16 %v2497, %v2497
      %v2539 = vlaneseq
      %v2540 = vshrl.u32 %v2539, 7
      %v2541 = vsub.s32 0, %v2540
      %v2542 = vrot.slane %v2537, %v2541
      %v2543 = vmul.bf16 %v2506, %v2521
      %v2544 = vmul.bf16 %v2507, %v2528
      %v2545 = vmul.bf16 %v2508, %v2535
      %v2546 = vmul.bf16 %v2513, %v2542
      %v2551 = vunpack.c.l.b16 %v2543
      %v2552 = vunpack.c.l.b16 %v2544
      %v2553 = vunpack.c.l.b16 %v2545
      %v2554 = vunpack.c.l.b16 %v2546
      %v2555 = vunpack.c.h.b16 %v2543
      %v2556 = vunpack.c.h.b16 %v2544
      %v2557 = vunpack.c.h.b16 %v2545
      %v2558 = vunpack.c.h.b16 %v2546
      %v2559 = vpack.c.b16 %v2552, %v2551
      %v2560 = vpack.c.b16 %v2554, %v2553
      %v2561 = vpack.c.b16 %v2556, %v2555
      %v2562 = vpack.c.b16 %v2558, %v2557
      %2567 = vst [vmem:[#allocation2 + $0x100] sm:$0xff] %v2559
      %2568 = vst [vmem:[#allocation2 + $0x108] sm:$0xff] %v2560
      %2569 = vst [vmem:[#allocation2 + $0x110] sm:$0xff] %v2561
      %2570 = vst [vmem:[#allocation2 + $0x118] sm:$0xff] %v2562
      %v2571 = vld [vmem:[#allocation2] sm:$0xff]
      %v2572 = vld [vmem:[#allocation2 + $0x8] sm:$0xff]
      %v2573 = vld [vmem:[#allocation2 + $0x10] sm:$0xff]
      %v2574 = vld [vmem:[#allocation2 + $0x18] sm:$0xff]
      %v2575 = vld [vmem:[#allocation2 + $0x20] sm:$0xff]
      %v2576 = vld [vmem:[#allocation2 + $0x28] sm:$0xff]
      %v2577 = vld [vmem:[#allocation2 + $0x30] sm:$0xff]
      %v2578 = vld [vmem:[#allocation2 + $0x38] sm:$0xff]
      %v2579 = vld [vmem:[#allocation2 + $0x40] sm:$0xff]
      %v2580 = vld [vmem:[#allocation2 + $0x48] sm:$0xff]
      %v2581 = vld [vmem:[#allocation2 + $0x50] sm:$0xff]
      %v2582 = vld [vmem:[#allocation2 + $0x58] sm:$0xff]
      %v2583 = vld [vmem:[#allocation2 + $0x60] sm:$0xff]
      %v2584 = vld [vmem:[#allocation2 + $0x68] sm:$0xff]
      %v2585 = vld [vmem:[#allocation2 + $0x70] sm:$0xff]
      %v2586 = vld [vmem:[#allocation2 + $0x78] sm:$0xff]
      %v2587 = vld [vmem:[#allocation2 + $0x80] sm:$0xff]
      %v2588 = vld [vmem:[#allocation2 + $0x88] sm:$0xff]
      %v2589 = vld [vmem:[#allocation2 + $0x90] sm:$0xff]
      %v2590 = vld [vmem:[#allocation2 + $0x98] sm:$0xff]
      %v2591 = vld [vmem:[#allocation2 + $0xa0] sm:$0xff]
      %v2592 = vld [vmem:[#allocation2 + $0xa8] sm:$0xff]
      %v2593 = vld [vmem:[#allocation2 + $0xb0] sm:$0xff]
      %v2594 = vld [vmem:[#allocation2 + $0xb8] sm:$0xff]
      %v2595 = vld [vmem:[#allocation2 + $0xc0] sm:$0xff]
      %v2596 = vld [vmem:[#allocation2 + $0xc8] sm:$0xff]
      %v2597 = vld [vmem:[#allocation2 + $0xd0] sm:$0xff]
      %v2598 = vld [vmem:[#allocation2 + $0xd8] sm:$0xff]
      %v2599 = vld [vmem:[#allocation2 + $0xe0] sm:$0xff]
      %v2600 = vld [vmem:[#allocation2 + $0xe8] sm:$0xff]
      %v2601 = vld [vmem:[#allocation2 + $0xf0] sm:$0xff]
      %v2602 = vld [vmem:[#allocation2 + $0xf8] sm:$0xff]
      %v2603 = vld [vmem:[#allocation2 + $0x100] sm:$0xff]
      %v2604 = vld [vmem:[#allocation2 + $0x108] sm:$0xff]
      %v2605 = vld [vmem:[#allocation2 + $0x110] sm:$0xff]
      %v2606 = vld [vmem:[#allocation2 + $0x118] sm:$0xff]
      %v2607 = vld [vmem:[%s3] sm:$0xf]
      %v2608 = vld [vmem:[%s3 + $0x4] sm:$0xf]
      %v2609 = vld [vmem:[%s3 + $0x8] sm:$0xf]
      %v2610 = vld [vmem:[%s3 + $0xc] sm:$0xf]
      %v2611 = vld [vmem:[%s3 + $0x10] sm:$0xf]
      %v2612 = vld [vmem:[%s3 + $0x14] sm:$0xf]
      %v2613 = vld [vmem:[%s3 + $0x18] sm:$0xf]
      %v2614 = vld [vmem:[%s3 + $0x1c] sm:$0xf]
      %v2615 = vld [vmem:[%s3 + $0x20] sm:$0xf]
      %v2616 = vld [vmem:[%s3 + $0x24] sm:$0xf]
      %v2617 = vld [vmem:[%s3 + $0x28] sm:$0xf]
      %v2618 = vld [vmem:[%s3 + $0x2c] sm:$0xf]
      %v2619 = vld [vmem:[%s3 + $0x30] sm:$0xf]
      %v2620 = vld [vmem:[%s3 + $0x34] sm:$0xf]
      %v2621 = vld [vmem:[%s3 + $0x38] sm:$0xf]
      %v2622 = vld [vmem:[%s3 + $0x3c] sm:$0xf]
      %v2623 = vld [vmem:[%s3 + $0x40] sm:$0xf]
      %v2624 = vld [vmem:[%s3 + $0x44] sm:$0xf]
      %v2625 = vld [vmem:[%s3 + $0x48] sm:$0xf]
      %v2626 = vld [vmem:[%s3 + $0x4c] sm:$0xf]
      %v2627 = vld [vmem:[%s3 + $0x50] sm:$0xf]
      %v2628 = vld [vmem:[%s3 + $0x54] sm:$0xf]
      %v2629 = vld [vmem:[%s3 + $0x58] sm:$0xf]
      %v2630 = vld [vmem:[%s3 + $0x5c] sm:$0xf]
      %v2631 = vld [vmem:[%s3 + $0x60] sm:$0xf]
      %v2632 = vld [vmem:[%s3 + $0x64] sm:$0xf]
      %v2633 = vld [vmem:[%s3 + $0x68] sm:$0xf]
      %v2634 = vld [vmem:[%s3 + $0x6c] sm:$0xf]
      %v2635 = vld [vmem:[%s3 + $0x70] sm:$0xf]
      %v2636 = vld [vmem:[%s3 + $0x74] sm:$0xf]
      %v2637 = vld [vmem:[%s3 + $0x78] sm:$0xf]
      %v2638 = vld [vmem:[%s3 + $0x7c] sm:$0xf]
      %v2639 = vld [vmem:[%s3 + $0x80] sm:$0xf]
      %v2640 = vld [vmem:[%s3 + $0x84] sm:$0xf]
      %v2641 = vld [vmem:[%s3 + $0x88] sm:$0xf]
      %v2642 = vld [vmem:[%s3 + $0x8c] sm:$0xf]
      %v2643 = vld [vmem:[%s3 + $0x90] sm:$0xf]
      %v2644 = vld [vmem:[%s3 + $0x94] sm:$0xf]
      %v2645 = vld [vmem:[%s3 + $0x98] sm:$0xf]
      %v2646 = vld [vmem:[%s3 + $0x9c] sm:$0xf]
      %v2647 = vld [vmem:[%s3 + $0xa0] sm:$0xf]
      %v2648 = vld [vmem:[%s3 + $0xa4] sm:$0xf]
      %v2649 = vld [vmem:[%s3 + $0xa8] sm:$0xf]
      %v2650 = vld [vmem:[%s3 + $0xac] sm:$0xf]
      %v2651 = vld [vmem:[%s3 + $0xb0] sm:$0xf]
      %v2652 = vld [vmem:[%s3 + $0xb4] sm:$0xf]
      %v2653 = vld [vmem:[%s3 + $0xb8] sm:$0xf]
      %v2654 = vld [vmem:[%s3 + $0xbc] sm:$0xf]
      %v2655 = vld [vmem:[%s3 + $0xc0] sm:$0xf]
      %v2656 = vld [vmem:[%s3 + $0xc4] sm:$0xf]
      %v2657 = vld [vmem:[%s3 + $0xc8] sm:$0xf]
      %v2658 = vld [vmem:[%s3 + $0xcc] sm:$0xf]
      %v2659 = vld [vmem:[%s3 + $0xd0] sm:$0xf]
      %v2660 = vld [vmem:[%s3 + $0xd4] sm:$0xf]
      %v2661 = vld [vmem:[%s3 + $0xd8] sm:$0xf]
      %v2662 = vld [vmem:[%s3 + $0xdc] sm:$0xf]
      %v2663 = vld [vmem:[%s3 + $0xe0] sm:$0xf]
      %v2664 = vld [vmem:[%s3 + $0xe4] sm:$0xf]
      %v2665 = vld [vmem:[%s3 + $0xe8] sm:$0xf]
      %v2666 = vld [vmem:[%s3 + $0xec] sm:$0xf]
      %v2667 = vld [vmem:[%s3 + $0xf0] sm:$0xf]
      %v2668 = vld [vmem:[%s3 + $0xf4] sm:$0xf]
      %v2669 = vld [vmem:[%s3 + $0xf8] sm:$0xf]
      %v2670 = vld [vmem:[%s3 + $0xfc] sm:$0xf]
      %v2707 = vunpack.c.l.b16 %v2571
      %v2708 = vunpack.c.h.b16 %v2571
      %v2709 = vunpack.c.l.b16 %v2572
      %v2710 = vunpack.c.h.b16 %v2572
      %v2711 = vunpack.c.l.b16 %v2573
      %v2712 = vunpack.c.h.b16 %v2573
      %v2713 = vunpack.c.l.b16 %v2574
      %v2714 = vunpack.c.h.b16 %v2574
      %v2715 = vunpack.c.l.b16 %v2575
      %v2716 = vunpack.c.h.b16 %v2575
      %v2717 = vunpack.c.l.b16 %v2576
      %v2718 = vunpack.c.h.b16 %v2576
      %v2719 = vunpack.c.l.b16 %v2577
      %v2720 = vunpack.c.h.b16 %v2577
      %v2721 = vunpack.c.l.b16 %v2578
      %v2722 = vunpack.c.h.b16 %v2578
      %v2723 = vunpack.c.l.b16 %v2579
      %v2724 = vunpack.c.h.b16 %v2579
      %v2725 = vunpack.c.l.b16 %v2580
      %v2726 = vunpack.c.h.b16 %v2580
      %v2727 = vunpack.c.l.b16 %v2581
      %v2728 = vunpack.c.h.b16 %v2581
      %v2729 = vunpack.c.l.b16 %v2582
      %v2730 = vunpack.c.h.b16 %v2582
      %v2731 = vunpack.c.l.b16 %v2583
      %v2732 = vunpack.c.h.b16 %v2583
      %v2733 = vunpack.c.l.b16 %v2584
      %v2734 = vunpack.c.h.b16 %v2584
      %v2735 = vunpack.c.l.b16 %v2585
      %v2736 = vunpack.c.h.b16 %v2585
      %v2737 = vunpack.c.l.b16 %v2586
      %v2738 = vunpack.c.h.b16 %v2586
      %v2739 = vunpack.c.l.b16 %v2587
      %v2740 = vunpack.c.h.b16 %v2587
      %v2741 = vunpack.c.l.b16 %v2588
      %v2742 = vunpack.c.h.b16 %v2588
      %v2743 = vunpack.c.l.b16 %v2589
      %v2744 = vunpack.c.h.b16 %v2589
      %v2745 = vunpack.c.l.b16 %v2590
      %v2746 = vunpack.c.h.b16 %v2590
      %v2747 = vunpack.c.l.b16 %v2591
      %v2748 = vunpack.c.h.b16 %v2591
      %v2749 = vunpack.c.l.b16 %v2592
      %v2750 = vunpack.c.h.b16 %v2592
      %v2751 = vunpack.c.l.b16 %v2593
      %v2752 = vunpack.c.h.b16 %v2593
      %v2753 = vunpack.c.l.b16 %v2594
      %v2754 = vunpack.c.h.b16 %v2594
      %v2755 = vunpack.c.l.b16 %v2595
      %v2756 = vunpack.c.h.b16 %v2595
      %v2757 = vunpack.c.l.b16 %v2596
      %v2758 = vunpack.c.h.b16 %v2596
      %v2759 = vunpack.c.l.b16 %v2597
      %v2760 = vunpack.c.h.b16 %v2597
      %v2761 = vunpack.c.l.b16 %v2598
      %v2762 = vunpack.c.h.b16 %v2598
      %v2763 = vunpack.c.l.b16 %v2599
      %v2764 = vunpack.c.h.b16 %v2599
      %v2765 = vunpack.c.l.b16 %v2600
      %v2766 = vunpack.c.h.b16 %v2600
      %v2767 = vunpack.c.l.b16 %v2601
      %v2768 = vunpack.c.h.b16 %v2601
      %v2769 = vunpack.c.l.b16 %v2602
      %v2770 = vunpack.c.h.b16 %v2602
      %v2771 = vunpack.c.l.b16 %v2603
      %v2772 = vunpack.c.h.b16 %v2603
      %v2773 = vunpack.c.l.b16 %v2604
      %v2774 = vunpack.c.h.b16 %v2604
      %v2775 = vunpack.c.l.b16 %v2605
      %v2776 = vunpack.c.h.b16 %v2605
      %v2777 = vunpack.c.l.b16 %v2606
      %v2778 = vunpack.c.h.b16 %v2606
      %v2779 = vpack.c.b16 %v2711, %v2707
      %v2780 = vpack.c.b16 %v2712, %v2708
      %v2781 = vpack.c.b16 %v2713, %v2709
      %v2782 = vpack.c.b16 %v2714, %v2710
      %v2783 = vpack.c.b16 %v2719, %v2715
      %v2784 = vpack.c.b16 %v2720, %v2716
      %v2785 = vpack.c.b16 %v2721, %v2717
      %v2786 = vpack.c.b16 %v2722, %v2718
      %v2787 = vpack.c.b16 %v2727, %v2723
      %v2788 = vpack.c.b16 %v2728, %v2724
      %v2789 = vpack.c.b16 %v2729, %v2725
      %v2790 = vpack.c.b16 %v2730, %v2726
      %v2791 = vpack.c.b16 %v2735, %v2731
      %v2792 = vpack.c.b16 %v2736, %v2732
      %v2793 = vpack.c.b16 %v2737, %v2733
      %v2794 = vpack.c.b16 %v2738, %v2734
      %v2795 = vpack.c.b16 %v2743, %v2739
      %v2796 = vpack.c.b16 %v2744, %v2740
      %v2797 = vpack.c.b16 %v2745, %v2741
      %v2798 = vpack.c.b16 %v2746, %v2742
      %v2799 = vpack.c.b16 %v2751, %v2747
      %v2800 = vpack.c.b16 %v2752, %v2748
      %v2801 = vpack.c.b16 %v2753, %v2749
      %v2802 = vpack.c.b16 %v2754, %v2750
      %v2803 = vpack.c.b16 %v2759, %v2755
      %v2804 = vpack.c.b16 %v2760, %v2756
      %v2805 = vpack.c.b16 %v2761, %v2757
      %v2806 = vpack.c.b16 %v2762, %v2758
      %v2807 = vpack.c.b16 %v2767, %v2763
      %v2808 = vpack.c.b16 %v2768, %v2764
      %v2809 = vpack.c.b16 %v2769, %v2765
      %v2810 = vpack.c.b16 %v2770, %v2766
      %v2811 = vpack.c.b16 %v2775, %v2771
      %v2812 = vpack.c.b16 %v2776, %v2772
      %v2813 = vpack.c.b16 %v2777, %v2773
      %v2814 = vpack.c.b16 %v2778, %v2774
      %v2915 = vunpack.c.l.b16 %v2607
      %v2916 = vunpack.c.l.b16 %v2608
      %v2917 = vunpack.c.l.b16 %v2609
      %v2918 = vunpack.c.l.b16 %v2610
      %v2919 = vunpack.c.l.b16 %v2611
      %v2920 = vunpack.c.l.b16 %v2612
      %v2921 = vunpack.c.l.b16 %v2613
      %v2922 = vunpack.c.l.b16 %v2614
      %v2923 = vunpack.c.l.b16 %v2615
      %v2924 = vunpack.c.l.b16 %v2616
      %v2925 = vunpack.c.l.b16 %v2617
      %v2926 = vunpack.c.l.b16 %v2618
      %v2927 = vunpack.c.l.b16 %v2619
      %v2928 = vunpack.c.l.b16 %v2620
      %v2929 = vunpack.c.l.b16 %v2621
      %v2930 = vunpack.c.l.b16 %v2622
      %v2931 = vunpack.c.l.b16 %v2623
      %v2932 = vunpack.c.l.b16 %v2624
      %v2933 = vunpack.c.l.b16 %v2625
      %v2934 = vunpack.c.l.b16 %v2626
      %v2935 = vunpack.c.l.b16 %v2627
      %v2936 = vunpack.c.l.b16 %v2628
      %v2937 = vunpack.c.l.b16 %v2629
      %v2938 = vunpack.c.l.b16 %v2630
      %v2939 = vunpack.c.l.b16 %v2631
      %v2940 = vunpack.c.l.b16 %v2632
      %v2941 = vunpack.c.l.b16 %v2633
      %v2942 = vunpack.c.l.b16 %v2634
      %v2943 = vunpack.c.l.b16 %v2635
      %v2944 = vunpack.c.l.b16 %v2636
      %v2945 = vunpack.c.l.b16 %v2637
      %v2946 = vunpack.c.l.b16 %v2638
      %v2947 = vunpack.c.l.b16 %v2639
      %v2948 = vunpack.c.l.b16 %v2640
      %v2949 = vunpack.c.l.b16 %v2641
      %v2950 = vunpack.c.l.b16 %v2642
      %v2951 = vunpack.c.l.b16 %v2643
      %v2952 = vunpack.c.l.b16 %v2644
      %v2953 = vunpack.c.l.b16 %v2645
      %v2954 = vunpack.c.l.b16 %v2646
      %v2955 = vunpack.c.l.b16 %v2647
      %v2956 = vunpack.c.l.b16 %v2648
      %v2957 = vunpack.c.l.b16 %v2649
      %v2958 = vunpack.c.l.b16 %v2650
      %v2959 = vunpack.c.l.b16 %v2651
      %v2960 = vunpack.c.l.b16 %v2652
      %v2961 = vunpack.c.l.b16 %v2653
      %v2962 = vunpack.c.l.b16 %v2654
      %v2963 = vunpack.c.l.b16 %v2655
      %v2964 = vunpack.c.l.b16 %v2656
      %v2965 = vunpack.c.l.b16 %v2657
      %v2966 = vunpack.c.l.b16 %v2658
      %v2967 = vunpack.c.l.b16 %v2659
      %v2968 = vunpack.c.l.b16 %v2660
      %v2969 = vunpack.c.l.b16 %v2661
      %v2970 = vunpack.c.l.b16 %v2662
      %v2971 = vunpack.c.l.b16 %v2663
      %v2972 = vunpack.c.l.b16 %v2664
      %v2973 = vunpack.c.l.b16 %v2665
      %v2974 = vunpack.c.l.b16 %v2666
      %v2975 = vunpack.c.l.b16 %v2667
      %v2976 = vunpack.c.l.b16 %v2668
      %v2977 = vunpack.c.l.b16 %v2669
      %v2978 = vunpack.c.l.b16 %v2670
      %v2979 = vpack.c.b16 %v2916, %v2915
      %v2980 = vpack.c.b16 %v2918, %v2917
      %v2981 = vpack.c.b16 %v2920, %v2919
      %v2982 = vpack.c.b16 %v2922, %v2921
      %v2983 = vpack.c.b16 %v2924, %v2923
      %v2984 = vpack.c.b16 %v2926, %v2925
      %v2985 = vpack.c.b16 %v2928, %v2927
      %v2986 = vpack.c.b16 %v2930, %v2929
      %v2987 = vpack.c.b16 %v2932, %v2931
      %v2988 = vpack.c.b16 %v2934, %v2933
      %v2989 = vpack.c.b16 %v2936, %v2935
      %v2990 = vpack.c.b16 %v2938, %v2937
      %v2991 = vpack.c.b16 %v2940, %v2939
      %v2992 = vpack.c.b16 %v2942, %v2941
      %v2993 = vpack.c.b16 %v2944, %v2943
      %v2994 = vpack.c.b16 %v2946, %v2945
      %v2995 = vpack.c.b16 %v2948, %v2947
      %v2996 = vpack.c.b16 %v2950, %v2949
      %v2997 = vpack.c.b16 %v2952, %v2951
      %v2998 = vpack.c.b16 %v2954, %v2953
      %v2999 = vpack.c.b16 %v2956, %v2955
      %v3000 = vpack.c.b16 %v2958, %v2957
      %v3001 = vpack.c.b16 %v2960, %v2959
      %v3002 = vpack.c.b16 %v2962, %v2961
      %v3003 = vpack.c.b16 %v2964, %v2963
      %v3004 = vpack.c.b16 %v2966, %v2965
      %v3005 = vpack.c.b16 %v2968, %v2967
      %v3006 = vpack.c.b16 %v2970, %v2969
      %v3007 = vpack.c.b16 %v2972, %v2971
      %v3008 = vpack.c.b16 %v2974, %v2973
      %v3009 = vpack.c.b16 %v2976, %v2975
      %v3010 = vpack.c.b16 %v2978, %v2977
      %3043 = vmatprep.subr.bf16.mxu0 0
      %3044 = vmatpush1.bf16.msra.mxu0 %v2986
      %3045 = vmatprep.subr.bf16.mxu0 0
      %3046 = vmatpush1.bf16.msra.mxu0 %v2985
      %3047 = vmatprep.subr.bf16.mxu0 0
      %3048 = vmatpush1.bf16.msra.mxu0 %v2984
      %3049 = vmatprep.subr.bf16.mxu0 0
      %3050 = vmatpush1.bf16.msra.mxu0 %v2983
      %3051 = vmatprep.subr.bf16.mxu0 0
      %3052 = vmatpush1.bf16.msra.mxu0 %v2982
      %3053 = vmatprep.subr.bf16.mxu0 0
      %3054 = vmatpush1.bf16.msra.mxu0 %v2981
      %3055 = vmatprep.subr.bf16.mxu0 0
      %3056 = vmatpush1.bf16.msra.mxu0 %v2980
      %3057 = vmatprep.subr.bf16.mxu0 0
      %3058 = vmatpush1.bf16.msra.mxu0 %v2979
      %3059 = vmatprep.subr.bf16.mxu0 0
      %3060 = vmatpush2.bf16.msra.mxu0 %v2994
      %3061 = vmatprep.subr.bf16.mxu0 0
      %3062 = vmatpush2.bf16.msra.mxu0 %v2993
      %3063 = vmatprep.subr.bf16.mxu0 0
      %3064 = vmatpush2.bf16.msra.mxu0 %v2992
      %3065 = vmatprep.subr.bf16.mxu0 0
      %3066 = vmatpush2.bf16.msra.mxu0 %v2991
      %3067 = vmatprep.subr.bf16.mxu0 0
      %3068 = vmatpush2.bf16.msra.mxu0 %v2990
      %3069 = vmatprep.subr.bf16.mxu0 0
      %3070 = vmatpush2.bf16.msra.mxu0 %v2989
      %3071 = vmatprep.subr.bf16.mxu0 0
      %3072 = vmatpush2.bf16.msra.mxu0 %v2988
      %3073 = vmatprep.subr.bf16.mxu0 0
      %3074 = vmatpush2.bf16.msra.mxu0 %v2987
      %3075 = vmatprep.mubr.bf16.mxu0 %v2780
      %3076 = vmatmul.mubr.bf16.gmra.mxu0 %v2779
      %v3077 = vpop.f32.mrf.mxu0
      %v3078 = vadd.f32 0.0, %v3077
      %v3079 = vpop.f32.mrf.mxu0
      %v3080 = vpop.f32.mrf.mxu0
      %v3081 = vadd.f32 0.0, %v3080
      %v3082 = vpop.f32.mrf.mxu0
      %3083 = vmatprep.mubr.bf16.mxu0 %v2784
      %3084 = vmatmul.mubr.bf16.gmra.mxu0 %v2783
      %v3085 = vpop.f32.mrf.mxu0
      %v3086 = vadd.f32 0.0, %v3085
      %v3087 = vpop.f32.mrf.mxu0
      %v3088 = vpop.f32.mrf.mxu0
      %v3089 = vadd.f32 0.0, %v3088
      %v3090 = vpop.f32.mrf.mxu0
      %3091 = vmatprep.mubr.bf16.mxu0 %v2788
      %3092 = vmatmul.mubr.bf16.gmra.mxu0 %v2787
      %v3093 = vpop.f32.mrf.mxu0
      %v3094 = vadd.f32 0.0, %v3093
      %v3095 = vpop.f32.mrf.mxu0
      %v3096 = vpop.f32.mrf.mxu0
      %v3097 = vadd.f32 0.0, %v3096
      %v3098 = vpop.f32.mrf.mxu0
      %3099 = vmatprep.mubr.bf16.mxu0 %v2792
      %3100 = vmatmul.mubr.bf16.gmra.mxu0 %v2791
      %v3101 = vpop.f32.mrf.mxu0
      %v3102 = vadd.f32 0.0, %v3101
      %v3103 = vpop.f32.mrf.mxu0
      %v3104 = vpop.f32.mrf.mxu0
      %v3105 = vadd.f32 0.0, %v3104
      %v3106 = vpop.f32.mrf.mxu0
      %3107 = vmatprep.mubr.bf16.mxu0 %v2796
      %3108 = vmatmul.mubr.bf16.gmra.mxu0 %v2795
      %v3109 = vpop.f32.mrf.mxu0
      %v3110 = vadd.f32 0.0, %v3109
      %v3111 = vpop.f32.mrf.mxu0
      %v3112 = vpop.f32.mrf.mxu0
      %v3113 = vadd.f32 0.0, %v3112
      %v3114 = vpop.f32.mrf.mxu0
      %3115 = vmatprep.mubr.bf16.mxu0 %v2800
      %3116 = vmatmul.mubr.bf16.gmra.mxu0 %v2799
      %v3117 = vpop.f32.mrf.mxu0
      %v3118 = vadd.f32 0.0, %v3117
      %v3119 = vpop.f32.mrf.mxu0
      %v3120 = vpop.f32.mrf.mxu0
      %v3121 = vadd.f32 0.0, %v3120
      %v3122 = vpop.f32.mrf.mxu0
      %3123 = vmatprep.mubr.bf16.mxu0 %v2804
      %3124 = vmatmul.mubr.bf16.gmra.mxu0 %v2803
      %v3125 = vpop.f32.mrf.mxu0
      %v3126 = vadd.f32 0.0, %v3125
      %v3127 = vpop.f32.mrf.mxu0
      %v3128 = vpop.f32.mrf.mxu0
      %v3129 = vadd.f32 0.0, %v3128
      %v3130 = vpop.f32.mrf.mxu0
      %3131 = vmatprep.mubr.bf16.mxu0 %v2808
      %3132 = vmatmul.mubr.bf16.gmra.mxu0 %v2807
      %v3133 = vpop.f32.mrf.mxu0
      %v3134 = vadd.f32 0.0, %v3133
      %v3135 = vpop.f32.mrf.mxu0
      %v3136 = vpop.f32.mrf.mxu0
      %v3137 = vadd.f32 0.0, %v3136
      %v3138 = vpop.f32.mrf.mxu0
      %3139 = vmatprep.mubr.bf16.mxu0 %v2812
      %3140 = vmatmul.mubr.bf16.gmra.mxu0 %v2811
      %v3141 = vpop.f32.mrf.mxu0
      %v3142 = vadd.f32 0.0, %v3141
      %v3143 = vpop.f32.mrf.mxu0
      %v3144 = vpop.f32.mrf.mxu0
      %v3145 = vadd.f32 0.0, %v3144
      %v3146 = vpop.f32.mrf.mxu0
      %3147 = vdwg.mxu0
      %3148 = vmatprep.subr.bf16.mxu0 0
      %3149 = vmatpush1.bf16.msra.mxu0 %v3002
      %3150 = vmatprep.subr.bf16.mxu0 0
      %3151 = vmatpush1.bf16.msra.mxu0 %v3001
      %3152 = vmatprep.subr.bf16.mxu0 0
      %3153 = vmatpush1.bf16.msra.mxu0 %v3000
      %3154 = vmatprep.subr.bf16.mxu0 0
      %3155 = vmatpush1.bf16.msra.mxu0 %v2999
      %3156 = vmatprep.subr.bf16.mxu0 0
      %3157 = vmatpush1.bf16.msra.mxu0 %v2998
      %3158 = vmatprep.subr.bf16.mxu0 0
      %3159 = vmatpush1.bf16.msra.mxu0 %v2997
      %3160 = vmatprep.subr.bf16.mxu0 0
      %3161 = vmatpush1.bf16.msra.mxu0 %v2996
      %3162 = vmatprep.subr.bf16.mxu0 0
      %3163 = vmatpush1.bf16.msra.mxu0 %v2995
      %3164 = vmatprep.subr.bf16.mxu0 0
      %3165 = vmatpush2.bf16.msra.mxu0 %v3010
      %3166 = vmatprep.subr.bf16.mxu0 0
      %3167 = vmatpush2.bf16.msra.mxu0 %v3009
      %3168 = vmatprep.subr.bf16.mxu0 0
      %3169 = vmatpush2.bf16.msra.mxu0 %v3008
      %3170 = vmatprep.subr.bf16.mxu0 0
      %3171 = vmatpush2.bf16.msra.mxu0 %v3007
      %3172 = vmatprep.subr.bf16.mxu0 0
      %3173 = vmatpush2.bf16.msra.mxu0 %v3006
      %3174 = vmatprep.subr.bf16.mxu0 0
      %3175 = vmatpush2.bf16.msra.mxu0 %v3005
      %3176 = vmatprep.subr.bf16.mxu0 0
      %3177 = vmatpush2.bf16.msra.mxu0 %v3004
      %3178 = vmatprep.subr.bf16.mxu0 0
      %3179 = vmatpush2.bf16.msra.mxu0 %v3003
      %3180 = vmatprep.mubr.bf16.mxu0 %v2782
      %3181 = vmatmul.mubr.bf16.gmra.mxu0 %v2781
      %v3182 = vpop.f32.mrf.mxu0
      %v3183 = vadd.f32 %v3078, %v3182
      %v3184 = vpop.f32.mrf.mxu0
      %v3185 = vpop.f32.mrf.mxu0
      %v3186 = vadd.f32 %v3081, %v3185
      %v3187 = vpop.f32.mrf.mxu0
      %3188 = vmatprep.mubr.bf16.mxu0 %v2786
      %3189 = vmatmul.mubr.bf16.gmra.mxu0 %v2785
      %v3190 = vpop.f32.mrf.mxu0
      %v3191 = vadd.f32 %v3086, %v3190
      %v3192 = vpop.f32.mrf.mxu0
      %v3193 = vpop.f32.mrf.mxu0
      %v3194 = vadd.f32 %v3089, %v3193
      %v3195 = vpop.f32.mrf.mxu0
      %3196 = vmatprep.mubr.bf16.mxu0 %v2790
      %3197 = vmatmul.mubr.bf16.gmra.mxu0 %v2789
      %v3198 = vpop.f32.mrf.mxu0
      %v3199 = vadd.f32 %v3094, %v3198
      %v3200 = vpop.f32.mrf.mxu0
      %v3201 = vpop.f32.mrf.mxu0
      %v3202 = vadd.f32 %v3097, %v3201
      %v3203 = vpop.f32.mrf.mxu0
      %3204 = vmatprep.mubr.bf16.mxu0 %v2794
      %3205 = vmatmul.mubr.bf16.gmra.mxu0 %v2793
      %v3206 = vpop.f32.mrf.mxu0
      %v3207 = vadd.f32 %v3102, %v3206
      %v3208 = vpop.f32.mrf.mxu0
      %v3209 = vpop.f32.mrf.mxu0
      %v3210 = vadd.f32 %v3105, %v3209
      %v3211 = vpop.f32.mrf.mxu0
      %3212 = vmatprep.mubr.bf16.mxu0 %v2798
      %3213 = vmatmul.mubr.bf16.gmra.mxu0 %v2797
      %v3214 = vpop.f32.mrf.mxu0
      %v3215 = vadd.f32 %v3110, %v3214
      %v3216 = vpop.f32.mrf.mxu0
      %v3217 = vpop.f32.mrf.mxu0
      %v3218 = vadd.f32 %v3113, %v3217
      %v3219 = vpop.f32.mrf.mxu0
      %3220 = vmatprep.mubr.bf16.mxu0 %v2802
      %3221 = vmatmul.mubr.bf16.gmra.mxu0 %v2801
      %v3222 = vpop.f32.mrf.mxu0
      %v3223 = vadd.f32 %v3118, %v3222
      %v3224 = vpop.f32.mrf.mxu0
      %v3225 = vpop.f32.mrf.mxu0
      %v3226 = vadd.f32 %v3121, %v3225
      %v3227 = vpop.f32.mrf.mxu0
      %3228 = vmatprep.mubr.bf16.mxu0 %v2806
      %3229 = vmatmul.mubr.bf16.gmra.mxu0 %v2805
      %v3230 = vpop.f32.mrf.mxu0
      %v3231 = vadd.f32 %v3126, %v3230
      %v3232 = vpop.f32.mrf.mxu0
      %v3233 = vpop.f32.mrf.mxu0
      %v3234 = vadd.f32 %v3129, %v3233
      %v3235 = vpop.f32.mrf.mxu0
      %3236 = vmatprep.mubr.bf16.mxu0 %v2810
      %3237 = vmatmul.mubr.bf16.gmra.mxu0 %v2809
      %v3238 = vpop.f32.mrf.mxu0
      %v3239 = vadd.f32 %v3134, %v3238
      %v3240 = vpop.f32.mrf.mxu0
      %v3241 = vpop.f32.mrf.mxu0
      %v3242 = vadd.f32 %v3137, %v3241
      %v3243 = vpop.f32.mrf.mxu0
      %3244 = vmatprep.mubr.bf16.mxu0 %v2814
      %3245 = vmatmul.mubr.bf16.gmra.mxu0 %v2813
      %v3246 = vpop.f32.mrf.mxu0
      %v3247 = vadd.f32 %v3142, %v3246
      %v3248 = vpop.f32.mrf.mxu0
      %v3249 = vpop.f32.mrf.mxu0
      %v3250 = vadd.f32 %v3145, %v3249
      %v3251 = vpop.f32.mrf.mxu0
      %3252 = vdwg.mxu0
      %v3253 = vpack.c.bf16 %v3186, %v3183
      %v3254 = vpack.c.bf16 %v3194, %v3191
      %v3255 = vpack.c.bf16 %v3202, %v3199
      %v3256 = vpack.c.bf16 %v3210, %v3207
      %v3257 = vpack.c.bf16 %v3218, %v3215
      %v3258 = vpack.c.bf16 %v3226, %v3223
      %v3259 = vpack.c.bf16 %v3234, %v3231
      %v3260 = vpack.c.bf16 %v3242, %v3239
      %v3261 = vpack.c.bf16 %v3250, %v3247
      %v3262 = vld [vmem:[%s7] sm:$0xff]
      %v3263 = vld [vmem:[%s7 + $0x8] sm:$0xff]
      %v3264 = vld [vmem:[%s7 + $0x10] sm:$0xff]
      %v3265 = vld [vmem:[%s7 + $0x18] sm:$0xff]
      %v3266 = vld [vmem:[%s8] sm:$0xff]
      %v3267 = vld [vmem:[%s8 + $0x8] sm:$0xff]
      %v3268 = vld [vmem:[%s8 + $0x10] sm:$0xff]
      %v3269 = vld [vmem:[%s8 + $0x18] sm:$0xff]
      %3271 = vset.pattern.permute.xlu0 0
      %3272 = vperm.xlu0 %3271, %v3266
      %v3273 = vpop.permute.xlu0 %3272
      %3276 = vset.pattern.permute.xlu0 0
      %3277 = vperm.xlu0 %3276, %v3267
      %v3278 = vpop.permute.xlu0 %3277
      %3281 = vset.pattern.permute.xlu0 0
      %3282 = vperm.xlu0 %3281, %v3268
      %v3283 = vpop.permute.xlu0 %3282
      %3286 = vset.pattern.permute.xlu0 0
      %3287 = vperm.xlu0 %3286, %v3269
      %v3288 = vpop.permute.xlu0 %3287
      %v3294 = vunpack.c.l.b16 %v3262
      %v3295 = vunpack.c.h.b16 %v3262
      %v3296 = vunpack.c.l.b16 %v3263
      %v3297 = vunpack.c.h.b16 %v3263
      %v3298 = vunpack.c.l.b16 %v3264
      %v3299 = vunpack.c.h.b16 %v3264
      %v3300 = vunpack.c.l.b16 %v3265
      %v3301 = vunpack.c.h.b16 %v3265
      %v3302 = vpack.c.b16 %v3296, %v3294
      %v3303 = vpack.c.b16 %v3297, %v3295
      %v3304 = vpack.c.b16 %v3300, %v3298
      %v3305 = vpack.c.b16 %v3301, %v3299
      %v3309 = vsel %vm606, %v3303, 0
      %v3312 = vsel %vm606, %v3305, 0
      %3314 = vmatprep.subr.bf16.mxu0 0
      %3315 = vmatpush1.bf16.msra.mxu0 %v3260
      %3316 = vmatprep.subr.bf16.mxu0 0
      %3317 = vmatpush1.bf16.msra.mxu0 %v3259
      %3318 = vmatprep.subr.bf16.mxu0 0
      %3319 = vmatpush1.bf16.msra.mxu0 %v3258
      %3320 = vmatprep.subr.bf16.mxu0 0
      %3321 = vmatpush1.bf16.msra.mxu0 %v3257
      %3322 = vmatprep.subr.bf16.mxu0 0
      %3323 = vmatpush1.bf16.msra.mxu0 %v3256
      %3324 = vmatprep.subr.bf16.mxu0 0
      %3325 = vmatpush1.bf16.msra.mxu0 %v3255
      %3326 = vmatprep.subr.bf16.mxu0 0
      %3327 = vmatpush1.bf16.msra.mxu0 %v3254
      %3328 = vmatprep.subr.bf16.mxu0 0
      %3329 = vmatpush1.bf16.msra.mxu0 %v3253
      %3330 = vmatprep.subr.bf16.mxu0 0
      %3331 = vmatpush2.bf16.msra.mxu0 0
      %3332 = vmatprep.subr.bf16.mxu0 0
      %3333 = vmatpush2.bf16.msra.mxu0 0
      %3334 = vmatprep.subr.bf16.mxu0 0
      %3335 = vmatpush2.bf16.msra.mxu0 0
      %3336 = vmatprep.subr.bf16.mxu0 0
      %3337 = vmatpush2.bf16.msra.mxu0 0
      %3338 = vmatprep.subr.bf16.mxu0 0
      %3339 = vmatpush2.bf16.msra.mxu0 0
      %3340 = vmatprep.subr.bf16.mxu0 0
      %3341 = vmatpush2.bf16.msra.mxu0 0
      %3342 = vmatprep.subr.bf16.mxu0 0
      %3343 = vmatpush2.bf16.msra.mxu0 0
      %3344 = vmatprep.subr.bf16.mxu0 0
      %3345 = vmatpush2.bf16.msra.mxu0 %v3261
      %3346 = vmatprep.mubr.bf16.mxu0 %v3309
      %3347 = vmatmul.mubr.bf16.gmra.mxu0 %v3302
      %v3348 = vpop.f32.mrf.mxu0
      %v3349 = vadd.f32 %v3273, %v3348
      %v3350 = vpop.f32.mrf.mxu0
      %v3351 = vpop.f32.mrf.mxu0
      %v3352 = vadd.f32 %v3278, %v3351
      %v3353 = vpop.f32.mrf.mxu0
      %3354 = vmatprep.mubr.bf16.mxu0 %v3312
      %3355 = vmatmul.mubr.bf16.gmra.mxu0 %v3304
      %v3356 = vpop.f32.mrf.mxu0
      %v3357 = vadd.f32 %v3283, %v3356
      %v3358 = vpop.f32.mrf.mxu0
      %v3359 = vpop.f32.mrf.mxu0
      %v3360 = vadd.f32 %v3288, %v3359
      %v3361 = vpop.f32.mrf.mxu0
      %3362 = vdwg.mxu0
      %v3363 = vmax.f32 %v3349, 0.0
      %v3364 = vmax.f32 %v3352, 0.0
      %v3365 = vmax.f32 %v3357, 0.0
      %v3366 = vmax.f32 %v3360, 0.0
      %v3367 = vpack.c.bf16 %v3364, %v3363
      %v3368 = vpack.c.bf16 %v3366, %v3365
      %v3369 = vld [vmem:[%s2] sm:$0x1]
      %v3370 = vpack.c.bf16 %v3369, %v3369
      %3373 = vrot.lane.b32.xlu0 %v3367, 9
      %v3374 = vpop.permute.xlu0 %3373
      %3375 = vrot.lane.b32.xlu0 %v3368, 9
      %v3376 = vpop.permute.xlu0 %3375
      %vm3377 = vcmask 72704
      %v3379 = vsel %vm3377, 0, %v3374
      %v3382 = vsel %vm3377, 0, %v3376
      %v3385 = vpack.i.b16 %v3370, %v3370
      %v3387 = vlaneseq
      %v3388 = vshrl.u32 %v3387, 7
      %v3389 = vsub.s32 0, %v3388
      %v3390 = vrot.slane %v3385, %v3389
      %v3391 = vmul.bf16 %v3379, %v3390
      %v3392 = vmul.bf16 %v3382, %v3390
      %v3395 = vunpack.c.l.b16 %v3391
      %v3396 = vunpack.c.h.b16 %v3391
      %v3397 = vunpack.c.l.b16 %v3392
      %v3398 = vunpack.c.h.b16 %v3392
      %v3399 = vpack.c.b16 %v3395, %v3395
      %v3400 = vpack.c.b16 %v3396, %v3396
      %v3401 = vpack.c.b16 %v3397, %v3397
      %v3402 = vpack.c.b16 %v3398, %v3398
      %3407 = vst [vmem:[#allocation3] sm:$0xf] %v3399
      %3408 = vst [vmem:[#allocation3 + $0x4] sm:$0xf] %v3400
      %3409 = vst [vmem:[#allocation3 + $0x8] sm:$0xf] %v3401
      %3410 = vst [vmem:[#allocation3 + $0xc] sm:$0xf] %v3402
      %v3411 = vld [vmem:[%s2 + $0x1] sm:$0x1]
      %v3412 = vpack.c.bf16 %v3411, %v3411
      %3413 = vrot.lane.b32.xlu0 %v3367, 8
      %v3414 = vpop.permute.xlu0 %3413
      %3415 = vrot.lane.b32.xlu0 %v3368, 8
      %v3416 = vpop.permute.xlu0 %3415
      %vm3417 = vcmask 64512
      %v3419 = vsel %vm3417, 0, %v3414
      %v3422 = vsel %vm3417, 0, %v3416
      %v3425 = vpack.i.b16 %v3412, %v3412
      %v3427 = vlaneseq
      %v3428 = vshrl.u32 %v3427, 7
      %v3429 = vsub.s32 0, %v3428
      %v3430 = vrot.slane %v3425, %v3429
      %v3431 = vmul.bf16 %v3419, %v3430
      %v3432 = vmul.bf16 %v3422, %v3430
      %v3435 = vunpack.c.l.b16 %v3431
      %v3436 = vunpack.c.h.b16 %v3431
      %v3437 = vunpack.c.l.b16 %v3432
      %v3438 = vunpack.c.h.b16 %v3432
      %v3439 = vpack.c.b16 %v3435, %v3435
      %v3440 = vpack.c.b16 %v3436, %v3436
      %v3441 = vpack.c.b16 %v3437, %v3437
      %v3442 = vpack.c.b16 %v3438, %v3438
      %3447 = vst [vmem:[#allocation3 + $0x10] sm:$0xf] %v3439
      %3448 = vst [vmem:[#allocation3 + $0x14] sm:$0xf] %v3440
      %3449 = vst [vmem:[#allocation3 + $0x18] sm:$0xf] %v3441
      %3450 = vst [vmem:[#allocation3 + $0x1c] sm:$0xf] %v3442
      %v3451 = vld [vmem:[%s2 + $0x2] sm:$0x1]
      %v3452 = vpack.c.bf16 %v3451, %v3451
      %3453 = vrot.lane.b32.xlu0 %v3367, 7
      %v3454 = vpop.permute.xlu0 %3453
      %3455 = vrot.lane.b32.xlu0 %v3368, 7
      %v3456 = vpop.permute.xlu0 %3455
      %vm3457 = vcmask 56320
      %v3459 = vsel %vm3457, 0, %v3454
      %v3462 = vsel %vm3457, 0, %v3456
      %v3465 = vpack.i.b16 %v3452, %v3452
      %v3467 = vlaneseq
      %v3468 = vshrl.u32 %v3467, 7
      %v3469 = vsub.s32 0, %v3468
      %v3470 = vrot.slane %v3465, %v3469
      %v3471 = vmul.bf16 %v3459, %v3470
      %v3472 = vmul.bf16 %v3462, %v3470
      %v3475 = vunpack.c.l.b16 %v3471
      %v3476 = vunpack.c.h.b16 %v3471
      %v3477 = vunpack.c.l.b16 %v3472
      %v3478 = vunpack.c.h.b16 %v3472
      %v3479 = vpack.c.b16 %v3475, %v3475
      %v3480 = vpack.c.b16 %v3476, %v3476
      %v3481 = vpack.c.b16 %v3477, %v3477
      %v3482 = vpack.c.b16 %v3478, %v3478
      %3487 = vst [vmem:[#allocation3 + $0x20] sm:$0xf] %v3479
      %3488 = vst [vmem:[#allocation3 + $0x24] sm:$0xf] %v3480
      %3489 = vst [vmem:[#allocation3 + $0x28] sm:$0xf] %v3481
      %3490 = vst [vmem:[#allocation3 + $0x2c] sm:$0xf] %v3482
      %v3491 = vld [vmem:[%s2 + $0x3] sm:$0x1]
      %v3492 = vpack.c.bf16 %v3491, %v3491
      %3493 = vrot.lane.b32.xlu0 %v3367, 1
      %v3494 = vpop.permute.xlu0 %3493
      %3495 = vrot.lane.b32.xlu0 %v3368, 1
      %v3496 = vpop.permute.xlu0 %3495
      %v3498 = vsel %vm810, 0, %v3494
      %v3501 = vsel %vm810, 0, %v3496
      %v3504 = vpack.i.b16 %v3492, %v3492
      %v3506 = vlaneseq
      %v3507 = vshrl.u32 %v3506, 7
      %v3508 = vsub.s32 0, %v3507
      %v3509 = vrot.slane %v3504, %v3508
      %v3510 = vmul.bf16 %v3498, %v3509
      %v3511 = vmul.bf16 %v3501, %v3509
      %v3514 = vunpack.c.l.b16 %v3510
      %v3515 = vunpack.c.h.b16 %v3510
      %v3516 = vunpack.c.l.b16 %v3511
      %v3517 = vunpack.c.h.b16 %v3511
      %v3518 = vpack.c.b16 %v3514, %v3514
      %v3519 = vpack.c.b16 %v3515, %v3515
      %v3520 = vpack.c.b16 %v3516, %v3516
      %v3521 = vpack.c.b16 %v3517, %v3517
      %3526 = vst [vmem:[#allocation3 + $0x30] sm:$0xf] %v3518
      %3527 = vst [vmem:[#allocation3 + $0x34] sm:$0xf] %v3519
      %3528 = vst [vmem:[#allocation3 + $0x38] sm:$0xf] %v3520
      %3529 = vst [vmem:[#allocation3 + $0x3c] sm:$0xf] %v3521
      %v3530 = vld [vmem:[%s2 + $0x4] sm:$0x1]
      %v3531 = vpack.c.bf16 %v3530, %v3530
      %v3533 = vpack.i.b16 %v3531, %v3531
      %v3535 = vlaneseq
      %v3536 = vshrl.u32 %v3535, 7
      %v3537 = vsub.s32 0, %v3536
      %v3538 = vrot.slane %v3533, %v3537
      %v3539 = vmul.bf16 %v3367, %v3538
      %v3540 = vmul.bf16 %v3368, %v3538
      %v3543 = vunpack.c.l.b16 %v3539
      %v3544 = vunpack.c.h.b16 %v3539
      %v3545 = vunpack.c.l.b16 %v3540
      %v3546 = vunpack.c.h.b16 %v3540
      %v3547 = vpack.c.b16 %v3543, %v3543
      %v3548 = vpack.c.b16 %v3544, %v3544
      %v3549 = vpack.c.b16 %v3545, %v3545
      %v3550 = vpack.c.b16 %v3546, %v3546
      %3555 = vst [vmem:[#allocation3 + $0x40] sm:$0xf] %v3547
      %3556 = vst [vmem:[#allocation3 + $0x44] sm:$0xf] %v3548
      %3557 = vst [vmem:[#allocation3 + $0x48] sm:$0xf] %v3549
      %3558 = vst [vmem:[#allocation3 + $0x4c] sm:$0xf] %v3550
      %v3559 = vld [vmem:[%s2 + $0x5] sm:$0x1]
      %v3560 = vpack.c.bf16 %v3559, %v3559
      %3561 = vrot.lane.b32.xlu0 %v3367, 127
      %v3562 = vpop.permute.xlu0 %3561
      %3563 = vrot.lane.b32.xlu0 %v3368, 127
      %v3564 = vpop.permute.xlu0 %3563
      %v3566 = vsel %vm987, %v3562, 0
      %v3569 = vsel %vm987, %v3564, 0
      %v3572 = vpack.i.b16 %v3560, %v3560
      %v3574 = vlaneseq
      %v3575 = vshrl.u32 %v3574, 7
      %v3576 = vsub.s32 0, %v3575
      %v3577 = vrot.slane %v3572, %v3576
      %v3578 = vmul.bf16 %v3566, %v3577
      %v3579 = vmul.bf16 %v3569, %v3577
      %v3582 = vunpack.c.l.b16 %v3578
      %v3583 = vunpack.c.h.b16 %v3578
      %v3584 = vunpack.c.l.b16 %v3579
      %v3585 = vunpack.c.h.b16 %v3579
      %v3586 = vpack.c.b16 %v3582, %v3582
      %v3587 = vpack.c.b16 %v3583, %v3583
      %v3588 = vpack.c.b16 %v3584, %v3584
      %v3589 = vpack.c.b16 %v3585, %v3585
      %3594 = vst [vmem:[#allocation3 + $0x50] sm:$0xf] %v3586
      %3595 = vst [vmem:[#allocation3 + $0x54] sm:$0xf] %v3587
      %3596 = vst [vmem:[#allocation3 + $0x58] sm:$0xf] %v3588
      %3597 = vst [vmem:[#allocation3 + $0x5c] sm:$0xf] %v3589
      %v3598 = vld [vmem:[%s2 + $0x6] sm:$0x1]
      %v3599 = vpack.c.bf16 %v3598, %v3598
      %3600 = vrot.lane.b32.xlu0 %v3367, 121
      %v3601 = vpop.permute.xlu0 %3600
      %3602 = vrot.lane.b32.xlu0 %v3368, 121
      %v3603 = vpop.permute.xlu0 %3602
      %vm3604 = vcmask 990208
      %v3606 = vsel %vm3604, %v3601, 0
      %v3609 = vsel %vm3604, %v3603, 0
      %v3612 = vpack.i.b16 %v3599, %v3599
      %v3614 = vlaneseq
      %v3615 = vshrl.u32 %v3614, 7
      %v3616 = vsub.s32 0, %v3615
      %v3617 = vrot.slane %v3612, %v3616
      %v3618 = vmul.bf16 %v3606, %v3617
      %v3619 = vmul.bf16 %v3609, %v3617
      %v3622 = vunpack.c.l.b16 %v3618
      %v3623 = vunpack.c.h.b16 %v3618
      %v3624 = vunpack.c.l.b16 %v3619
      %v3625 = vunpack.c.h.b16 %v3619
      %v3626 = vpack.c.b16 %v3622, %v3622
      %v3627 = vpack.c.b16 %v3623, %v3623
      %v3628 = vpack.c.b16 %v3624, %v3624
      %v3629 = vpack.c.b16 %v3625, %v3625
      %3634 = vst [vmem:[#allocation3 + $0x60] sm:$0xf] %v3626
      %3635 = vst [vmem:[#allocation3 + $0x64] sm:$0xf] %v3627
      %3636 = vst [vmem:[#allocation3 + $0x68] sm:$0xf] %v3628
      %3637 = vst [vmem:[#allocation3 + $0x6c] sm:$0xf] %v3629
      %v3638 = vld [vmem:[%s2 + $0x7] sm:$0x1]
      %v3639 = vpack.c.bf16 %v3638, %v3638
      %3640 = vrot.lane.b32.xlu0 %v3367, 120
      %v3641 = vpop.permute.xlu0 %3640
      %3642 = vrot.lane.b32.xlu0 %v3368, 120
      %v3643 = vpop.permute.xlu0 %3642
      %vm3644 = vcmask 982016
      %v3646 = vsel %vm3644, %v3641, 0
      %v3649 = vsel %vm3644, %v3643, 0
      %v3652 = vpack.i.b16 %v3639, %v3639
      %v3654 = vlaneseq
      %v3655 = vshrl.u32 %v3654, 7
      %v3656 = vsub.s32 0, %v3655
      %v3657 = vrot.slane %v3652, %v3656
      %v3658 = vmul.bf16 %v3646, %v3657
      %v3659 = vmul.bf16 %v3649, %v3657
      %v3662 = vunpack.c.l.b16 %v3658
      %v3663 = vunpack.c.h.b16 %v3658
      %v3664 = vunpack.c.l.b16 %v3659
      %v3665 = vunpack.c.h.b16 %v3659
      %v3666 = vpack.c.b16 %v3662, %v3662
      %v3667 = vpack.c.b16 %v3663, %v3663
      %v3668 = vpack.c.b16 %v3664, %v3664
      %v3669 = vpack.c.b16 %v3665, %v3665
      %3674 = vst [vmem:[#allocation3 + $0x70] sm:$0xf] %v3666
      %3675 = vst [vmem:[#allocation3 + $0x74] sm:$0xf] %v3667
      %3676 = vst [vmem:[#allocation3 + $0x78] sm:$0xf] %v3668
      %3677 = vst [vmem:[#allocation3 + $0x7c] sm:$0xf] %v3669
      %v3678 = vld [vmem:[%s2 + $0x8] sm:$0x1]
      %v3679 = vpack.c.bf16 %v3678, %v3678
      %3680 = vrot.lane.b32.xlu0 %v3367, 119
      %v3681 = vpop.permute.xlu0 %3680
      %3682 = vrot.lane.b32.xlu0 %v3368, 119
      %v3683 = vpop.permute.xlu0 %3682
      %vm3684 = vcmask 973824
      %v3686 = vsel %vm3684, %v3681, 0
      %v3689 = vsel %vm3684, %v3683, 0
      %v3692 = vpack.i.b16 %v3679, %v3679
      %v3694 = vlaneseq
      %v3695 = vshrl.u32 %v3694, 7
      %v3696 = vsub.s32 0, %v3695
      %v3697 = vrot.slane %v3692, %v3696
      %v3698 = vmul.bf16 %v3686, %v3697
      %v3699 = vmul.bf16 %v3689, %v3697
      %v3702 = vunpack.c.l.b16 %v3698
      %v3703 = vunpack.c.h.b16 %v3698
      %v3704 = vunpack.c.l.b16 %v3699
      %v3705 = vunpack.c.h.b16 %v3699
      %v3706 = vpack.c.b16 %v3702, %v3702
      %v3707 = vpack.c.b16 %v3703, %v3703
      %v3708 = vpack.c.b16 %v3704, %v3704
      %v3709 = vpack.c.b16 %v3705, %v3705
      %3714 = vst [vmem:[#allocation3 + $0x80] sm:$0xf] %v3706
      %3715 = vst [vmem:[#allocation3 + $0x84] sm:$0xf] %v3707
      %3716 = vst [vmem:[#allocation3 + $0x88] sm:$0xf] %v3708
      %3717 = vst [vmem:[#allocation3 + $0x8c] sm:$0xf] %v3709
      %v3718 = vld [vmem:[#allocation3] sm:$0xf]
      %v3719 = vld [vmem:[#allocation3 + $0x4] sm:$0xf]
      %v3720 = vld [vmem:[#allocation3 + $0x8] sm:$0xf]
      %v3721 = vld [vmem:[#allocation3 + $0xc] sm:$0xf]
      %v3722 = vld [vmem:[#allocation3 + $0x10] sm:$0xf]
      %v3723 = vld [vmem:[#allocation3 + $0x14] sm:$0xf]
      %v3724 = vld [vmem:[#allocation3 + $0x18] sm:$0xf]
      %v3725 = vld [vmem:[#allocation3 + $0x1c] sm:$0xf]
      %v3726 = vld [vmem:[#allocation3 + $0x20] sm:$0xf]
      %v3727 = vld [vmem:[#allocation3 + $0x24] sm:$0xf]
      %v3728 = vld [vmem:[#allocation3 + $0x28] sm:$0xf]
      %v3729 = vld [vmem:[#allocation3 + $0x2c] sm:$0xf]
      %v3730 = vld [vmem:[#allocation3 + $0x30] sm:$0xf]
      %v3731 = vld [vmem:[#allocation3 + $0x34] sm:$0xf]
      %v3732 = vld [vmem:[#allocation3 + $0x38] sm:$0xf]
      %v3733 = vld [vmem:[#allocation3 + $0x3c] sm:$0xf]
      %v3734 = vld [vmem:[#allocation3 + $0x40] sm:$0xf]
      %v3735 = vld [vmem:[#allocation3 + $0x44] sm:$0xf]
      %v3736 = vld [vmem:[#allocation3 + $0x48] sm:$0xf]
      %v3737 = vld [vmem:[#allocation3 + $0x4c] sm:$0xf]
      %v3738 = vld [vmem:[#allocation3 + $0x50] sm:$0xf]
      %v3739 = vld [vmem:[#allocation3 + $0x54] sm:$0xf]
      %v3740 = vld [vmem:[#allocation3 + $0x58] sm:$0xf]
      %v3741 = vld [vmem:[#allocation3 + $0x5c] sm:$0xf]
      %v3742 = vld [vmem:[#allocation3 + $0x60] sm:$0xf]
      %v3743 = vld [vmem:[#allocation3 + $0x64] sm:$0xf]
      %v3744 = vld [vmem:[#allocation3 + $0x68] sm:$0xf]
      %v3745 = vld [vmem:[#allocation3 + $0x6c] sm:$0xf]
      %v3746 = vld [vmem:[#allocation3 + $0x70] sm:$0xf]
      %v3747 = vld [vmem:[#allocation3 + $0x74] sm:$0xf]
      %v3748 = vld [vmem:[#allocation3 + $0x78] sm:$0xf]
      %v3749 = vld [vmem:[#allocation3 + $0x7c] sm:$0xf]
      %v3750 = vld [vmem:[#allocation3 + $0x80] sm:$0xf]
      %v3751 = vld [vmem:[#allocation3 + $0x84] sm:$0xf]
      %v3752 = vld [vmem:[#allocation3 + $0x88] sm:$0xf]
      %v3753 = vld [vmem:[#allocation3 + $0x8c] sm:$0xf]
      %v3754 = vld [vmem:[%s9] sm:$0xff]
      %v3755 = vld [vmem:[%s9 + $0x8] sm:$0xf]
      %v3756 = vld [vmem:[%s10] sm:$0xff]
      %3758 = vset.pattern.permute.xlu0 0
      %3759 = vperm.xlu0 %3758, %v3756
      %v3760 = vpop.permute.xlu0 %3759
      %v3764 = vunpack.c.l.b16 %v3754
      %v3765 = vunpack.c.h.b16 %v3754
      %v3766 = vunpack.c.l.b16 %v3755
      %v3767 = vpack.c.b16 %v3764, %v3764
      %v3768 = vpack.c.b16 %v3765, %v3765
      %v3769 = vpack.c.b16 %v3766, %v3766
      %v3808 = vunpack.c.l.b16 %v3718
      %v3809 = vunpack.c.l.b16 %v3719
      %v3810 = vunpack.c.l.b16 %v3720
      %v3811 = vunpack.c.l.b16 %v3721
      %v3812 = vunpack.c.l.b16 %v3722
      %v3813 = vunpack.c.l.b16 %v3723
      %v3814 = vunpack.c.l.b16 %v3724
      %v3815 = vunpack.c.l.b16 %v3725
      %v3816 = vunpack.c.l.b16 %v3726
      %v3817 = vunpack.c.l.b16 %v3727
      %v3818 = vunpack.c.l.b16 %v3728
      %v3819 = vunpack.c.l.b16 %v3729
      %v3820 = vunpack.c.l.b16 %v3730
      %v3821 = vunpack.c.l.b16 %v3731
      %v3822 = vunpack.c.l.b16 %v3732
      %v3823 = vunpack.c.l.b16 %v3733
      %v3824 = vunpack.c.l.b16 %v3734
      %v3825 = vunpack.c.l.b16 %v3735
      %v3826 = vunpack.c.l.b16 %v3736
      %v3827 = vunpack.c.l.b16 %v3737
      %v3828 = vunpack.c.l.b16 %v3738
      %v3829 = vunpack.c.l.b16 %v3739
      %v3830 = vunpack.c.l.b16 %v3740
      %v3831 = vunpack.c.l.b16 %v3741
      %v3832 = vunpack.c.l.b16 %v3742
      %v3833 = vunpack.c.l.b16 %v3743
      %v3834 = vunpack.c.l.b16 %v3744
      %v3835 = vunpack.c.l.b16 %v3745
      %v3836 = vunpack.c.l.b16 %v3746
      %v3837 = vunpack.c.l.b16 %v3747
      %v3838 = vunpack.c.l.b16 %v3748
      %v3839 = vunpack.c.l.b16 %v3749
      %v3840 = vunpack.c.l.b16 %v3750
      %v3841 = vunpack.c.l.b16 %v3751
      %v3842 = vunpack.c.l.b16 %v3752
      %v3843 = vunpack.c.l.b16 %v3753
      %v3844 = vpack.c.b16 %v3809, %v3808
      %v3845 = vpack.c.b16 %v3811, %v3810
      %v3846 = vpack.c.b16 %v3813, %v3812
      %v3847 = vpack.c.b16 %v3815, %v3814
      %v3848 = vpack.c.b16 %v3817, %v3816
      %v3849 = vpack.c.b16 %v3819, %v3818
      %v3850 = vpack.c.b16 %v3821, %v3820
      %v3851 = vpack.c.b16 %v3823, %v3822
      %v3852 = vpack.c.b16 %v3825, %v3824
      %v3853 = vpack.c.b16 %v3827, %v3826
      %v3854 = vpack.c.b16 %v3829, %v3828
      %v3855 = vpack.c.b16 %v3831, %v3830
      %v3856 = vpack.c.b16 %v3833, %v3832
      %v3857 = vpack.c.b16 %v3835, %v3834
      %v3858 = vpack.c.b16 %v3837, %v3836
      %v3859 = vpack.c.b16 %v3839, %v3838
      %v3860 = vpack.c.b16 %v3841, %v3840
      %v3861 = vpack.c.b16 %v3843, %v3842
      %vm3880 = vcmask 261120
      %v3882 = vsel %vm3880, %v3769, 0
      %3884 = vmatprep.subr.bf16.mxu0 0
      %3885 = vmatpush1.bf16.msra.mxu0 %v3851
      %3886 = vmatprep.subr.bf16.mxu0 0
      %3887 = vmatpush1.bf16.msra.mxu0 %v3850
      %3888 = vmatprep.subr.bf16.mxu0 0
      %3889 = vmatpush1.bf16.msra.mxu0 %v3849
      %3890 = vmatprep.subr.bf16.mxu0 0
      %3891 = vmatpush1.bf16.msra.mxu0 %v3848
      %3892 = vmatprep.subr.bf16.mxu0 0
      %3893 = vmatpush1.bf16.msra.mxu0 %v3847
      %3894 = vmatprep.subr.bf16.mxu0 0
      %3895 = vmatpush1.bf16.msra.mxu0 %v3846
      %3896 = vmatprep.subr.bf16.mxu0 0
      %3897 = vmatpush1.bf16.msra.mxu0 %v3845
      %3898 = vmatprep.subr.bf16.mxu0 0
      %3899 = vmatpush1.bf16.msra.mxu0 %v3844
      %3900 = vmatprep.subr.bf16.mxu0 0
      %3901 = vmatpush2.bf16.msra.mxu0 %v3859
      %3902 = vmatprep.subr.bf16.mxu0 0
      %3903 = vmatpush2.bf16.msra.mxu0 %v3858
      %3904 = vmatprep.subr.bf16.mxu0 0
      %3905 = vmatpush2.bf16.msra.mxu0 %v3857
      %3906 = vmatprep.subr.bf16.mxu0 0
      %3907 = vmatpush2.bf16.msra.mxu0 %v3856
      %3908 = vmatprep.subr.bf16.mxu0 0
      %3909 = vmatpush2.bf16.msra.mxu0 %v3855
      %3910 = vmatprep.subr.bf16.mxu0 0
      %3911 = vmatpush2.bf16.msra.mxu0 %v3854
      %3912 = vmatprep.subr.bf16.mxu0 0
      %3913 = vmatpush2.bf16.msra.mxu0 %v3853
      %3914 = vmatprep.subr.bf16.mxu0 0
      %3915 = vmatpush2.bf16.msra.mxu0 %v3852
      %3916 = vmatprep.mubr.bf16.mxu0 %v3768
      %3917 = vmatmul.mubr.bf16.gmra.mxu0 %v3767
      %v3918 = vpop.f32.mrf.mxu0
      %v3919 = vadd.f32 %v3760, %v3918
      %v3920 = vpop.f32.mrf.mxu0
      %v3921 = vpop.f32.mrf.mxu0
      %v3922 = vpop.f32.mrf.mxu0
      %3923 = vdwg.mxu0
      %3924 = vmatprep.subr.bf16.mxu0 0
      %3925 = vmatpush1.bf16.msra.mxu0 0
      %3926 = vmatprep.subr.bf16.mxu0 0
      %3927 = vmatpush1.bf16.msra.mxu0 0
      %3928 = vmatprep.subr.bf16.mxu0 0
      %3929 = vmatpush1.bf16.msra.mxu0 0
      %3930 = vmatprep.subr.bf16.mxu0 0
      %3931 = vmatpush1.bf16.msra.mxu0 0
      %3932 = vmatprep.subr.bf16.mxu0 0
      %3933 = vmatpush1.bf16.msra.mxu0 0
      %3934 = vmatprep.subr.bf16.mxu0 0
      %3935 = vmatpush1.bf16.msra.mxu0 0
      %3936 = vmatprep.subr.bf16.mxu0 0
      %3937 = vmatpush1.bf16.msra.mxu0 %v3861
      %3938 = vmatprep.subr.bf16.mxu0 0
      %3939 = vmatpush1.bf16.msra.mxu0 %v3860
      %3940 = vmatprep.subr.bf16.mxu0 0
      %3941 = vmatpush2.bf16.msra.mxu0 0
      %3942 = vmatprep.subr.bf16.mxu0 0
      %3943 = vmatpush2.bf16.msra.mxu0 0
      %3944 = vmatprep.subr.bf16.mxu0 0
      %3945 = vmatpush2.bf16.msra.mxu0 0
      %3946 = vmatprep.subr.bf16.mxu0 0
      %3947 = vmatpush2.bf16.msra.mxu0 0
      %3948 = vmatprep.subr.bf16.mxu0 0
      %3949 = vmatpush2.bf16.msra.mxu0 0
      %3950 = vmatprep.subr.bf16.mxu0 0
      %3951 = vmatpush2.bf16.msra.mxu0 0
      %3952 = vmatprep.subr.bf16.mxu0 0
      %3953 = vmatpush2.bf16.msra.mxu0 0
      %3954 = vmatprep.subr.bf16.mxu0 0
      %3955 = vmatpush2.bf16.msra.mxu0 0
      %3956 = vmatprep.mubr.bf16.mxu0 0
      %3957 = vmatmul.mubr.bf16.gmra.mxu0 %v3882
      %v3958 = vpop.f32.mrf.mxu0
      %v3959 = vadd.f32 %v3919, %v3958
      %v3960 = vpop.f32.mrf.mxu0
      %v3961 = vpop.f32.mrf.mxu0
      %v3962 = vpop.f32.mrf.mxu0
      %3963 = vdwg.mxu0
      %v3964 = vmax.f32 %v3959, 0.0
      %v3965 = vld [vmem:[%s11] sm:$0xff]
      %v3966 = vld [vmem:[%s12] sm:$0xff]
      %3968 = vset.pattern.permute.xlu0 0
      %3969 = vperm.xlu0 %3968, %v3966
      %v3970 = vpop.permute.xlu0 %3969
      %v3973 = vsel %vm3417, %v3965, 0
      %3975 = vmatprep.subr.mxu0 0.0
      %3976 = vmatpush1.msra.mxu0 0.0
      %3977 = vmatprep.subr.mxu0 0.0
      %3978 = vmatpush1.msra.mxu0 0.0
      %3979 = vmatprep.subr.mxu0 0.0
      %3980 = vmatpush1.msra.mxu0 0.0
      %3981 = vmatprep.subr.mxu0 0.0
      %3982 = vmatpush1.msra.mxu0 0.0
      %3983 = vmatprep.subr.mxu0 0.0
      %3984 = vmatpush1.msra.mxu0 0.0
      %3985 = vmatprep.subr.mxu0 0.0
      %3986 = vmatpush1.msra.mxu0 0.0
      %3987 = vmatprep.subr.mxu0 0.0
      %3988 = vmatpush1.msra.mxu0 0.0
      %3989 = vmatprep.subr.mxu0 0.0
      %3990 = vmatpush1.msra.mxu0 0.0
      %3991 = vmatprep.subr.mxu0 0.0
      %3992 = vmatpush1.msra.mxu0 0.0
      %3993 = vmatprep.subr.mxu0 0.0
      %3994 = vmatpush1.msra.mxu0 0.0
      %3995 = vmatprep.subr.mxu0 0.0
      %3996 = vmatpush1.msra.mxu0 0.0
      %3997 = vmatprep.subr.mxu0 0.0
      %3998 = vmatpush1.msra.mxu0 0.0
      %3999 = vmatprep.subr.mxu0 0.0
      %4000 = vmatpush1.msra.mxu0 0.0
      %4001 = vmatprep.subr.mxu0 0.0
      %4002 = vmatpush1.msra.mxu0 0.0
      %4003 = vmatprep.subr.mxu0 0.0
      %4004 = vmatpush1.msra.mxu0 0.0
      %4005 = vmatprep.subr.mxu0 0.0
      %4006 = vmatpush1.msra.mxu0 %v3964
      %4007 = vmatprep.subr.mxu0 0.0
      %4008 = vmatpush2.msra.mxu0 0.0
      %4009 = vmatprep.subr.mxu0 0.0
      %4010 = vmatpush2.msra.mxu0 0.0
      %4011 = vmatprep.subr.mxu0 0.0
      %4012 = vmatpush2.msra.mxu0 0.0
      %4013 = vmatprep.subr.mxu0 0.0
      %4014 = vmatpush2.msra.mxu0 0.0
      %4015 = vmatprep.subr.mxu0 0.0
      %4016 = vmatpush2.msra.mxu0 0.0
      %4017 = vmatprep.subr.mxu0 0.0
      %4018 = vmatpush2.msra.mxu0 0.0
      %4019 = vmatprep.subr.mxu0 0.0
      %4020 = vmatpush2.msra.mxu0 0.0
      %4021 = vmatprep.subr.mxu0 0.0
      %4022 = vmatpush2.msra.mxu0 0.0
      %4023 = vmatprep.subr.mxu0 0.0
      %4024 = vmatpush2.msra.mxu0 0.0
      %4025 = vmatprep.subr.mxu0 0.0
      %4026 = vmatpush2.msra.mxu0 0.0
      %4027 = vmatprep.subr.mxu0 0.0
      %4028 = vmatpush2.msra.mxu0 0.0
      %4029 = vmatprep.subr.mxu0 0.0
      %4030 = vmatpush2.msra.mxu0 0.0
      %4031 = vmatprep.subr.mxu0 0.0
      %4032 = vmatpush2.msra.mxu0 0.0
      %4033 = vmatprep.subr.mxu0 0.0
      %4034 = vmatpush2.msra.mxu0 0.0
      %4035 = vmatprep.subr.mxu0 0.0
      %4036 = vmatpush2.msra.mxu0 0.0
      %4037 = vmatprep.subr.mxu0 0.0
      %4038 = vmatpush2.msra.mxu0 0.0
      %4039 = vmatprep.mubr.f32.mxu0 0.0
      %4040 = vmatmul.mubr.f32.gmra.mxu0 %v3973
      %v4041 = vpop.f32.mrf.mxu0
      %v4042 = vadd.f32 %v3970, %v4041
      %v4043 = vpop.f32.mrf.mxu0
      %4044 = vdwg.mxu0
      %v4045 = vld [vmem:[%s4] sm:$0xff]
      %v4046 = vld [vmem:[%s4 + $0x8] sm:$0xff]
      %v4047 = vld [vmem:[%s4 + $0x10] sm:$0xff]
      %v4048 = vld [vmem:[%s4 + $0x18] sm:$0xff]
      %v4049 = vld [vmem:[%s4 + $0x20] sm:$0xff]
      %v4050 = vld [vmem:[%s4 + $0x28] sm:$0xff]
      %v4051 = vld [vmem:[%s4 + $0x30] sm:$0xff]
      %v4052 = vld [vmem:[%s4 + $0x38] sm:$0xff]
      %v4053 = vld [vmem:[%s4 + $0x40] sm:$0xff]
      %v4054 = vld [vmem:[%s4 + $0x48] sm:$0xff]
      %v4055 = vld [vmem:[%s4 + $0x50] sm:$0xff]
      %v4056 = vld [vmem:[%s4 + $0x58] sm:$0xff]
      %v4057 = vld [vmem:[%s4 + $0x60] sm:$0xff]
      %v4058 = vld [vmem:[%s4 + $0x68] sm:$0xff]
      %v4059 = vld [vmem:[%s4 + $0x70] sm:$0xff]
      %v4060 = vld [vmem:[%s4 + $0x78] sm:$0xff]
      %v4061 = vld [vmem:[%s4 + $0x80] sm:$0xff]
      %v4062 = vld [vmem:[%s4 + $0x88] sm:$0xff]
      %v4063 = vld [vmem:[%s4 + $0x90] sm:$0xff]
      %v4064 = vld [vmem:[%s4 + $0x98] sm:$0xff]
      %v4065 = vld [vmem:[%s4 + $0xa0] sm:$0xff]
      %v4066 = vld [vmem:[%s4 + $0xa8] sm:$0xff]
      %v4067 = vld [vmem:[%s4 + $0xb0] sm:$0xff]
      %v4068 = vld [vmem:[%s4 + $0xb8] sm:$0xff]
      %v4069 = vld [vmem:[%s4 + $0xc0] sm:$0xff]
      %v4070 = vld [vmem:[%s4 + $0xc8] sm:$0xff]
      %v4071 = vld [vmem:[%s4 + $0xd0] sm:$0xff]
      %v4072 = vld [vmem:[%s4 + $0xd8] sm:$0xff]
      %v4073 = vld [vmem:[%s4 + $0xe0] sm:$0xff]
      %v4074 = vld [vmem:[%s4 + $0xe8] sm:$0xff]
      %v4075 = vld [vmem:[%s4 + $0xf0] sm:$0xff]
      %v4076 = vld [vmem:[%s4 + $0xf8] sm:$0xff]
      %v4077 = vld [vmem:[%s4 + $0x100] sm:$0xff]
      %v4078 = vld [vmem:[%s4 + $0x108] sm:$0xff]
      %v4079 = vld [vmem:[%s4 + $0x110] sm:$0xff]
      %v4080 = vld [vmem:[%s4 + $0x118] sm:$0xff]
      %v4081 = vld [vmem:[%s4 + $0x120] sm:$0xff]
      %v4082 = vld [vmem:[%s4 + $0x128] sm:$0xff]
      %v4083 = vld [vmem:[%s4 + $0x130] sm:$0xff]
      %v4084 = vld [vmem:[%s4 + $0x138] sm:$0xff]
      %v4085 = vld [vmem:[%s4 + $0x140] sm:$0xff]
      %v4086 = vld [vmem:[%s4 + $0x148] sm:$0xff]
      %v4087 = vld [vmem:[%s4 + $0x150] sm:$0xff]
      %v4088 = vld [vmem:[%s4 + $0x158] sm:$0xff]
      %v4089 = vld [vmem:[%s4 + $0x160] sm:$0xff]
      %v4090 = vld [vmem:[%s4 + $0x168] sm:$0xff]
      %v4091 = vld [vmem:[%s4 + $0x170] sm:$0xff]
      %v4092 = vld [vmem:[%s4 + $0x178] sm:$0xff]
      %v4093 = vld [vmem:[%s4 + $0x180] sm:$0xff]
      %v4094 = vld [vmem:[%s4 + $0x188] sm:$0xff]
      %v4095 = vld [vmem:[%s4 + $0x190] sm:$0xff]
      %v4096 = vld [vmem:[%s4 + $0x198] sm:$0xff]
      %v4097 = vld [vmem:[%s4 + $0x1a0] sm:$0xff]
      %v4098 = vld [vmem:[%s4 + $0x1a8] sm:$0xff]
      %v4099 = vld [vmem:[%s4 + $0x1b0] sm:$0xff]
      %v4100 = vld [vmem:[%s4 + $0x1b8] sm:$0xff]
      %v4101 = vld [vmem:[%s4 + $0x1c0] sm:$0xff]
      %v4102 = vld [vmem:[%s4 + $0x1c8] sm:$0xff]
      %v4103 = vld [vmem:[%s4 + $0x1d0] sm:$0xff]
      %v4104 = vld [vmem:[%s4 + $0x1d8] sm:$0xff]
      %v4105 = vld [vmem:[%s4 + $0x1e0] sm:$0xff]
      %v4106 = vld [vmem:[%s4 + $0x1e8] sm:$0xff]
      %v4107 = vld [vmem:[%s4 + $0x1f0] sm:$0xff]
      %v4108 = vld [vmem:[%s4 + $0x1f8] sm:$0xff]
      %4109 = vmatprep.subr.mxu0 %v4106
      %4110 = vmatpush1.msra.mxu0 %v4105
      %4111 = vmatprep.subr.mxu0 %v4102
      %4112 = vmatpush1.msra.mxu0 %v4101
      %4113 = vmatprep.subr.mxu0 %v4098
      %4114 = vmatpush1.msra.mxu0 %v4097
      %4115 = vmatprep.subr.mxu0 %v4094
      %4116 = vmatpush1.msra.mxu0 %v4093
      %4117 = vmatprep.subr.mxu0 %v4090
      %4118 = vmatpush1.msra.mxu0 %v4089
      %4119 = vmatprep.subr.mxu0 %v4086
      %4120 = vmatpush1.msra.mxu0 %v4085
      %4121 = vmatprep.subr.mxu0 %v4082
      %4122 = vmatpush1.msra.mxu0 %v4081
      %4123 = vmatprep.subr.mxu0 %v4078
      %4124 = vmatpush1.msra.mxu0 %v4077
      %4125 = vmatprep.subr.mxu0 %v4074
      %4126 = vmatpush1.msra.mxu0 %v4073
      %4127 = vmatprep.subr.mxu0 %v4070
      %4128 = vmatpush1.msra.mxu0 %v4069
      %4129 = vmatprep.subr.mxu0 %v4066
      %4130 = vmatpush1.msra.mxu0 %v4065
      %4131 = vmatprep.subr.mxu0 %v4062
      %4132 = vmatpush1.msra.mxu0 %v4061
      %4133 = vmatprep.subr.mxu0 %v4058
      %4134 = vmatpush1.msra.mxu0 %v4057
      %4135 = vmatprep.subr.mxu0 %v4054
      %4136 = vmatpush1.msra.mxu0 %v4053
      %4137 = vmatprep.subr.mxu0 %v4050
      %4138 = vmatpush1.msra.mxu0 %v4049
      %4139 = vmatprep.subr.mxu0 %v4046
      %4140 = vmatpush1.msra.mxu0 %v4045
      %4141 = vmatprep.subr.mxu0 0.0
      %4142 = vmatpush2.msra.mxu0 0.0
      %4143 = vmatprep.subr.mxu0 0.0
      %4144 = vmatpush2.msra.mxu0 0.0
      %4145 = vmatprep.subr.mxu0 0.0
      %4146 = vmatpush2.msra.mxu0 0.0
      %4147 = vmatprep.subr.mxu0 0.0
      %4148 = vmatpush2.msra.mxu0 0.0
      %4149 = vmatprep.subr.mxu0 0.0
      %4150 = vmatpush2.msra.mxu0 0.0
      %4151 = vmatprep.subr.mxu0 0.0
      %4152 = vmatpush2.msra.mxu0 0.0
      %4153 = vmatprep.subr.mxu0 0.0
      %4154 = vmatpush2.msra.mxu0 0.0
      %4155 = vmatprep.subr.mxu0 0.0
      %4156 = vmatpush2.msra.mxu0 0.0
      %4157 = vmatprep.subr.mxu0 0.0
      %4158 = vmatpush2.msra.mxu0 0.0
      %4159 = vmatprep.subr.mxu0 0.0
      %4160 = vmatpush2.msra.mxu0 0.0
      %4161 = vmatprep.subr.mxu0 0.0
      %4162 = vmatpush2.msra.mxu0 0.0
      %4163 = vmatprep.subr.mxu0 0.0
      %4164 = vmatpush2.msra.mxu0 0.0
      %4165 = vmatprep.subr.mxu0 0.0
      %4166 = vmatpush2.msra.mxu0 0.0
      %4167 = vmatprep.subr.mxu0 0.0
      %4168 = vmatpush2.msra.mxu0 0.0
      %4169 = vmatprep.subr.mxu0 0.0
      %4170 = vmatpush2.msra.mxu0 0.0
      %4171 = vmatprep.subr.mxu0 0.0
      %4172 = vmatpush2.msra.mxu0 0.0
      %4173 = vmatprep.mubr.f32.mxu0 0.0
      %4174 = vmatmul.mubr.f32.gmra.mxu0 %v4042
      %v4175 = vpop.f32.mrf.mxu0
      %v4176 = vadd.f32 0.0, %v4175
      %v4177 = vpop.f32.mrf.mxu0
      %v4178 = vadd.f32 0.0, %v4177
      %4179 = vdwg.mxu0
      %4180 = vmatprep.subr.mxu0 %v4108
      %4181 = vmatpush1.msra.mxu0 %v4107
      %4182 = vmatprep.subr.mxu0 %v4104
      %4183 = vmatpush1.msra.mxu0 %v4103
      %4184 = vmatprep.subr.mxu0 %v4100
      %4185 = vmatpush1.msra.mxu0 %v4099
      %4186 = vmatprep.subr.mxu0 %v4096
      %4187 = vmatpush1.msra.mxu0 %v4095
      %4188 = vmatprep.subr.mxu0 %v4092
      %4189 = vmatpush1.msra.mxu0 %v4091
      %4190 = vmatprep.subr.mxu0 %v4088
      %4191 = vmatpush1.msra.mxu0 %v4087
      %4192 = vmatprep.subr.mxu0 %v4084
      %4193 = vmatpush1.msra.mxu0 %v4083
      %4194 = vmatprep.subr.mxu0 %v4080
      %4195 = vmatpush1.msra.mxu0 %v4079
      %4196 = vmatprep.subr.mxu0 %v4076
      %4197 = vmatpush1.msra.mxu0 %v4075
      %4198 = vmatprep.subr.mxu0 %v4072
      %4199 = vmatpush1.msra.mxu0 %v4071
      %4200 = vmatprep.subr.mxu0 %v4068
      %4201 = vmatpush1.msra.mxu0 %v4067
      %4202 = vmatprep.subr.mxu0 %v4064
      %4203 = vmatpush1.msra.mxu0 %v4063
      %4204 = vmatprep.subr.mxu0 %v4060
      %4205 = vmatpush1.msra.mxu0 %v4059
      %4206 = vmatprep.subr.mxu0 %v4056
      %4207 = vmatpush1.msra.mxu0 %v4055
      %4208 = vmatprep.subr.mxu0 %v4052
      %4209 = vmatpush1.msra.mxu0 %v4051
      %4210 = vmatprep.subr.mxu0 %v4048
      %4211 = vmatpush1.msra.mxu0 %v4047
      %4212 = vmatprep.subr.mxu0 0.0
      %4213 = vmatpush2.msra.mxu0 0.0
      %4214 = vmatprep.subr.mxu0 0.0
      %4215 = vmatpush2.msra.mxu0 0.0
      %4216 = vmatprep.subr.mxu0 0.0
      %4217 = vmatpush2.msra.mxu0 0.0
      %4218 = vmatprep.subr.mxu0 0.0
      %4219 = vmatpush2.msra.mxu0 0.0
      %4220 = vmatprep.subr.mxu0 0.0
      %4221 = vmatpush2.msra.mxu0 0.0
      %4222 = vmatprep.subr.mxu0 0.0
      %4223 = vmatpush2.msra.mxu0 0.0
      %4224 = vmatprep.subr.mxu0 0.0
      %4225 = vmatpush2.msra.mxu0 0.0
      %4226 = vmatprep.subr.mxu0 0.0
      %4227 = vmatpush2.msra.mxu0 0.0
      %4228 = vmatprep.subr.mxu0 0.0
      %4229 = vmatpush2.msra.mxu0 0.0
      %4230 = vmatprep.subr.mxu0 0.0
      %4231 = vmatpush2.msra.mxu0 0.0
      %4232 = vmatprep.subr.mxu0 0.0
      %4233 = vmatpush2.msra.mxu0 0.0
      %4234 = vmatprep.subr.mxu0 0.0
      %4235 = vmatpush2.msra.mxu0 0.0
      %4236 = vmatprep.subr.mxu0 0.0
      %4237 = vmatpush2.msra.mxu0 0.0
      %4238 = vmatprep.subr.mxu0 0.0
      %4239 = vmatpush2.msra.mxu0 0.0
      %4240 = vmatprep.subr.mxu0 0.0
      %4241 = vmatpush2.msra.mxu0 0.0
      %4242 = vmatprep.subr.mxu0 0.0
      %4243 = vmatpush2.msra.mxu0 0.0
      %4244 = vmatprep.mubr.f32.mxu0 0.0
      %4245 = vmatmul.mubr.f32.gmra.mxu0 %v4042
      %v4246 = vpop.f32.mrf.mxu0
      %v4247 = vadd.f32 0.0, %v4246
      %v4248 = vpop.f32.mrf.mxu0
      %v4249 = vadd.f32 0.0, %v4248
      %4250 = vdwg.mxu0
      %v4251 = vrot.slane %v4176, 4
      %v4252 = vmax.f32 %v4176, %v4251
      %v4253 = vrot.slane %v4252, 2
      %v4254 = vmax.f32 %v4252, %v4253
      %v4255 = vrot.slane %v4254, 1
      %v4256 = vmax.f32 %v4254, %v4255
      %v4257 = vrot.slane %v4178, 4
      %v4258 = vmax.f32 %v4178, %v4257
      %v4259 = vrot.slane %v4258, 2
      %v4260 = vmax.f32 %v4258, %v4259
      %v4261 = vrot.slane %v4260, 1
      %v4262 = vmax.f32 %v4260, %v4261
      %v4263 = vrot.slane %v4247, 4
      %v4264 = vmax.f32 %v4247, %v4263
      %v4265 = vrot.slane %v4264, 2
      %v4266 = vmax.f32 %v4264, %v4265
      %v4267 = vrot.slane %v4266, 1
      %v4268 = vmax.f32 %v4266, %v4267
      %v4269 = vrot.slane %v4249, 4
      %v4270 = vmax.f32 %v4249, %v4269
      %v4271 = vrot.slane %v4270, 2
      %v4272 = vmax.f32 %v4270, %v4271
      %v4273 = vrot.slane %v4272, 1
      %v4274 = vmax.f32 %v4272, %v4273
      %v4275 = vsub.f32 %v4176, %v4256
      %v4276 = vsub.f32 %v4178, %v4262
      %v4277 = vsub.f32 %v4247, %v4268
      %v4278 = vsub.f32 %v4249, %v4274
      %v4279 = vmul.f32 %v4275, 1.442695
      %v4280 = vpow.pop %v4279
      %v4281 = vmul.f32 %v4276, 1.442695
      %v4282 = vpow.pop %v4281
      %v4283 = vmul.f32 %v4277, 1.442695
      %v4284 = vpow.pop %v4283
      %v4285 = vmul.f32 %v4278, 1.442695
      %v4286 = vpow.pop %v4285
      %v4287 = vrot.slane %v4280, 4
      %v4288 = vadd.f32 %v4280, %v4287
      %v4289 = vrot.slane %v4288, 2
      %v4290 = vadd.f32 %v4288, %v4289
      %v4291 = vrot.slane %v4290, 1
      %v4292 = vadd.f32 %v4290, %v4291
      %v4293 = vrot.slane %v4282, 4
      %v4294 = vadd.f32 %v4282, %v4293
      %v4295 = vrot.slane %v4294, 2
      %v4296 = vadd.f32 %v4294, %v4295
      %v4297 = vrot.slane %v4296, 1
      %v4298 = vadd.f32 %v4296, %v4297
      %v4299 = vrot.slane %v4284, 4
      %v4300 = vadd.f32 %v4284, %v4299
      %v4301 = vrot.slane %v4300, 2
      %v4302 = vadd.f32 %v4300, %v4301
      %v4303 = vrot.slane %v4302, 1
      %v4304 = vadd.f32 %v4302, %v4303
      %v4305 = vrot.slane %v4286, 4
      %v4306 = vadd.f32 %v4286, %v4305
      %v4307 = vrot.slane %v4306, 2
      %v4308 = vadd.f32 %v4306, %v4307
      %v4309 = vrot.slane %v4308, 1
      %v4310 = vadd.f32 %v4308, %v4309
      %v4311 = vrcp.pop %v4292
      %v4312 = vrcp.pop %v4298
      %v4313 = vrcp.pop %v4304
      %v4314 = vrcp.pop %v4310
      %v4315 = vmul.f32 %v4280, %v4311
      %v4316 = vmul.f32 %v4282, %v4312
      %v4317 = vmul.f32 %v4284, %v4313
      %v4318 = vmul.f32 %v4286, %v4314
      %4319 = vst [vmem:[%s440] sm:$0xff] %v4315
      %4320 = vst [vmem:[%s440 + $0x8] sm:$0xff] %v4316
      %4321 = vst [vmem:[%s440 + $0x10] sm:$0xff] %v4317
      %4322 = vst [vmem:[%s440 + $0x18] sm:$0xff] %v4318
      %p4323 = scmp.lt.s32.totalorder %s24, 1
      %s4324 = scalar_select %p4323, %s24, 1
      %s4325 = smul.addr %s4324, 4
      %s4326 = smul.addr %s4325, 8
      %s4327 = scalar_lea.vmem %s13, %s4326
      // Predicated region
      $region73: #{generalized_semseg_forward.1} parent=71 // pred_check
        %p4328 = pneg %p320
      $region74: #{generalized_semseg_forward.1} parent=71 // pred_check_branch
        %4330 = sbr.rel (%p4328) target = $region76
      $region75: #{generalized_semseg_forward.1} parent=71 // pred_region
        _
      $region76: #{generalized_semseg_forward.1} parent=71 // pred_fallthru
        _
    $region72: #{generalized_semseg_forward.1} parent=5 // pred_fallthru
      _
    %p4331 = scmp.le.s32.totalorder 2, %s19
    // Predicated region
    $region77: #{generalized_semseg_forward.1} parent=5 // pred_check
      %p4332 = pneg %p4331
    $region78: #{generalized_semseg_forward.1} parent=5 // pred_check_branch
      %4334 = sbr.rel (%p4332) target = $region80
    $region79: #{generalized_semseg_forward.1} parent=5 // pred_region
      %s4335 = ssub.s32 %s19, 2
      // Predicated region
      $region81: #{generalized_semseg_forward.1} parent=79 // pred_check
        %p4336 = pneg %p326
      $region82: #{generalized_semseg_forward.1} parent=79 // pred_check_branch
        %4338 = sbr.rel (%p4336) target = $region84
      $region83: #{generalized_semseg_forward.1} parent=79 // pred_region
        %p4339 = scmp.lt.s32.totalorder %s25, 1
        %s4340 = scalar_select %p4339, %s25, 1
        %s4341 = smul.addr %s4340, 4
        %s4342 = smul.addr %s4341, 8
        %s4343 = scalar_lea.vmem %s13, %s4342
      $region84: #{generalized_semseg_forward.1} parent=79 // pred_fallthru
        _
    $region80: #{generalized_semseg_forward.1} parent=5 // pred_fallthru
      _
  $region6: #{generalized_semseg_forward.1} parent=0 // loop_footer
    %s23 = sadd.s32 1, %s19
  $region7: #{generalized_semseg_forward.1} parent=0 // loop_footer_branch
    %18 = sbr.rel target = $region3
  $region8: #{generalized_semseg_forward.1} parent=0 // loop_exit
    _

</llo_original>
